<compile_context>
chip_gen: v7x
topology: tpu7x:2x2x1
jax: 0.10.0
libtpu: 0.0.40
codegen_flags: <defaults>
</compile_context>

<pallas_src>
import functools

import jax
import jax.numpy as jnp
from jax.experimental import pallas as pl
from jax.experimental.pallas import tpu as pltpu


def _layer_norm(v, w, b, eps=1e-5):
    mu = jnp.mean(v, axis=-1, keepdims=True)
    vc = v - mu
    var = jnp.mean(vc * vc, axis=-1, keepdims=True)
    return vc * jax.lax.rsqrt(var + eps) * w + b


def lencoder_kernel(x_ref, mkT_ref, mvT_ref, f2T_ref, f2b_ref,
                    ln1w_ref, ln1b_ref, ln2w_ref, ln2b_ref, out_ref,
                    *, approx_recip, flat_io):
    L, S = mkT_ref.shape
    cdt = mkT_ref.dtype                      # matmul operand dtype (f32 or bf16)

    if flat_io:
        Bb, LD = x_ref.shape
        D = LD // L
        x3 = x_ref[...].astype(jnp.float32).reshape(Bb, L, D)
    else:
        Bb, _, D = x_ref.shape
        x3 = x_ref[...].astype(jnp.float32)

    # Native (Bb, L, D) -> (Bb, D, L) -> (Bb*D, L): fold batch into the matmul M dim.
    y = jnp.swapaxes(x3, 1, 2).reshape(Bb * D, L)

    # --- TemporalExternalAttn ---
    attn = jnp.dot(y.astype(cdt), mkT_ref[...],
                   preferred_element_type=jnp.float32)             # (Bb*D, S)
    # softmax over D (== PyTorch Softmax(dim=1) on the (B, D, S) tensor)
    attn = attn.reshape(Bb, D, S)
    attn = jnp.exp(attn - jnp.max(attn, axis=1, keepdims=True))
    denom = jnp.sum(attn, axis=1, keepdims=True)
    if approx_recip:
        attn = attn * pl.reciprocal(denom, approx=True)            # EUP slot, ~free
    else:
        attn = attn / denom
    a = jnp.dot(attn.reshape(Bb * D, S).astype(cdt), mvT_ref[...],
                preferred_element_type=jnp.float32)                # (Bb*D, L)

    # residual + LayerNorm(seq_len)
    y = _layer_norm(y + a, ln1w_ref[...], ln1b_ref[...])

    # feed2: Linear(L, L) with bias, residual, LayerNorm(seq_len)
    f = jnp.dot(y.astype(cdt), f2T_ref[...],
                preferred_element_type=jnp.float32) + f2b_ref[...]
    y = _layer_norm(y + f, ln2w_ref[...], ln2b_ref[...])

    # repack to native (Bb, L, D) and store (lane-dense when flat_io)
    out3 = jnp.swapaxes(y.reshape(Bb, D, L), 1, 2)                 # (Bb, L, D)
    if flat_io:
        out_ref[...] = out3.reshape(Bb, L * D).astype(out_ref.dtype)
    else:
        out_ref[...] = out3.astype(out_ref.dtype)
    # TODO(synk): nn.Dropout(0.2) (self.drop1) is defined in __init__ but never used in
    # the reference forward pass, so it is intentionally omitted.


def _pad2(rows, cols, itemsize):
    """Bytes of a 2-D VMEM tile after (8, 128) sublane/lane padding."""
    return (-(-rows // 8) * 8) * (-(-cols // 128) * 128) * itemsize


def _device_kind():
    try:
        return jax.devices()[0].device_kind.lower()
    except Exception:
        return ""


def _default_vmem_limit():
    kind = _device_kind()
    if "v7" in kind:
        return 44 * 1024 * 1024        # v7x: 64 MiB VMEM per TensorCore -> leave headroom
    if "v5" in kind or "v6" in kind:
        return 96 * 1024 * 1024        # v5e/v6e (128 MiB physical VMEM)
    return 32 * 1024 * 1024            # unknown chip: conservative


def _choose_batch_block(B, L, D, S, vmem_limit_bytes, cdt_bytes, *, flat_io,
                        min_steps=1):
    """Largest batch block whose padded VMEM footprint fits the budget."""
    LD = L * D
    # Weights/biases: conservatively assume double-buffered (covers the fallback path).
    w_bytes = 2 * (_pad2(L, S, cdt_bytes) + _pad2(S, L, cdt_bytes)
                   + _pad2(L, L, cdt_bytes) + 5 * _pad2(1, L, 4))
    budget = vmem_limit_bytes - w_bytes - (2 << 20)   # compiler-scratch headroom

    def fits(bb):
        if flat_io:
            io = 2 * 2 * _pad2(bb, LD, 4)             # lane-dense in+out, double-buffered
        else:
            io = 2 * 2 * bb * _pad2(L, D, 4)          # lane-sparse 3-D tiles (fallback)
        interm = 8 * _pad2(bb * D, max(L, S), 4)      # f32 intermediates + relayout temps
        return io + interm <= budget

    # Flat (Bb, L*D) blocks: second-to-last block dim must be a multiple of 8 or == B.
    cands = [bb for bb in range(B, 0, -1)
             if B % bb == 0 and (not flat_io or bb == B or bb % 8 == 0)]
    if not cands:
        cands = [B]
    for bb in cands:                                   # prefer >= min_steps grid steps
        if B // bb >= min_steps and fits(bb):
            return bb
    for bb in cands:
        if fits(bb):
            return bb
    return cands[-1]


def lencoder_layer(x, params, *, use_bf16=True, approx_recip=True,
                   batch_block=None, vmem_limit_bytes=None,
                   core_parallel=None, single_buffer_weights=True):
    """x: (B, seq_len, D) -> (B, seq_len, D). Matches LEncoderLayer.forward (norm='ln')."""
    B, L, D = x.shape
    mk_w, mv_w, f2_w, f2_b, ln1_w, ln1_b, ln2_w, ln2_b = params
    S = mk_w.shape[0]
    cdt = jnp.bfloat16 if use_bf16 else jnp.float32
    cdt_bytes = 2 if use_bf16 else 4

    if vmem_limit_bytes is None:
        vmem_limit_bytes = _default_vmem_limit()
    if core_parallel is None:
        core_parallel = "v7" in _device_kind()         # 2 TensorCores / chip on v7x

    # Host-side weight transposes (static, free): every in-kernel contraction is a plain
    # last-dim matmul with no in-kernel weight transposes / VMEM weight copies.
    mk_t = mk_w.T.astype(cdt)                          # (L, S)
    mv_t = mv_w.T.astype(cdt)                          # (S, L)
    f2_t = f2_w.T.astype(cdt)                          # (L, L)
    f2_b2 = f2_b.reshape(1, L).astype(jnp.float32)
    ln1w2 = ln1_w.reshape(1, L).astype(jnp.float32)
    ln1b2 = ln1_b.reshape(1, L).astype(jnp.float32)
    ln2w2 = ln2_w.reshape(1, L).astype(jnp.float32)
    ln2b2 = ln2_b.reshape(1, L).astype(jnp.float32)
    weights = (mk_t, mv_t, f2_t, f2_b2, ln1w2, ln1b2, ln2w2, ln2b2)

    cost = pl.CostEstimate(
        flops=2 * B * D * (2 * L * S + L * L),
        transcendentals=B * D * S,
        bytes_accessed=2 * B * L * D * 4 + (2 * L * S + L * L) * cdt_bytes + 5 * L * 4)

    def run(flat_io, single_buffer, dim_sems, min_steps):
        if batch_block is not None:
            Bb = batch_block
        else:
            Bb = _choose_batch_block(B, L, D, S, vmem_limit_bytes, cdt_bytes,
                                     flat_io=flat_io, min_steps=min_steps)
        assert B % Bb == 0, f"batch_block {Bb} must divide batch {B}"

        def wspec(shape):
            idx = lambda i: (0,) * len(shape)
            if single_buffer:   # invariant block index -> no second buffer needed
                return pl.BlockSpec(shape, idx, pipeline_mode=pl.Buffered(1))
            return pl.BlockSpec(shape, idx)

        kernel = functools.partial(lencoder_kernel,
                                   approx_recip=approx_recip, flat_io=flat_io)
        if flat_io:
            x_in = x.reshape(B, L * D)                 # contiguous -> free reshape
            x_spec = pl.BlockSpec((Bb, L * D), lambda i: (i, 0))
            out_spec = pl.BlockSpec((Bb, L * D), lambda i: (i, 0))
            out_shape = jax.ShapeDtypeStruct((B, L * D), x.dtype)
        else:
            x_in = x
            x_spec = pl.BlockSpec((Bb, L, D), lambda i: (i, 0, 0))
            out_spec = pl.BlockSpec((Bb, L, D), lambda i: (i, 0, 0))
            out_shape = jax.ShapeDtypeStruct((B, L, D), x.dtype)

        out = pl.pallas_call(
            kernel,
            out_shape=out_shape,
            grid=(B // Bb,),
            in_specs=[x_spec,
                      wspec((L, S)), wspec((S, L)), wspec((L, L)),
                      wspec((1, L)), wspec((1, L)), wspec((1, L)),
                      wspec((1, L)), wspec((1, L))],
            out_specs=out_spec,
            compiler_params=pltpu.CompilerParams(
                dimension_semantics=dim_sems,
                vmem_limit_bytes=vmem_limit_bytes),
            cost_estimate=cost,
        )(x_in, *weights)
        return out.reshape(B, L, D)

    fast_sems = (pltpu.CORE_PARALLEL,) if core_parallel else ("parallel",)
    configs = [
        # (flat_io, single-buffered weights, dimension_semantics, min grid steps)
        (True, single_buffer_weights, fast_sems, 2 if core_parallel else 1),
    ]
    if single_buffer_weights or core_parallel:
        configs.append((True, False, ("parallel",), 1))
    configs.append((False, False, ("parallel",), 1))   # previously-validated fallback

    last_err = None
    for cfg in configs:
        try:
            return run(*cfg)
        except Exception as e:                          # fall back to safer config
            last_err = e
    raise last_err


def lencoder_reference(x, params):
    """Pure-JAX reference mirroring the PyTorch forward exactly."""
    mk_w, mv_w, f2_w, f2_b, ln1_w, ln1_b, ln2_w, ln2_b = params
    y = jnp.transpose(x, (0, 2, 1))                    # (B, D, L)
    attn = y @ mk_w.T                                  # (B, D, S)
    attn = jax.nn.softmax(attn, axis=1)                # softmax over dim=1
    a = attn @ mv_w.T                                  # (B, D, L)
    y = y + a
    y = _layer_norm(y, ln1_w, ln1_b)
    y = y + (y @ f2_w.T + f2_b)
    y = _layer_norm(y, ln2_w, ln2_b)
    return jnp.transpose(y, (0, 2, 1))


def init_params(key, seq_len, S):
    ks = jax.random.split(key, 4)
    mk_w = jax.random.normal(ks[0], (S, seq_len), jnp.float32) * 0.1
    mv_w = jax.random.normal(ks[1], (seq_len, S), jnp.float32) * 0.1
    f2_w = jax.random.normal(ks[2], (seq_len, seq_len), jnp.float32) * 0.1
    f2_b = jax.random.normal(ks[3], (seq_len,), jnp.float32) * 0.1
    ln1_w = jnp.ones((seq_len,), jnp.float32)
    ln1_b = jnp.zeros((seq_len,), jnp.float32)
    ln2_w = jnp.ones((seq_len,), jnp.float32)
    ln2_b = jnp.zeros((seq_len,), jnp.float32)
    return (mk_w, mv_w, f2_w, f2_b, ln1_w, ln1_b, ln2_w, ln2_b)


if __name__ == "__main__":
    B, seq_len, D, S = 4, 16, 8, 32
    key = jax.random.PRNGKey(0)
    kx, kp = jax.random.split(key)
    x = jax.random.normal(kx, (B, seq_len, D), jnp.float32)
    params = init_params(kp, seq_len, S)

    ref = lencoder_reference(x, params)

    # Exact-math validation path: f32 MXU operands, exact reciprocal.
    out_f32 = jax.block_until_ready(
        lencoder_layer(x, params, use_bf16=False, approx_recip=False))
    assert out_f32.shape == (B, seq_len, D)
    assert jnp.allclose(out_f32, ref, atol=1e-5, rtol=1e-5), \
        f"f32 max err {jnp.max(jnp.abs(out_f32 - ref))}"

    # Default fast path: bf16 MXU operands (f32 accumulation) + EUP approx reciprocal.
    out_fast = jax.block_until_ready(lencoder_layer(x, params))
    assert out_fast.shape == (B, seq_len, D)
    assert jnp.allclose(out_fast, ref, atol=5e-2, rtol=5e-2), \
        f"bf16 max err {jnp.max(jnp.abs(out_fast - ref))}"

    print("KERNEL_OK")
</pallas_src>

<mosaic_0001>
module attributes {stable_mosaic.version = 11 : i64} {
  func.func @lencoder_kernel(%arg0: i32, %arg1: memref<4x128xf32, #tpu.memory_space<vmem>>, %arg2: memref<16x32xf32, #tpu.memory_space<vmem>>, %arg3: memref<32x16xf32, #tpu.memory_space<vmem>>, %arg4: memref<16x16xf32, #tpu.memory_space<vmem>>, %arg5: memref<1x16xf32, #tpu.memory_space<vmem>>, %arg6: memref<1x16xf32, #tpu.memory_space<vmem>>, %arg7: memref<1x16xf32, #tpu.memory_space<vmem>>, %arg8: memref<1x16xf32, #tpu.memory_space<vmem>>, %arg9: memref<1x16xf32, #tpu.memory_space<vmem>>, %arg10: memref<4x128xf32, #tpu.memory_space<vmem>>) attributes {dimension_semantics = [#tpu.dimension_semantics<parallel>], iteration_bounds = array<i64: 1>, scalar_prefetch = 0 : i64, scratch_operands = 0 : i64, tpu.core_type = #tpu.core_type<tc>, window_params = [{transform_indices = @transform_0, window_bounds = array<i64: 4, 128>}, {pipeline_mode = #tpu.pipeline_mode<synchronous>, transform_indices = @transform_1, window_bounds = array<i64: 16, 32>}, {pipeline_mode = #tpu.pipeline_mode<synchronous>, transform_indices = @transform_2, window_bounds = array<i64: 32, 16>}, {pipeline_mode = #tpu.pipeline_mode<synchronous>, transform_indices = @transform_3, window_bounds = array<i64: 16, 16>}, {pipeline_mode = #tpu.pipeline_mode<synchronous>, transform_indices = @transform_4, window_bounds = array<i64: 1, 16>}, {pipeline_mode = #tpu.pipeline_mode<synchronous>, transform_indices = @transform_5, window_bounds = array<i64: 1, 16>}, {pipeline_mode = #tpu.pipeline_mode<synchronous>, transform_indices = @transform_6, window_bounds = array<i64: 1, 16>}, {pipeline_mode = #tpu.pipeline_mode<synchronous>, transform_indices = @transform_7, window_bounds = array<i64: 1, 16>}, {pipeline_mode = #tpu.pipeline_mode<synchronous>, transform_indices = @transform_8, window_bounds = array<i64: 1, 16>}, {transform_indices = @transform_9, window_bounds = array<i64: 4, 128>}]} {
    %c0 = arith.constant 0 : index
    %c0_0 = arith.constant 0 : index
    %0 = vector.load %arg1[%c0, %c0_0] : memref<4x128xf32, #tpu.memory_space<vmem>>, vector<4x128xf32>
    %1 = vector.shape_cast %0 : vector<4x128xf32> to vector<4x16x8xf32>
    %2 = tpu.transpose %1, [0, 2, 1] : vector<4x16x8xf32> -> vector<4x8x16xf32>
    %3 = vector.shape_cast %2 : vector<4x8x16xf32> to vector<32x16xf32>
    %c0_1 = arith.constant 0 : index
    %c0_2 = arith.constant 0 : index
    %4 = vector.load %arg2[%c0_1, %c0_2] : memref<16x32xf32, #tpu.memory_space<vmem>>, vector<16x32xf32>
    %cst = arith.constant dense<0.000000e+00> : vector<32x32xf32>
    %5 = tpu.matmul %3, %4, %cst {dimension_numbers = #tpu.dot_dimension_numbers<[1], [0], [0], [1], [0, 0, 1, 1], [], []>} : vector<32x16xf32>, vector<16x32xf32>, vector<32x32xf32> -> vector<32x32xf32>
    %6 = vector.shape_cast %5 : vector<32x32xf32> to vector<4x8x32xf32>
    %cst_3 = arith.constant dense<0xFF800000> : vector<4x32xf32>
    %7 = vector.multi_reduction <maximumf>, %6, %cst_3 [1] : vector<4x8x32xf32> to vector<4x32xf32>
    %8 = vector.shape_cast %7 : vector<4x32xf32> to vector<4x1x32xf32>
    %9 = vector.broadcast %8 : vector<4x1x32xf32> to vector<4x8x32xf32>
    %10 = arith.subf %6, %9 : vector<4x8x32xf32>
    %11 = math.exp %10 : vector<4x8x32xf32>
    %cst_4 = arith.constant dense<0.000000e+00> : vector<4x32xf32>
    %12 = vector.multi_reduction <add>, %11, %cst_4 [1] : vector<4x8x32xf32> to vector<4x32xf32>
    %13 = vector.shape_cast %12 : vector<4x32xf32> to vector<4x1x32xf32>
    %14 = vector.broadcast %13 : vector<4x1x32xf32> to vector<4x8x32xf32>
    %15 = arith.divf %11, %14 : vector<4x8x32xf32>
    %16 = vector.shape_cast %15 : vector<4x8x32xf32> to vector<32x32xf32>
    %c0_5 = arith.constant 0 : index
    %c0_6 = arith.constant 0 : index
    %17 = vector.load %arg3[%c0_5, %c0_6] : memref<32x16xf32, #tpu.memory_space<vmem>>, vector<32x16xf32>
    %cst_7 = arith.constant dense<0.000000e+00> : vector<32x16xf32>
    %18 = tpu.matmul %16, %17, %cst_7 {dimension_numbers = #tpu.dot_dimension_numbers<[1], [0], [0], [1], [0, 0, 1, 1], [], []>} : vector<32x32xf32>, vector<32x16xf32>, vector<32x16xf32> -> vector<32x16xf32>
    %19 = arith.addf %3, %18 : vector<32x16xf32>
    %c0_8 = arith.constant 0 : index
    %c0_9 = arith.constant 0 : index
    %20 = vector.load %arg6[%c0_8, %c0_9] : memref<1x16xf32, #tpu.memory_space<vmem>>, vector<1x16xf32>
    %c0_10 = arith.constant 0 : index
    %c0_11 = arith.constant 0 : index
    %21 = vector.load %arg7[%c0_10, %c0_11] : memref<1x16xf32, #tpu.memory_space<vmem>>, vector<1x16xf32>
    %cst_12 = arith.constant dense<0.000000e+00> : vector<32xf32>
    %22 = vector.multi_reduction <add>, %19, %cst_12 [1] : vector<32x16xf32> to vector<32xf32>
    %23 = vector.shape_cast %22 : vector<32xf32> to vector<32x1xf32>
    %cst_13 = arith.constant 1.600000e+01 : f32
    %24 = vector.broadcast %cst_13 : f32 to vector<32x1xf32>
    %25 = arith.divf %23, %24 : vector<32x1xf32>
    %26 = vector.broadcast %25 : vector<32x1xf32> to vector<32x16xf32>
    %27 = arith.subf %19, %26 : vector<32x16xf32>
    %28 = arith.mulf %27, %27 : vector<32x16xf32>
    %cst_14 = arith.constant dense<0.000000e+00> : vector<32xf32>
    %29 = vector.multi_reduction <add>, %28, %cst_14 [1] : vector<32x16xf32> to vector<32xf32>
    %30 = vector.shape_cast %29 : vector<32xf32> to vector<32x1xf32>
    %cst_15 = arith.constant 1.600000e+01 : f32
    %31 = vector.broadcast %cst_15 : f32 to vector<32x1xf32>
    %32 = arith.divf %30, %31 : vector<32x1xf32>
    %cst_16 = arith.constant 9.99999974E-6 : f32
    %33 = vector.broadcast %cst_16 : f32 to vector<32x1xf32>
    %34 = arith.addf %32, %33 : vector<32x1xf32>
    %35 = math.rsqrt %34 : vector<32x1xf32>
    %36 = vector.broadcast %35 : vector<32x1xf32> to vector<32x16xf32>
    %37 = arith.mulf %27, %36 : vector<32x16xf32>
    %38 = vector.broadcast %20 : vector<1x16xf32> to vector<32x16xf32>
    %39 = arith.mulf %37, %38 : vector<32x16xf32>
    %40 = vector.broadcast %21 : vector<1x16xf32> to vector<32x16xf32>
    %41 = arith.addf %39, %40 : vector<32x16xf32>
    %c0_17 = arith.constant 0 : index
    %c0_18 = arith.constant 0 : index
    %42 = vector.load %arg4[%c0_17, %c0_18] : memref<16x16xf32, #tpu.memory_space<vmem>>, vector<16x16xf32>
    %cst_19 = arith.constant dense<0.000000e+00> : vector<32x16xf32>
    %43 = tpu.matmul %41, %42, %cst_19 {dimension_numbers = #tpu.dot_dimension_numbers<[1], [0], [0], [1], [0, 0, 1, 1], [], []>} : vector<32x16xf32>, vector<16x16xf32>, vector<32x16xf32> -> vector<32x16xf32>
    %c0_20 = arith.constant 0 : index
    %c0_21 = arith.constant 0 : index
    %44 = vector.load %arg5[%c0_20, %c0_21] : memref<1x16xf32, #tpu.memory_space<vmem>>, vector<1x16xf32>
    %45 = vector.broadcast %44 : vector<1x16xf32> to vector<32x16xf32>
    %46 = arith.addf %43, %45 : vector<32x16xf32>
    %47 = arith.addf %41, %46 : vector<32x16xf32>
    %c0_22 = arith.constant 0 : index
    %c0_23 = arith.constant 0 : index
    %48 = vector.load %arg8[%c0_22, %c0_23] : memref<1x16xf32, #tpu.memory_space<vmem>>, vector<1x16xf32>
    %c0_24 = arith.constant 0 : index
    %c0_25 = arith.constant 0 : index
    %49 = vector.load %arg9[%c0_24, %c0_25] : memref<1x16xf32, #tpu.memory_space<vmem>>, vector<1x16xf32>
    %cst_26 = arith.constant dense<0.000000e+00> : vector<32xf32>
    %50 = vector.multi_reduction <add>, %47, %cst_26 [1] : vector<32x16xf32> to vector<32xf32>
    %51 = vector.shape_cast %50 : vector<32xf32> to vector<32x1xf32>
    %cst_27 = arith.constant 1.600000e+01 : f32
    %52 = vector.broadcast %cst_27 : f32 to vector<32x1xf32>
    %53 = arith.divf %51, %52 : vector<32x1xf32>
    %54 = vector.broadcast %53 : vector<32x1xf32> to vector<32x16xf32>
    %55 = arith.subf %47, %54 : vector<32x16xf32>
    %56 = arith.mulf %55, %55 : vector<32x16xf32>
    %cst_28 = arith.constant dense<0.000000e+00> : vector<32xf32>
    %57 = vector.multi_reduction <add>, %56, %cst_28 [1] : vector<32x16xf32> to vector<32xf32>
    %58 = vector.shape_cast %57 : vector<32xf32> to vector<32x1xf32>
    %cst_29 = arith.constant 1.600000e+01 : f32
    %59 = vector.broadcast %cst_29 : f32 to vector<32x1xf32>
    %60 = arith.divf %58, %59 : vector<32x1xf32>
    %cst_30 = arith.constant 9.99999974E-6 : f32
    %61 = vector.broadcast %cst_30 : f32 to vector<32x1xf32>
    %62 = arith.addf %60, %61 : vector<32x1xf32>
    %63 = math.rsqrt %62 : vector<32x1xf32>
    %64 = vector.broadcast %63 : vector<32x1xf32> to vector<32x16xf32>
    %65 = arith.mulf %55, %64 : vector<32x16xf32>
    %66 = vector.broadcast %48 : vector<1x16xf32> to vector<32x16xf32>
    %67 = arith.mulf %65, %66 : vector<32x16xf32>
    %68 = vector.broadcast %49 : vector<1x16xf32> to vector<32x16xf32>
    %69 = arith.addf %67, %68 : vector<32x16xf32>
    %70 = vector.shape_cast %69 : vector<32x16xf32> to vector<4x8x16xf32>
    %71 = tpu.transpose %70, [0, 2, 1] : vector<4x8x16xf32> -> vector<4x16x8xf32>
    %72 = vector.shape_cast %71 : vector<4x16x8xf32> to vector<4x128xf32>
    %c0_31 = arith.constant 0 : index
    %c0_32 = arith.constant 0 : index
    %73 = vector.load %arg10[%c0_31, %c0_32] : memref<4x128xf32, #tpu.memory_space<vmem>>, vector<4x128xf32>
    tpu.vector_store %arg10[%c0_31, %c0_32], %72 {strides = array<i32>} : memref<4x128xf32, #tpu.memory_space<vmem>>, vector<4x128xf32>,
    return
  }
  func.func @transform_0(%arg0: i32) -> (i32, i32) {
    %c0_i32 = arith.constant 0 : i32
    %c0_i32_0 = arith.constant 0 : i32
    return %arg0, %c0_i32 : i32, i32
  }
  func.func @transform_1(%arg0: i32) -> (i32, i32) {
    %c0_i32 = arith.constant 0 : i32
    %c0_i32_0 = arith.constant 0 : i32
    %c0_i32_1 = arith.constant 0 : i32
    return %c0_i32, %c0_i32_0 : i32, i32
  }
  func.func @transform_2(%arg0: i32) -> (i32, i32) {
    %c0_i32 = arith.constant 0 : i32
    %c0_i32_0 = arith.constant 0 : i32
    %c0_i32_1 = arith.constant 0 : i32
    return %c0_i32, %c0_i32_0 : i32, i32
  }
  func.func @transform_3(%arg0: i32) -> (i32, i32) {
    %c0_i32 = arith.constant 0 : i32
    %c0_i32_0 = arith.constant 0 : i32
    %c0_i32_1 = arith.constant 0 : i32
    return %c0_i32, %c0_i32_0 : i32, i32
  }
  func.func @transform_4(%arg0: i32) -> (i32, i32) {
    %c0_i32 = arith.constant 0 : i32
    %c0_i32_0 = arith.constant 0 : i32
    %c0_i32_1 = arith.constant 0 : i32
    return %c0_i32, %c0_i32_0 : i32, i32
  }
  func.func @transform_5(%arg0: i32) -> (i32, i32) {
    %c0_i32 = arith.constant 0 : i32
    %c0_i32_0 = arith.constant 0 : i32
    %c0_i32_1 = arith.constant 0 : i32
    return %c0_i32, %c0_i32_0 : i32, i32
  }
  func.func @transform_6(%arg0: i32) -> (i32, i32) {
    %c0_i32 = arith.constant 0 : i32
    %c0_i32_0 = arith.constant 0 : i32
    %c0_i32_1 = arith.constant 0 : i32
    return %c0_i32, %c0_i32_0 : i32, i32
  }
  func.func @transform_7(%arg0: i32) -> (i32, i32) {
    %c0_i32 = arith.constant 0 : i32
    %c0_i32_0 = arith.constant 0 : i32
    %c0_i32_1 = arith.constant 0 : i32
    return %c0_i32, %c0_i32_0 : i32, i32
  }
  func.func @transform_8(%arg0: i32) -> (i32, i32) {
    %c0_i32 = arith.constant 0 : i32
    %c0_i32_0 = arith.constant 0 : i32
    %c0_i32_1 = arith.constant 0 : i32
    return %c0_i32, %c0_i32_0 : i32, i32
  }
  func.func @transform_9(%arg0: i32) -> (i32, i32) {
    %c0_i32 = arith.constant 0 : i32
    %c0_i32_0 = arith.constant 0 : i32
    return %arg0, %c0_i32 : i32, i32
  }
}

module attributes {stable_mosaic.version = 11 : i64} {
  func.func @lencoder_kernel(%arg0: i32, %arg1: memref<4x128xf32, #tpu.memory_space<vmem>>, %arg2: memref<16x32xf32, #tpu.memory_space<vmem>>, %arg3: memref<32x16xf32, #tpu.memory_space<vmem>>, %arg4: memref<16x16xf32, #tpu.memory_space<vmem>>, %arg5: memref<1x16xf32, #tpu.memory_space<vmem>>, %arg6: memref<1x16xf32, #tpu.memory_space<vmem>>, %arg7: memref<1x16xf32, #tpu.memory_space<vmem>>, %arg8: memref<1x16xf32, #tpu.memory_space<vmem>>, %arg9: memref<1x16xf32, #tpu.memory_space<vmem>>, %arg10: memref<4x128xf32, #tpu.memory_space<vmem>>) attributes {dimension_semantics = [#tpu.dimension_semantics<parallel>], iteration_bounds = array<i64: 1>, scalar_prefetch = 0 : i64, scratch_operands = 0 : i64, tpu.core_type = #tpu.core_type<tc>, window_params = [{transform_indices = @transform_0, window_bounds = array<i64: 4, 128>}, {pipeline_mode = #tpu.pipeline_mode<synchronous>, transform_indices = @transform_1, window_bounds = array<i64: 16, 32>}, {pipeline_mode = #tpu.pipeline_mode<synchronous>, transform_indices = @transform_2, window_bounds = array<i64: 32, 16>}, {pipeline_mode = #tpu.pipeline_mode<synchronous>, transform_indices = @transform_3, window_bounds = array<i64: 16, 16>}, {pipeline_mode = #tpu.pipeline_mode<synchronous>, transform_indices = @transform_4, window_bounds = array<i64: 1, 16>}, {pipeline_mode = #tpu.pipeline_mode<synchronous>, transform_indices = @transform_5, window_bounds = array<i64: 1, 16>}, {pipeline_mode = #tpu.pipeline_mode<synchronous>, transform_indices = @transform_6, window_bounds = array<i64: 1, 16>}, {pipeline_mode = #tpu.pipeline_mode<synchronous>, transform_indices = @transform_7, window_bounds = array<i64: 1, 16>}, {pipeline_mode = #tpu.pipeline_mode<synchronous>, transform_indices = @transform_8, window_bounds = array<i64: 1, 16>}, {transform_indices = @transform_9, window_bounds = array<i64: 4, 128>}]} {
    %c0 = arith.constant 0 : index
    %c0_0 = arith.constant 0 : index
    %0 = vector.load %arg1[%c0, %c0_0] : memref<4x128xf32, #tpu.memory_space<vmem>>, vector<4x128xf32>
    %1 = vector.shape_cast %0 : vector<4x128xf32> to vector<4x16x8xf32>
    %2 = tpu.transpose %1, [0, 2, 1] : vector<4x16x8xf32> -> vector<4x8x16xf32>
    %3 = vector.shape_cast %2 : vector<4x8x16xf32> to vector<32x16xf32>
    %c0_1 = arith.constant 0 : index
    %c0_2 = arith.constant 0 : index
    %4 = vector.load %arg2[%c0_1, %c0_2] : memref<16x32xf32, #tpu.memory_space<vmem>>, vector<16x32xf32>
    %cst = arith.constant dense<0.000000e+00> : vector<32x32xf32>
    %5 = tpu.matmul %3, %4, %cst {dimension_numbers = #tpu.dot_dimension_numbers<[1], [0], [0], [1], [0, 0, 1, 1], [], []>} : vector<32x16xf32>, vector<16x32xf32>, vector<32x32xf32> -> vector<32x32xf32>
    %6 = vector.shape_cast %5 : vector<32x32xf32> to vector<4x8x32xf32>
    %cst_3 = arith.constant dense<0xFF800000> : vector<4x32xf32>
    %7 = vector.multi_reduction <maximumf>, %6, %cst_3 [1] : vector<4x8x32xf32> to vector<4x32xf32>
    %8 = vector.shape_cast %7 : vector<4x32xf32> to vector<4x1x32xf32>
    %9 = vector.broadcast %8 : vector<4x1x32xf32> to vector<4x8x32xf32>
    %10 = arith.subf %6, %9 : vector<4x8x32xf32>
    %11 = math.exp %10 : vector<4x8x32xf32>
    %cst_4 = arith.constant dense<0.000000e+00> : vector<4x32xf32>
    %12 = vector.multi_reduction <add>, %11, %cst_4 [1] : vector<4x8x32xf32> to vector<4x32xf32>
    %13 = vector.shape_cast %12 : vector<4x32xf32> to vector<4x1x32xf32>
    %14 = vector.broadcast %13 : vector<4x1x32xf32> to vector<4x8x32xf32>
    %15 = arith.divf %11, %14 : vector<4x8x32xf32>
    %16 = vector.shape_cast %15 : vector<4x8x32xf32> to vector<32x32xf32>
    %c0_5 = arith.constant 0 : index
    %c0_6 = arith.constant 0 : index
    %17 = vector.load %arg3[%c0_5, %c0_6] : memref<32x16xf32, #tpu.memory_space<vmem>>, vector<32x16xf32>
    %cst_7 = arith.constant dense<0.000000e+00> : vector<32x16xf32>
    %18 = tpu.matmul %16, %17, %cst_7 {dimension_numbers = #tpu.dot_dimension_numbers<[1], [0], [0], [1], [0, 0, 1, 1], [], []>} : vector<32x32xf32>, vector<32x16xf32>, vector<32x16xf32> -> vector<32x16xf32>
    %19 = arith.addf %3, %18 : vector<32x16xf32>
    %c0_8 = arith.constant 0 : index
    %c0_9 = arith.constant 0 : index
    %20 = vector.load %arg6[%c0_8, %c0_9] : memref<1x16xf32, #tpu.memory_space<vmem>>, vector<1x16xf32>
    %c0_10 = arith.constant 0 : index
    %c0_11 = arith.constant 0 : index
    %21 = vector.load %arg7[%c0_10, %c0_11] : memref<1x16xf32, #tpu.memory_space<vmem>>, vector<1x16xf32>
    %cst_12 = arith.constant dense<0.000000e+00> : vector<32xf32>
    %22 = vector.multi_reduction <add>, %19, %cst_12 [1] : vector<32x16xf32> to vector<32xf32>
    %23 = vector.shape_cast %22 : vector<32xf32> to vector<32x1xf32>
    %cst_13 = arith.constant 1.600000e+01 : f32
    %24 = vector.broadcast %cst_13 : f32 to vector<32x1xf32>
    %25 = arith.divf %23, %24 : vector<32x1xf32>
    %26 = vector.broadcast %25 : vector<32x1xf32> to vector<32x16xf32>
    %27 = arith.subf %19, %26 : vector<32x16xf32>
    %28 = arith.mulf %27, %27 : vector<32x16xf32>
    %cst_14 = arith.constant dense<0.000000e+00> : vector<32xf32>
    %29 = vector.multi_reduction <add>, %28, %cst_14 [1] : vector<32x16xf32> to vector<32xf32>
    %30 = vector.shape_cast %29 : vector<32xf32> to vector<32x1xf32>
    %cst_15 = arith.constant 1.600000e+01 : f32
    %31 = vector.broadcast %cst_15 : f32 to vector<32x1xf32>
    %32 = arith.divf %30, %31 : vector<32x1xf32>
    %cst_16 = arith.constant 9.99999974E-6 : f32
    %33 = vector.broadcast %cst_16 : f32 to vector<32x1xf32>
    %34 = arith.addf %32, %33 : vector<32x1xf32>
    %35 = math.rsqrt %34 : vector<32x1xf32>
    %36 = vector.broadcast %35 : vector<32x1xf32> to vector<32x16xf32>
    %37 = arith.mulf %27, %36 : vector<32x16xf32>
    %38 = vector.broadcast %20 : vector<1x16xf32> to vector<32x16xf32>
    %39 = arith.mulf %37, %38 : vector<32x16xf32>
    %40 = vector.broadcast %21 : vector<1x16xf32> to vector<32x16xf32>
    %41 = arith.addf %39, %40 : vector<32x16xf32>
    %c0_17 = arith.constant 0 : index
    %c0_18 = arith.constant 0 : index
    %42 = vector.load %arg4[%c0_17, %c0_18] : memref<16x16xf32, #tpu.memory_space<vmem>>, vector<16x16xf32>
    %cst_19 = arith.constant dense<0.000000e+00> : vector<32x16xf32>
    %43 = tpu.matmul %41, %42, %cst_19 {dimension_numbers = #tpu.dot_dimension_numbers<[1], [0], [0], [1], [0, 0, 1, 1], [], []>} : vector<32x16xf32>, vector<16x16xf32>, vector<32x16xf32> -> vector<32x16xf32>
    %c0_20 = arith.constant 0 : index
    %c0_21 = arith.constant 0 : index
    %44 = vector.load %arg5[%c0_20, %c0_21] : memref<1x16xf32, #tpu.memory_space<vmem>>, vector<1x16xf32>
    %45 = vector.broadcast %44 : vector<1x16xf32> to vector<32x16xf32>
    %46 = arith.addf %43, %45 : vector<32x16xf32>
    %47 = arith.addf %41, %46 : vector<32x16xf32>
    %c0_22 = arith.constant 0 : index
    %c0_23 = arith.constant 0 : index
    %48 = vector.load %arg8[%c0_22, %c0_23] : memref<1x16xf32, #tpu.memory_space<vmem>>, vector<1x16xf32>
    %c0_24 = arith.constant 0 : index
    %c0_25 = arith.constant 0 : index
    %49 = vector.load %arg9[%c0_24, %c0_25] : memref<1x16xf32, #tpu.memory_space<vmem>>, vector<1x16xf32>
    %cst_26 = arith.constant dense<0.000000e+00> : vector<32xf32>
    %50 = vector.multi_reduction <add>, %47, %cst_26 [1] : vector<32x16xf32> to vector<32xf32>
    %51 = vector.shape_cast %50 : vector<32xf32> to vector<32x1xf32>
    %cst_27 = arith.constant 1.600000e+01 : f32
    %52 = vector.broadcast %cst_27 : f32 to vector<32x1xf32>
    %53 = arith.divf %51, %52 : vector<32x1xf32>
    %54 = vector.broadcast %53 : vector<32x1xf32> to vector<32x16xf32>
    %55 = arith.subf %47, %54 : vector<32x16xf32>
    %56 = arith.mulf %55, %55 : vector<32x16xf32>
    %cst_28 = arith.constant dense<0.000000e+00> : vector<32xf32>
    %57 = vector.multi_reduction <add>, %56, %cst_28 [1] : vector<32x16xf32> to vector<32xf32>
    %58 = vector.shape_cast %57 : vector<32xf32> to vector<32x1xf32>
    %cst_29 = arith.constant 1.600000e+01 : f32
    %59 = vector.broadcast %cst_29 : f32 to vector<32x1xf32>
    %60 = arith.divf %58, %59 : vector<32x1xf32>
    %cst_30 = arith.constant 9.99999974E-6 : f32
    %61 = vector.broadcast %cst_30 : f32 to vector<32x1xf32>
    %62 = arith.addf %60, %61 : vector<32x1xf32>
    %63 = math.rsqrt %62 : vector<32x1xf32>
    %64 = vector.broadcast %63 : vector<32x1xf32> to vector<32x16xf32>
    %65 = arith.mulf %55, %64 : vector<32x16xf32>
    %66 = vector.broadcast %48 : vector<1x16xf32> to vector<32x16xf32>
    %67 = arith.mulf %65, %66 : vector<32x16xf32>
    %68 = vector.broadcast %49 : vector<1x16xf32> to vector<32x16xf32>
    %69 = arith.addf %67, %68 : vector<32x16xf32>
    %70 = vector.shape_cast %69 : vector<32x16xf32> to vector<4x8x16xf32>
    %71 = tpu.transpose %70, [0, 2, 1] : vector<4x8x16xf32> -> vector<4x16x8xf32>
    %72 = vector.shape_cast %71 : vector<4x16x8xf32> to vector<4x128xf32>
    %c0_31 = arith.constant 0 : index
    %c0_32 = arith.constant 0 : index
    %73 = vector.load %arg10[%c0_31, %c0_32] : memref<4x128xf32, #tpu.memory_space<vmem>>, vector<4x128xf32>
    tpu.vector_store %arg10[%c0_31, %c0_32], %72 {strides = array<i32>} : memref<4x128xf32, #tpu.memory_space<vmem>>, vector<4x128xf32>,
    return
  }
  func.func @transform_0(%arg0: i32) -> (i32, i32) {
    %c0_i32 = arith.constant 0 : i32
    %c0_i32_0 = arith.constant 0 : i32
    return %arg0, %c0_i32 : i32, i32
  }
  func.func @transform_1(%arg0: i32) -> (i32, i32) {
    %c0_i32 = arith.constant 0 : i32
    %c0_i32_0 = arith.constant 0 : i32
    %c0_i32_1 = arith.constant 0 : i32
    return %c0_i32, %c0_i32_0 : i32, i32
  }
  func.func @transform_2(%arg0: i32) -> (i32, i32) {
    %c0_i32 = arith.constant 0 : i32
    %c0_i32_0 = arith.constant 0 : i32
    %c0_i32_1 = arith.constant 0 : i32
    return %c0_i32, %c0_i32_0 : i32, i32
  }
  func.func @transform_3(%arg0: i32) -> (i32, i32) {
    %c0_i32 = arith.constant 0 : i32
    %c0_i32_0 = arith.constant 0 : i32
    %c0_i32_1 = arith.constant 0 : i32
    return %c0_i32, %c0_i32_0 : i32, i32
  }
  func.func @transform_4(%arg0: i32) -> (i32, i32) {
    %c0_i32 = arith.constant 0 : i32
    %c0_i32_0 = arith.constant 0 : i32
    %c0_i32_1 = arith.constant 0 : i32
    return %c0_i32, %c0_i32_0 : i32, i32
  }
  func.func @transform_5(%arg0: i32) -> (i32, i32) {
    %c0_i32 = arith.constant 0 : i32
    %c0_i32_0 = arith.constant 0 : i32
    %c0_i32_1 = arith.constant 0 : i32
    return %c0_i32, %c0_i32_0 : i32, i32
  }
  func.func @transform_6(%arg0: i32) -> (i32, i32) {
    %c0_i32 = arith.constant 0 : i32
    %c0_i32_0 = arith.constant 0 : i32
    %c0_i32_1 = arith.constant 0 : i32
    return %c0_i32, %c0_i32_0 : i32, i32
  }
  func.func @transform_7(%arg0: i32) -> (i32, i32) {
    %c0_i32 = arith.constant 0 : i32
    %c0_i32_0 = arith.constant 0 : i32
    %c0_i32_1 = arith.constant 0 : i32
    return %c0_i32, %c0_i32_0 : i32, i32
  }
  func.func @transform_8(%arg0: i32) -> (i32, i32) {
    %c0_i32 = arith.constant 0 : i32
    %c0_i32_0 = arith.constant 0 : i32
    %c0_i32_1 = arith.constant 0 : i32
    return %c0_i32, %c0_i32_0 : i32, i32
  }
  func.func @transform_9(%arg0: i32) -> (i32, i32) {
    %c0_i32 = arith.constant 0 : i32
    %c0_i32_0 = arith.constant 0 : i32
    return %arg0, %c0_i32 : i32, i32
  }
}

module attributes {stable_mosaic.version = 11 : i64} {
  func.func @lencoder_kernel(%arg0: i32, %arg1: memref<4x16x8xf32, #tpu.memory_space<vmem>>, %arg2: memref<16x32xf32, #tpu.memory_space<vmem>>, %arg3: memref<32x16xf32, #tpu.memory_space<vmem>>, %arg4: memref<16x16xf32, #tpu.memory_space<vmem>>, %arg5: memref<1x16xf32, #tpu.memory_space<vmem>>, %arg6: memref<1x16xf32, #tpu.memory_space<vmem>>, %arg7: memref<1x16xf32, #tpu.memory_space<vmem>>, %arg8: memref<1x16xf32, #tpu.memory_space<vmem>>, %arg9: memref<1x16xf32, #tpu.memory_space<vmem>>, %arg10: memref<4x16x8xf32, #tpu.memory_space<vmem>>) attributes {dimension_semantics = [#tpu.dimension_semantics<parallel>], iteration_bounds = array<i64: 1>, scalar_prefetch = 0 : i64, scratch_operands = 0 : i64, tpu.core_type = #tpu.core_type<tc>, window_params = [{transform_indices = @transform_0, window_bounds = array<i64: 4, 16, 8>}, {pipeline_mode = #tpu.pipeline_mode<synchronous>, transform_indices = @transform_1, window_bounds = array<i64: 16, 32>}, {pipeline_mode = #tpu.pipeline_mode<synchronous>, transform_indices = @transform_2, window_bounds = array<i64: 32, 16>}, {pipeline_mode = #tpu.pipeline_mode<synchronous>, transform_indices = @transform_3, window_bounds = array<i64: 16, 16>}, {pipeline_mode = #tpu.pipeline_mode<synchronous>, transform_indices = @transform_4, window_bounds = array<i64: 1, 16>}, {pipeline_mode = #tpu.pipeline_mode<synchronous>, transform_indices = @transform_5, window_bounds = array<i64: 1, 16>}, {pipeline_mode = #tpu.pipeline_mode<synchronous>, transform_indices = @transform_6, window_bounds = array<i64: 1, 16>}, {pipeline_mode = #tpu.pipeline_mode<synchronous>, transform_indices = @transform_7, window_bounds = array<i64: 1, 16>}, {pipeline_mode = #tpu.pipeline_mode<synchronous>, transform_indices = @transform_8, window_bounds = array<i64: 1, 16>}, {transform_indices = @transform_9, window_bounds = array<i64: 4, 16, 8>}]} {
    %c0 = arith.constant 0 : index
    %c0_0 = arith.constant 0 : index
    %c0_1 = arith.constant 0 : index
    %0 = vector.load %arg1[%c0, %c0_0, %c0_1] : memref<4x16x8xf32, #tpu.memory_space<vmem>>, vector<4x16x8xf32>
    %1 = tpu.transpose %0, [0, 2, 1] : vector<4x16x8xf32> -> vector<4x8x16xf32>
    %2 = vector.shape_cast %1 : vector<4x8x16xf32> to vector<32x16xf32>
    %c0_2 = arith.constant 0 : index
    %c0_3 = arith.constant 0 : index
    %3 = vector.load %arg2[%c0_2, %c0_3] : memref<16x32xf32, #tpu.memory_space<vmem>>, vector<16x32xf32>
    %cst = arith.constant dense<0.000000e+00> : vector<32x32xf32>
    %4 = tpu.matmul %2, %3, %cst {dimension_numbers = #tpu.dot_dimension_numbers<[1], [0], [0], [1], [0, 0, 1, 1], [], []>} : vector<32x16xf32>, vector<16x32xf32>, vector<32x32xf32> -> vector<32x32xf32>
    %5 = vector.shape_cast %4 : vector<32x32xf32> to vector<4x8x32xf32>
    %cst_4 = arith.constant dense<0xFF800000> : vector<4x32xf32>
    %6 = vector.multi_reduction <maximumf>, %5, %cst_4 [1] : vector<4x8x32xf32> to vector<4x32xf32>
    %7 = vector.shape_cast %6 : vector<4x32xf32> to vector<4x1x32xf32>
    %8 = vector.broadcast %7 : vector<4x1x32xf32> to vector<4x8x32xf32>
    %9 = arith.subf %5, %8 : vector<4x8x32xf32>
    %10 = math.exp %9 : vector<4x8x32xf32>
    %cst_5 = arith.constant dense<0.000000e+00> : vector<4x32xf32>
    %11 = vector.multi_reduction <add>, %10, %cst_5 [1] : vector<4x8x32xf32> to vector<4x32xf32>
    %12 = vector.shape_cast %11 : vector<4x32xf32> to vector<4x1x32xf32>
    %13 = vector.broadcast %12 : vector<4x1x32xf32> to vector<4x8x32xf32>
    %14 = arith.divf %10, %13 : vector<4x8x32xf32>
    %15 = vector.shape_cast %14 : vector<4x8x32xf32> to vector<32x32xf32>
    %c0_6 = arith.constant 0 : index
    %c0_7 = arith.constant 0 : index
    %16 = vector.load %arg3[%c0_6, %c0_7] : memref<32x16xf32, #tpu.memory_space<vmem>>, vector<32x16xf32>
    %cst_8 = arith.constant dense<0.000000e+00> : vector<32x16xf32>
    %17 = tpu.matmul %15, %16, %cst_8 {dimension_numbers = #tpu.dot_dimension_numbers<[1], [0], [0], [1], [0, 0, 1, 1], [], []>} : vector<32x32xf32>, vector<32x16xf32>, vector<32x16xf32> -> vector<32x16xf32>
    %18 = arith.addf %2, %17 : vector<32x16xf32>
    %c0_9 = arith.constant 0 : index
    %c0_10 = arith.constant 0 : index
    %19 = vector.load %arg6[%c0_9, %c0_10] : memref<1x16xf32, #tpu.memory_space<vmem>>, vector<1x16xf32>
    %c0_11 = arith.constant 0 : index
    %c0_12 = arith.constant 0 : index
    %20 = vector.load %arg7[%c0_11, %c0_12] : memref<1x16xf32, #tpu.memory_space<vmem>>, vector<1x16xf32>
    %cst_13 = arith.constant dense<0.000000e+00> : vector<32xf32>
    %21 = vector.multi_reduction <add>, %18, %cst_13 [1] : vector<32x16xf32> to vector<32xf32>
    %22 = vector.shape_cast %21 : vector<32xf32> to vector<32x1xf32>
    %cst_14 = arith.constant 1.600000e+01 : f32
    %23 = vector.broadcast %cst_14 : f32 to vector<32x1xf32>
    %24 = arith.divf %22, %23 : vector<32x1xf32>
    %25 = vector.broadcast %24 : vector<32x1xf32> to vector<32x16xf32>
    %26 = arith.subf %18, %25 : vector<32x16xf32>
    %27 = arith.mulf %26, %26 : vector<32x16xf32>
    %cst_15 = arith.constant dense<0.000000e+00> : vector<32xf32>
    %28 = vector.multi_reduction <add>, %27, %cst_15 [1] : vector<32x16xf32> to vector<32xf32>
    %29 = vector.shape_cast %28 : vector<32xf32> to vector<32x1xf32>
    %cst_16 = arith.constant 1.600000e+01 : f32
    %30 = vector.broadcast %cst_16 : f32 to vector<32x1xf32>
    %31 = arith.divf %29, %30 : vector<32x1xf32>
    %cst_17 = arith.constant 9.99999974E-6 : f32
    %32 = vector.broadcast %cst_17 : f32 to vector<32x1xf32>
    %33 = arith.addf %31, %32 : vector<32x1xf32>
    %34 = math.rsqrt %33 : vector<32x1xf32>
    %35 = vector.broadcast %34 : vector<32x1xf32> to vector<32x16xf32>
    %36 = arith.mulf %26, %35 : vector<32x16xf32>
    %37 = vector.broadcast %19 : vector<1x16xf32> to vector<32x16xf32>
    %38 = arith.mulf %36, %37 : vector<32x16xf32>
    %39 = vector.broadcast %20 : vector<1x16xf32> to vector<32x16xf32>
    %40 = arith.addf %38, %39 : vector<32x16xf32>
    %c0_18 = arith.constant 0 : index
    %c0_19 = arith.constant 0 : index
    %41 = vector.load %arg4[%c0_18, %c0_19] : memref<16x16xf32, #tpu.memory_space<vmem>>, vector<16x16xf32>
    %cst_20 = arith.constant dense<0.000000e+00> : vector<32x16xf32>
    %42 = tpu.matmul %40, %41, %cst_20 {dimension_numbers = #tpu.dot_dimension_numbers<[1], [0], [0], [1], [0, 0, 1, 1], [], []>} : vector<32x16xf32>, vector<16x16xf32>, vector<32x16xf32> -> vector<32x16xf32>
    %c0_21 = arith.constant 0 : index
    %c0_22 = arith.constant 0 : index
    %43 = vector.load %arg5[%c0_21, %c0_22] : memref<1x16xf32, #tpu.memory_space<vmem>>, vector<1x16xf32>
    %44 = vector.broadcast %43 : vector<1x16xf32> to vector<32x16xf32>
    %45 = arith.addf %42, %44 : vector<32x16xf32>
    %46 = arith.addf %40, %45 : vector<32x16xf32>
    %c0_23 = arith.constant 0 : index
    %c0_24 = arith.constant 0 : index
    %47 = vector.load %arg8[%c0_23, %c0_24] : memref<1x16xf32, #tpu.memory_space<vmem>>, vector<1x16xf32>
    %c0_25 = arith.constant 0 : index
    %c0_26 = arith.constant 0 : index
    %48 = vector.load %arg9[%c0_25, %c0_26] : memref<1x16xf32, #tpu.memory_space<vmem>>, vector<1x16xf32>
    %cst_27 = arith.constant dense<0.000000e+00> : vector<32xf32>
    %49 = vector.multi_reduction <add>, %46, %cst_27 [1] : vector<32x16xf32> to vector<32xf32>
    %50 = vector.shape_cast %49 : vector<32xf32> to vector<32x1xf32>
    %cst_28 = arith.constant 1.600000e+01 : f32
    %51 = vector.broadcast %cst_28 : f32 to vector<32x1xf32>
    %52 = arith.divf %50, %51 : vector<32x1xf32>
    %53 = vector.broadcast %52 : vector<32x1xf32> to vector<32x16xf32>
    %54 = arith.subf %46, %53 : vector<32x16xf32>
    %55 = arith.mulf %54, %54 : vector<32x16xf32>
    %cst_29 = arith.constant dense<0.000000e+00> : vector<32xf32>
    %56 = vector.multi_reduction <add>, %55, %cst_29 [1] : vector<32x16xf32> to vector<32xf32>
    %57 = vector.shape_cast %56 : vector<32xf32> to vector<32x1xf32>
    %cst_30 = arith.constant 1.600000e+01 : f32
    %58 = vector.broadcast %cst_30 : f32 to vector<32x1xf32>
    %59 = arith.divf %57, %58 : vector<32x1xf32>
    %cst_31 = arith.constant 9.99999974E-6 : f32
    %60 = vector.broadcast %cst_31 : f32 to vector<32x1xf32>
    %61 = arith.addf %59, %60 : vector<32x1xf32>
    %62 = math.rsqrt %61 : vector<32x1xf32>
    %63 = vector.broadcast %62 : vector<32x1xf32> to vector<32x16xf32>
    %64 = arith.mulf %54, %63 : vector<32x16xf32>
    %65 = vector.broadcast %47 : vector<1x16xf32> to vector<32x16xf32>
    %66 = arith.mulf %64, %65 : vector<32x16xf32>
    %67 = vector.broadcast %48 : vector<1x16xf32> to vector<32x16xf32>
    %68 = arith.addf %66, %67 : vector<32x16xf32>
    %69 = vector.shape_cast %68 : vector<32x16xf32> to vector<4x8x16xf32>
    %70 = tpu.transpose %69, [0, 2, 1] : vector<4x8x16xf32> -> vector<4x16x8xf32>
    %c0_32 = arith.constant 0 : index
    %c0_33 = arith.constant 0 : index
    %c0_34 = arith.constant 0 : index
    %71 = vector.load %arg10[%c0_32, %c0_33, %c0_34] : memref<4x16x8xf32, #tpu.memory_space<vmem>>, vector<4x16x8xf32>
    tpu.vector_store %arg10[%c0_32, %c0_33, %c0_34], %70 {strides = array<i32>} : memref<4x16x8xf32, #tpu.memory_space<vmem>>, vector<4x16x8xf32>,
    return
  }
  func.func @transform_0(%arg0: i32) -> (i32, i32, i32) {
    %c0_i32 = arith.constant 0 : i32
    %c0_i32_0 = arith.constant 0 : i32
    %c0_i32_1 = arith.constant 0 : i32
    return %arg0, %c0_i32, %c0_i32_0 : i32, i32, i32
  }
  func.func @transform_1(%arg0: i32) -> (i32, i32) {
    %c0_i32 = arith.constant 0 : i32
    %c0_i32_0 = arith.constant 0 : i32
    %c0_i32_1 = arith.constant 0 : i32
    return %c0_i32, %c0_i32_0 : i32, i32
  }
  func.func @transform_2(%arg0: i32) -> (i32, i32) {
    %c0_i32 = arith.constant 0 : i32
    %c0_i32_0 = arith.constant 0 : i32
    %c0_i32_1 = arith.constant 0 : i32
    return %c0_i32, %c0_i32_0 : i32, i32
  }
  func.func @transform_3(%arg0: i32) -> (i32, i32) {
    %c0_i32 = arith.constant 0 : i32
    %c0_i32_0 = arith.constant 0 : i32
    %c0_i32_1 = arith.constant 0 : i32
    return %c0_i32, %c0_i32_0 : i32, i32
  }
  func.func @transform_4(%arg0: i32) -> (i32, i32) {
    %c0_i32 = arith.constant 0 : i32
    %c0_i32_0 = arith.constant 0 : i32
    %c0_i32_1 = arith.constant 0 : i32
    return %c0_i32, %c0_i32_0 : i32, i32
  }
  func.func @transform_5(%arg0: i32) -> (i32, i32) {
    %c0_i32 = arith.constant 0 : i32
    %c0_i32_0 = arith.constant 0 : i32
    %c0_i32_1 = arith.constant 0 : i32
    return %c0_i32, %c0_i32_0 : i32, i32
  }
  func.func @transform_6(%arg0: i32) -> (i32, i32) {
    %c0_i32 = arith.constant 0 : i32
    %c0_i32_0 = arith.constant 0 : i32
    %c0_i32_1 = arith.constant 0 : i32
    return %c0_i32, %c0_i32_0 : i32, i32
  }
  func.func @transform_7(%arg0: i32) -> (i32, i32) {
    %c0_i32 = arith.constant 0 : i32
    %c0_i32_0 = arith.constant 0 : i32
    %c0_i32_1 = arith.constant 0 : i32
    return %c0_i32, %c0_i32_0 : i32, i32
  }
  func.func @transform_8(%arg0: i32) -> (i32, i32) {
    %c0_i32 = arith.constant 0 : i32
    %c0_i32_0 = arith.constant 0 : i32
    %c0_i32_1 = arith.constant 0 : i32
    return %c0_i32, %c0_i32_0 : i32, i32
  }
  func.func @transform_9(%arg0: i32) -> (i32, i32, i32) {
    %c0_i32 = arith.constant 0 : i32
    %c0_i32_0 = arith.constant 0 : i32
    %c0_i32_1 = arith.constant 0 : i32
    return %arg0, %c0_i32, %c0_i32_0 : i32, i32, i32
  }
}

</mosaic_0001>

<llo_original>
// kernel: tpu_custom_call.1
$region0: #{tpu_custom_call.1}
  #allocation0 [shape = 'u32[]', space=smem, size = 0x4, offset = 0x4, fixed_abs, tag = 'smem constant byte address 0x4 - core index']
  #allocation1 [shape = 'u32[144,128]{1,0:T(1,128)}', space=vmem, size = 0x12000, scoped, tag = 'internal scratch']
  %s0 = inlined_call_operand.vmem [shape: f32[4,128], index: 0, kind: input, shape index: {}]
  %s1 = inlined_call_operand.vmem [shape: f32[16,32], index: 1, kind: input, shape index: {}]
  %s2 = inlined_call_operand.vmem [shape: f32[32,16], index: 2, kind: input, shape index: {}]
  %s3 = inlined_call_operand.vmem [shape: f32[16,16], index: 3, kind: input, shape index: {}]
  %s4 = inlined_call_operand.vmem [shape: f32[1,16], index: 4, kind: input, shape index: {}]
  %s5 = inlined_call_operand.vmem [shape: f32[1,16], index: 5, kind: input, shape index: {}]
  %s6 = inlined_call_operand.vmem [shape: f32[1,16], index: 6, kind: input, shape index: {}]
  %s7 = inlined_call_operand.vmem [shape: f32[1,16], index: 7, kind: input, shape index: {}]
  %s8 = inlined_call_operand.vmem [shape: f32[1,16], index: 8, kind: input, shape index: {}]
  %s9 = inlined_call_operand.hbm [shape: f32[4,128], index: 9, kind: output, shape index: {}]
  %s10 = sld [smem:[#allocation0]]
  $region46: #{tpu_custom_call.1} parent=0
    _
  %s12 = ssub.s32 1, %s10
  %s13 = scalar_select 0, %s12, %s10
  $region1: #{tpu_custom_call.1} parent=0
    #allocation2 [shape = 'u8[2048]{0}', space=vmem, size = 0x800, scoped, tag = 'output window, operand 0, single buffered']
    #allocation3 [shape = 's32[1]{0}', space=sflag, size = 0x4, scoped, tag = 'scoped memory for tpu_custom_call.1']
    %14 = vsyncpa [#allocation3], 0
    // Predicated region
    $region2: #{tpu_custom_call.1} parent=1 // pred_check
      _
    $region3: #{tpu_custom_call.1} parent=1 // pred_check_branch
      %16 = sbr.rel (0) target = $region5
    $region4: #{tpu_custom_call.1} parent=1 // pred_region
      _
    $region5: #{tpu_custom_call.1} parent=1 // pred_fallthru
      _
    // Predicated region
    $region6: #{tpu_custom_call.1} parent=1 // pred_check
      _
    $region7: #{tpu_custom_call.1} parent=1 // pred_check_branch
      %18 = sbr.rel (0) target = $region9
    $region8: #{tpu_custom_call.1} parent=1 // pred_region
      _
    $region9: #{tpu_custom_call.1} parent=1 // pred_fallthru
      _
    // Predicated region
    $region10: #{tpu_custom_call.1} parent=1 // pred_check
      _
    $region11: #{tpu_custom_call.1} parent=1 // pred_check_branch
      %20 = sbr.rel (0) target = $region13
    $region12: #{tpu_custom_call.1} parent=1 // pred_region
      _
    $region13: #{tpu_custom_call.1} parent=1 // pred_fallthru
      _
    // Predicated region
    $region14: #{tpu_custom_call.1} parent=1 // pred_check
      _
    $region15: #{tpu_custom_call.1} parent=1 // pred_check_branch
      %22 = sbr.rel (0) target = $region17
    $region16: #{tpu_custom_call.1} parent=1 // pred_region
      _
    $region17: #{tpu_custom_call.1} parent=1 // pred_fallthru
      _
    // Predicated region
    $region18: #{tpu_custom_call.1} parent=1 // pred_check
      _
    $region19: #{tpu_custom_call.1} parent=1 // pred_check_branch
      %24 = sbr.rel (0) target = $region21
    $region20: #{tpu_custom_call.1} parent=1 // pred_region
      _
    $region21: #{tpu_custom_call.1} parent=1 // pred_fallthru
      _
    // Predicated region
    $region22: #{tpu_custom_call.1} parent=1 // pred_check
      _
    $region23: #{tpu_custom_call.1} parent=1 // pred_check_branch
      %26 = sbr.rel (0) target = $region25
    $region24: #{tpu_custom_call.1} parent=1 // pred_region
      _
    $region25: #{tpu_custom_call.1} parent=1 // pred_fallthru
      _
    // Predicated region
    $region26: #{tpu_custom_call.1} parent=1 // pred_check
      _
    $region27: #{tpu_custom_call.1} parent=1 // pred_check_branch
      %28 = sbr.rel (0) target = $region29
    $region28: #{tpu_custom_call.1} parent=1 // pred_region
      _
    $region29: #{tpu_custom_call.1} parent=1 // pred_fallthru
      _
    // Predicated region
    $region30: #{tpu_custom_call.1} parent=1 // pred_check
      _
    $region31: #{tpu_custom_call.1} parent=1 // pred_check_branch
      %30 = sbr.rel (0) target = $region33
    $region32: #{tpu_custom_call.1} parent=1 // pred_region
      _
    $region33: #{tpu_custom_call.1} parent=1 // pred_fallthru
      _
    // Predicated region
    $region34: #{tpu_custom_call.1} parent=1 // pred_check
      _
    $region35: #{tpu_custom_call.1} parent=1 // pred_check_branch
      %32 = sbr.rel (0) target = $region37
    $region36: #{tpu_custom_call.1} parent=1 // pred_region
      _
    $region37: #{tpu_custom_call.1} parent=1 // pred_fallthru
      _
    %v33 = vld [vmem:[%s0] sm:$0xf]
    %35 = vrot.lane.b32.xlu0 %v33, 120
    %v36 = vpop.permute.xlu0 %35
    %38 = vrot.lane.b32.xlu0 %v33, 112
    %v39 = vpop.permute.xlu0 %38
    %41 = vrot.lane.b32.xlu0 %v33, 104
    %v42 = vpop.permute.xlu0 %41
    %44 = vrot.lane.b32.xlu0 %v33, 96
    %v45 = vpop.permute.xlu0 %44
    %47 = vrot.lane.b32.xlu0 %v33, 88
    %v48 = vpop.permute.xlu0 %47
    %50 = vrot.lane.b32.xlu0 %v33, 80
    %v51 = vpop.permute.xlu0 %50
    %53 = vrot.lane.b32.xlu0 %v33, 72
    %v54 = vpop.permute.xlu0 %53
    %56 = vrot.lane.b32.xlu0 %v33, 64
    %v57 = vpop.permute.xlu0 %56
    %59 = vrot.lane.b32.xlu0 %v33, 56
    %v60 = vpop.permute.xlu0 %59
    %62 = vrot.lane.b32.xlu0 %v33, 48
    %v63 = vpop.permute.xlu0 %62
    %65 = vrot.lane.b32.xlu0 %v33, 40
    %v66 = vpop.permute.xlu0 %65
    %68 = vrot.lane.b32.xlu0 %v33, 32
    %v69 = vpop.permute.xlu0 %68
    %71 = vrot.lane.b32.xlu0 %v33, 24
    %v72 = vpop.permute.xlu0 %71
    %74 = vrot.lane.b32.xlu0 %v33, 16
    %v75 = vpop.permute.xlu0 %74
    %77 = vrot.lane.b32.xlu0 %v33, 8
    %v78 = vpop.permute.xlu0 %77
    %v80 = vcombine.low %v33, %v39
    %v82 = vunpack.c.l.s4 1983009808
    %v83 = vunpack.c.0.s8 %v82
    %v84 = vlaneseq
    %v85 = vshrl.u32 %v84, 7
    %v86 = vsub.s32 %v83, %v85
    %v87 = vrot.slane %v80, %v86
    %v88 = vcombine.low %v36, %v42
    %v90 = vunpack.c.l.s4 1983009808
    %v91 = vunpack.c.0.s8 %v90
    %v92 = vlaneseq
    %v93 = vshrl.u32 %v92, 7
    %v94 = vsub.s32 %v91, %v93
    %v95 = vrot.slane %v88, %v94
    %v96 = vcombine.low %v45, %v51
    %v98 = vunpack.c.l.s4 1983009808
    %v99 = vunpack.c.0.s8 %v98
    %v100 = vlaneseq
    %v101 = vshrl.u32 %v100, 7
    %v102 = vsub.s32 %v99, %v101
    %v103 = vrot.slane %v96, %v102
    %v104 = vcombine.low %v48, %v54
    %v106 = vunpack.c.l.s4 1983009808
    %v107 = vunpack.c.0.s8 %v106
    %v108 = vlaneseq
    %v109 = vshrl.u32 %v108, 7
    %v110 = vsub.s32 %v107, %v109
    %v111 = vrot.slane %v104, %v110
    %v112 = vcombine.low %v87, %v95
    %v113 = vcombine.high %v87, %v95
    %v115 = vunpack.c.l.s4 1934713408
    %v116 = vunpack.c.0.s8 %v115
    %v117 = vlaneseq
    %v118 = vshrl.u32 %v117, 7
    %v119 = vsub.s32 %v116, %v118
    %v120 = vrot.slane %v112, %v119
    %v122 = vunpack.c.l.s4 1934713408
    %v123 = vunpack.c.0.s8 %v122
    %v124 = vlaneseq
    %v125 = vshrl.u32 %v124, 7
    %v126 = vsub.s32 %v123, %v125
    %v127 = vrot.slane %v113, %v126
    %v128 = vcombine.low %v103, %v111
    %v129 = vcombine.high %v103, %v111
    %v131 = vunpack.c.l.s4 1934713408
    %v132 = vunpack.c.0.s8 %v131
    %v133 = vlaneseq
    %v134 = vshrl.u32 %v133, 7
    %v135 = vsub.s32 %v132, %v134
    %v136 = vrot.slane %v128, %v135
    %v138 = vunpack.c.l.s4 1934713408
    %v139 = vunpack.c.0.s8 %v138
    %v140 = vlaneseq
    %v141 = vshrl.u32 %v140, 7
    %v142 = vsub.s32 %v139, %v141
    %v143 = vrot.slane %v129, %v142
    %v144 = vcombine.low %v120, %v136
    %v145 = vcombine.high %v120, %v136
    %v146 = vcombine.low %v127, %v143
    %v147 = vcombine.high %v127, %v143
    %v148 = vcombine.low %v57, %v63
    %v150 = vunpack.c.l.s4 1983009808
    %v151 = vunpack.c.0.s8 %v150
    %v152 = vlaneseq
    %v153 = vshrl.u32 %v152, 7
    %v154 = vsub.s32 %v151, %v153
    %v155 = vrot.slane %v148, %v154
    %v156 = vcombine.low %v60, %v66
    %v158 = vunpack.c.l.s4 1983009808
    %v159 = vunpack.c.0.s8 %v158
    %v160 = vlaneseq
    %v161 = vshrl.u32 %v160, 7
    %v162 = vsub.s32 %v159, %v161
    %v163 = vrot.slane %v156, %v162
    %v164 = vcombine.low %v69, %v75
    %v166 = vunpack.c.l.s4 1983009808
    %v167 = vunpack.c.0.s8 %v166
    %v168 = vlaneseq
    %v169 = vshrl.u32 %v168, 7
    %v170 = vsub.s32 %v167, %v169
    %v171 = vrot.slane %v164, %v170
    %v172 = vcombine.low %v72, %v78
    %v174 = vunpack.c.l.s4 1983009808
    %v175 = vunpack.c.0.s8 %v174
    %v176 = vlaneseq
    %v177 = vshrl.u32 %v176, 7
    %v178 = vsub.s32 %v175, %v177
    %v179 = vrot.slane %v172, %v178
    %v180 = vcombine.low %v155, %v163
    %v181 = vcombine.high %v155, %v163
    %v183 = vunpack.c.l.s4 1934713408
    %v184 = vunpack.c.0.s8 %v183
    %v185 = vlaneseq
    %v186 = vshrl.u32 %v185, 7
    %v187 = vsub.s32 %v184, %v186
    %v188 = vrot.slane %v180, %v187
    %v190 = vunpack.c.l.s4 1934713408
    %v191 = vunpack.c.0.s8 %v190
    %v192 = vlaneseq
    %v193 = vshrl.u32 %v192, 7
    %v194 = vsub.s32 %v191, %v193
    %v195 = vrot.slane %v181, %v194
    %v196 = vcombine.low %v171, %v179
    %v197 = vcombine.high %v171, %v179
    %v199 = vunpack.c.l.s4 1934713408
    %v200 = vunpack.c.0.s8 %v199
    %v201 = vlaneseq
    %v202 = vshrl.u32 %v201, 7
    %v203 = vsub.s32 %v200, %v202
    %v204 = vrot.slane %v196, %v203
    %v206 = vunpack.c.l.s4 1934713408
    %v207 = vunpack.c.0.s8 %v206
    %v208 = vlaneseq
    %v209 = vshrl.u32 %v208, 7
    %v210 = vsub.s32 %v207, %v209
    %v211 = vrot.slane %v197, %v210
    %v212 = vcombine.low %v188, %v204
    %v213 = vcombine.high %v188, %v204
    %v214 = vcombine.low %v195, %v211
    %v215 = vcombine.high %v195, %v211
    %216 = vxpose.xlu0.b32.start [1/16] %v144, 128
    %217 = vxpose.xlu0.b32.cont [2/16] %v212, 128
    %218 = vxpose.xlu0.b32.cont [3/16] 0.0, 128
    %219 = vxpose.xlu0.b32.cont [4/16] 0.0, 128
    %220 = vxpose.xlu0.b32.cont [5/16] 0.0, 128
    %221 = vxpose.xlu0.b32.cont [6/16] 0.0, 128
    %222 = vxpose.xlu0.b32.cont [7/16] 0.0, 128
    %223 = vxpose.xlu0.b32.cont [8/16] 0.0, 128
    %224 = vxpose.xlu0.b32.cont [9/16] 0.0, 128
    %225 = vxpose.xlu0.b32.cont [10/16] 0.0, 128
    %226 = vxpose.xlu0.b32.cont [11/16] 0.0, 128
    %227 = vxpose.xlu0.b32.cont [12/16] 0.0, 128
    %228 = vxpose.xlu0.b32.cont [13/16] 0.0, 128
    %229 = vxpose.xlu0.b32.cont [14/16] 0.0, 128
    %230 = vxpose.xlu0.b32.cont [15/16] 0.0, 128
    %231 = vxpose.xlu0.b32.end [16/16] 0.0, 128
    %v232 = vpop.trf.xlu0
    %v233 = vpop.trf.xlu0
    %v234 = vpop.trf.xlu0
    %v235 = vpop.trf.xlu0
    %v236 = vpop.trf.xlu0
    %v237 = vpop.trf.xlu0
    %v238 = vpop.trf.xlu0
    %v239 = vpop.trf.xlu0
    %v240 = vpop.trf.xlu0
    %v241 = vpop.trf.xlu0
    %v242 = vpop.trf.xlu0
    %v243 = vpop.trf.xlu0
    %v244 = vpop.trf.xlu0
    %v245 = vpop.trf.xlu0
    %v246 = vpop.trf.xlu0
    %v247 = vpop.trf.xlu0
    %248 = vxpose.xlu0.b32.start [1/16] %v145, 128
    %249 = vxpose.xlu0.b32.cont [2/16] %v213, 128
    %250 = vxpose.xlu0.b32.cont [3/16] 0.0, 128
    %251 = vxpose.xlu0.b32.cont [4/16] 0.0, 128
    %252 = vxpose.xlu0.b32.cont [5/16] 0.0, 128
    %253 = vxpose.xlu0.b32.cont [6/16] 0.0, 128
    %254 = vxpose.xlu0.b32.cont [7/16] 0.0, 128
    %255 = vxpose.xlu0.b32.cont [8/16] 0.0, 128
    %256 = vxpose.xlu0.b32.cont [9/16] 0.0, 128
    %257 = vxpose.xlu0.b32.cont [10/16] 0.0, 128
    %258 = vxpose.xlu0.b32.cont [11/16] 0.0, 128
    %259 = vxpose.xlu0.b32.cont [12/16] 0.0, 128
    %260 = vxpose.xlu0.b32.cont [13/16] 0.0, 128
    %261 = vxpose.xlu0.b32.cont [14/16] 0.0, 128
    %262 = vxpose.xlu0.b32.cont [15/16] 0.0, 128
    %263 = vxpose.xlu0.b32.end [16/16] 0.0, 128
    %v264 = vpop.trf.xlu0
    %v265 = vpop.trf.xlu0
    %v266 = vpop.trf.xlu0
    %v267 = vpop.trf.xlu0
    %v268 = vpop.trf.xlu0
    %v269 = vpop.trf.xlu0
    %v270 = vpop.trf.xlu0
    %v271 = vpop.trf.xlu0
    %v272 = vpop.trf.xlu0
    %v273 = vpop.trf.xlu0
    %v274 = vpop.trf.xlu0
    %v275 = vpop.trf.xlu0
    %v276 = vpop.trf.xlu0
    %v277 = vpop.trf.xlu0
    %v278 = vpop.trf.xlu0
    %v279 = vpop.trf.xlu0
    %280 = vxpose.xlu0.b32.start [1/16] %v146, 128
    %281 = vxpose.xlu0.b32.cont [2/16] %v214, 128
    %282 = vxpose.xlu0.b32.cont [3/16] 0.0, 128
    %283 = vxpose.xlu0.b32.cont [4/16] 0.0, 128
    %284 = vxpose.xlu0.b32.cont [5/16] 0.0, 128
    %285 = vxpose.xlu0.b32.cont [6/16] 0.0, 128
    %286 = vxpose.xlu0.b32.cont [7/16] 0.0, 128
    %287 = vxpose.xlu0.b32.cont [8/16] 0.0, 128
    %288 = vxpose.xlu0.b32.cont [9/16] 0.0, 128
    %289 = vxpose.xlu0.b32.cont [10/16] 0.0, 128
    %290 = vxpose.xlu0.b32.cont [11/16] 0.0, 128
    %291 = vxpose.xlu0.b32.cont [12/16] 0.0, 128
    %292 = vxpose.xlu0.b32.cont [13/16] 0.0, 128
    %293 = vxpose.xlu0.b32.cont [14/16] 0.0, 128
    %294 = vxpose.xlu0.b32.cont [15/16] 0.0, 128
    %295 = vxpose.xlu0.b32.end [16/16] 0.0, 128
    %v296 = vpop.trf.xlu0
    %v297 = vpop.trf.xlu0
    %v298 = vpop.trf.xlu0
    %v299 = vpop.trf.xlu0
    %v300 = vpop.trf.xlu0
    %v301 = vpop.trf.xlu0
    %v302 = vpop.trf.xlu0
    %v303 = vpop.trf.xlu0
    %v304 = vpop.trf.xlu0
    %v305 = vpop.trf.xlu0
    %v306 = vpop.trf.xlu0
    %v307 = vpop.trf.xlu0
    %v308 = vpop.trf.xlu0
    %v309 = vpop.trf.xlu0
    %v310 = vpop.trf.xlu0
    %v311 = vpop.trf.xlu0
    %312 = vxpose.xlu0.b32.start [1/16] %v147, 128
    %313 = vxpose.xlu0.b32.cont [2/16] %v215, 128
    %314 = vxpose.xlu0.b32.cont [3/16] 0.0, 128
    %315 = vxpose.xlu0.b32.cont [4/16] 0.0, 128
    %316 = vxpose.xlu0.b32.cont [5/16] 0.0, 128
    %317 = vxpose.xlu0.b32.cont [6/16] 0.0, 128
    %318 = vxpose.xlu0.b32.cont [7/16] 0.0, 128
    %319 = vxpose.xlu0.b32.cont [8/16] 0.0, 128
    %320 = vxpose.xlu0.b32.cont [9/16] 0.0, 128
    %321 = vxpose.xlu0.b32.cont [10/16] 0.0, 128
    %322 = vxpose.xlu0.b32.cont [11/16] 0.0, 128
    %323 = vxpose.xlu0.b32.cont [12/16] 0.0, 128
    %324 = vxpose.xlu0.b32.cont [13/16] 0.0, 128
    %325 = vxpose.xlu0.b32.cont [14/16] 0.0, 128
    %326 = vxpose.xlu0.b32.cont [15/16] 0.0, 128
    %327 = vxpose.xlu0.b32.end [16/16] 0.0, 128
    %v328 = vpop.trf.xlu0
    %v329 = vpop.trf.xlu0
    %v330 = vpop.trf.xlu0
    %v331 = vpop.trf.xlu0
    %v332 = vpop.trf.xlu0
    %v333 = vpop.trf.xlu0
    %v334 = vpop.trf.xlu0
    %v335 = vpop.trf.xlu0
    %v336 = vpop.trf.xlu0
    %v337 = vpop.trf.xlu0
    %v338 = vpop.trf.xlu0
    %v339 = vpop.trf.xlu0
    %v340 = vpop.trf.xlu0
    %v341 = vpop.trf.xlu0
    %v342 = vpop.trf.xlu0
    %v343 = vpop.trf.xlu0
    %v344 = vld [vmem:[%s1] sm:$0xff]
    %v345 = vld [vmem:[%s1 + $0x8] sm:$0xff]
    %vm346 = vcmask 130048
    %v348 = vsel %vm346, %v232, 0
    %v351 = vsel %vm346, %v264, 0
    %v354 = vsel %vm346, %v296, 0
    %v357 = vsel %vm346, %v328, 0
    %359 = vmatprep.subr.mxu0 0.0
    %360 = vmatpush1.msra.mxu0 %v344
    %361 = vmatprep.subr.mxu0 0.0
    %362 = vmatpush1.msra.mxu0 %v345
    %363 = vmatprep.subr.mxu0 0.0
    %364 = vmatpush1.msra.mxu0 0.0
    %365 = vmatprep.subr.mxu0 0.0
    %366 = vmatpush1.msra.mxu0 0.0
    %367 = vmatprep.subr.mxu0 0.0
    %368 = vmatpush1.msra.mxu0 0.0
    %369 = vmatprep.subr.mxu0 0.0
    %370 = vmatpush1.msra.mxu0 0.0
    %371 = vmatprep.subr.mxu0 0.0
    %372 = vmatpush1.msra.mxu0 0.0
    %373 = vmatprep.subr.mxu0 0.0
    %374 = vmatpush1.msra.mxu0 0.0
    %375 = vmatprep.subr.mxu0 0.0
    %376 = vmatpush1.msra.mxu0 0.0
    %377 = vmatprep.subr.mxu0 0.0
    %378 = vmatpush1.msra.mxu0 0.0
    %379 = vmatprep.subr.mxu0 0.0
    %380 = vmatpush1.msra.mxu0 0.0
    %381 = vmatprep.subr.mxu0 0.0
    %382 = vmatpush1.msra.mxu0 0.0
    %383 = vmatprep.subr.mxu0 0.0
    %384 = vmatpush1.msra.mxu0 0.0
    %385 = vmatprep.subr.mxu0 0.0
    %386 = vmatpush1.msra.mxu0 0.0
    %387 = vmatprep.subr.mxu0 0.0
    %388 = vmatpush1.msra.mxu0 0.0
    %389 = vmatprep.subr.mxu0 0.0
    %390 = vmatpush1.msra.mxu0 0.0
    %391 = vmatprep.subr.mxu0 0.0
    %392 = vmatpush1.msra.mxu0 0.0
    %393 = vmatprep.subr.mxu0 0.0
    %394 = vmatpush1.msra.mxu0 0.0
    %395 = vmatprep.subr.mxu0 0.0
    %396 = vmatpush1.msra.mxu0 0.0
    %397 = vmatprep.subr.mxu0 0.0
    %398 = vmatpush1.msra.mxu0 0.0
    %399 = vmatprep.subr.mxu0 0.0
    %400 = vmatpush1.msra.mxu0 0.0
    %401 = vmatprep.subr.mxu0 0.0
    %402 = vmatpush1.msra.mxu0 0.0
    %403 = vmatprep.subr.mxu0 0.0
    %404 = vmatpush1.msra.mxu0 0.0
    %405 = vmatprep.subr.mxu0 0.0
    %406 = vmatpush1.msra.mxu0 0.0
    %407 = vmatprep.subr.mxu0 0.0
    %408 = vmatpush1.msra.mxu0 0.0
    %409 = vmatprep.subr.mxu0 0.0
    %410 = vmatpush1.msra.mxu0 0.0
    %411 = vmatprep.subr.mxu0 0.0
    %412 = vmatpush1.msra.mxu0 0.0
    %413 = vmatprep.subr.mxu0 0.0
    %414 = vmatpush1.msra.mxu0 0.0
    %415 = vmatprep.subr.mxu0 0.0
    %416 = vmatpush1.msra.mxu0 0.0
    %417 = vmatprep.subr.mxu0 0.0
    %418 = vmatpush1.msra.mxu0 0.0
    %419 = vmatprep.subr.mxu0 0.0
    %420 = vmatpush1.msra.mxu0 0.0
    %421 = vmatprep.subr.mxu0 0.0
    %422 = vmatpush1.msra.mxu0 0.0
    %423 = vmatprep.mubr.f32.mxu0 0.0
    %424 = vmatmul.mubr.f32.gmra.mrb[0].mxu0 %v348
    %v425 = vpop.f32.mrb[0].mxu0
    %v426 = vadd.f32 0.0, %v425
    %v427 = vpop.f32.mrb[0].mxu0
    %428 = vmatprep.mubr.f32.mxu0 0.0
    %429 = vmatmul.mubr.f32.gmra.mrb[0].mxu0 %v351
    %v430 = vpop.f32.mrb[0].mxu0
    %v431 = vadd.f32 0.0, %v430
    %v432 = vpop.f32.mrb[0].mxu0
    %433 = vmatprep.mubr.f32.mxu0 0.0
    %434 = vmatmul.mubr.f32.gmra.mrb[0].mxu0 %v354
    %v435 = vpop.f32.mrb[0].mxu0
    %v436 = vadd.f32 0.0, %v435
    %v437 = vpop.f32.mrb[0].mxu0
    %438 = vmatprep.mubr.f32.mxu0 0.0
    %439 = vmatmul.mubr.f32.gmra.mrb[0].mxu0 %v357
    %v440 = vpop.f32.mrb[0].mxu0
    %v441 = vadd.f32 0.0, %v440
    %v442 = vpop.f32.mrb[0].mxu0
    %443 = vdwg.mxu0
    %vm444 = vcmask 261120
    %v445 = vsel %vm444, %v426, -inf
    %v446 = vrot.slane %v445, 4
    %v447 = vmax.f32 %v445, %v446
    %v448 = vrot.slane %v447, 2
    %v449 = vmax.f32 %v447, %v448
    %v450 = vrot.slane %v449, 1
    %v451 = vmax.f32 %v449, %v450
    %v452 = vsel %vm444, %v431, -inf
    %v453 = vrot.slane %v452, 4
    %v454 = vmax.f32 %v452, %v453
    %v455 = vrot.slane %v454, 2
    %v456 = vmax.f32 %v454, %v455
    %v457 = vrot.slane %v456, 1
    %v458 = vmax.f32 %v456, %v457
    %v459 = vsel %vm444, %v436, -inf
    %v460 = vrot.slane %v459, 4
    %v461 = vmax.f32 %v459, %v460
    %v462 = vrot.slane %v461, 2
    %v463 = vmax.f32 %v461, %v462
    %v464 = vrot.slane %v463, 1
    %v465 = vmax.f32 %v463, %v464
    %v466 = vsel %vm444, %v441, -inf
    %v467 = vrot.slane %v466, 4
    %v468 = vmax.f32 %v466, %v467
    %v469 = vrot.slane %v468, 2
    %v470 = vmax.f32 %v468, %v469
    %v471 = vrot.slane %v470, 1
    %v472 = vmax.f32 %v470, %v471
    %v473 = vsub.f32 %v426, %v451
    %v474 = vsub.f32 %v431, %v458
    %v475 = vsub.f32 %v436, %v465
    %v476 = vsub.f32 %v441, %v472
    %v477 = vmul.f32 %v473, 1.442695
    %v478 = vpow.pop %v477
    %v479 = vmul.f32 %v474, 1.442695
    %v480 = vpow.pop %v479
    %v481 = vmul.f32 %v475, 1.442695
    %v482 = vpow.pop %v481
    %v483 = vmul.f32 %v476, 1.442695
    %v484 = vpow.pop %v483
    %v485 = vsel %vm444, %v478, 0.0
    %v486 = vrot.slane %v485, 4
    %v487 = vadd.f32 %v485, %v486
    %v488 = vrot.slane %v487, 2
    %v489 = vadd.f32 %v487, %v488
    %v490 = vrot.slane %v489, 1
    %v491 = vadd.f32 %v489, %v490
    %v492 = vsel %vm444, %v480, 0.0
    %v493 = vrot.slane %v492, 4
    %v494 = vadd.f32 %v492, %v493
    %v495 = vrot.slane %v494, 2
    %v496 = vadd.f32 %v494, %v495
    %v497 = vrot.slane %v496, 1
    %v498 = vadd.f32 %v496, %v497
    %v499 = vsel %vm444, %v482, 0.0
    %v500 = vrot.slane %v499, 4
    %v501 = vadd.f32 %v499, %v500
    %v502 = vrot.slane %v501, 2
    %v503 = vadd.f32 %v501, %v502
    %v504 = vrot.slane %v503, 1
    %v505 = vadd.f32 %v503, %v504
    %v506 = vsel %vm444, %v484, 0.0
    %v507 = vrot.slane %v506, 4
    %v508 = vadd.f32 %v506, %v507
    %v509 = vrot.slane %v508, 2
    %v510 = vadd.f32 %v508, %v509
    %v511 = vrot.slane %v510, 1
    %v512 = vadd.f32 %v510, %v511
    %v513 = vrcp.pop %v491
    %v514 = vmul.f32 %v478, %v513
    %v515 = vrcp.pop %v498
    %v516 = vmul.f32 %v480, %v515
    %v517 = vrcp.pop %v505
    %v518 = vmul.f32 %v482, %v517
    %v519 = vrcp.pop %v512
    %v520 = vmul.f32 %v484, %v519
    %v521 = vld [vmem:[%s2] sm:$0xff]
    %v522 = vld [vmem:[%s2 + $0x8] sm:$0xff]
    %v523 = vld [vmem:[%s2 + $0x10] sm:$0xff]
    %v524 = vld [vmem:[%s2 + $0x18] sm:$0xff]
    %v526 = vsel %vm444, %v514, 0
    %v529 = vsel %vm444, %v516, 0
    %v532 = vsel %vm444, %v518, 0
    %v535 = vsel %vm444, %v520, 0
    %537 = vmatprep.subr.mxu0 0.0
    %538 = vmatpush1.msra.mxu0 %v521
    %539 = vmatprep.subr.mxu0 0.0
    %540 = vmatpush1.msra.mxu0 %v522
    %541 = vmatprep.subr.mxu0 0.0
    %542 = vmatpush1.msra.mxu0 %v523
    %543 = vmatprep.subr.mxu0 0.0
    %544 = vmatpush1.msra.mxu0 %v524
    %545 = vmatprep.subr.mxu0 0.0
    %546 = vmatpush1.msra.mxu0 0.0
    %547 = vmatprep.subr.mxu0 0.0
    %548 = vmatpush1.msra.mxu0 0.0
    %549 = vmatprep.subr.mxu0 0.0
    %550 = vmatpush1.msra.mxu0 0.0
    %551 = vmatprep.subr.mxu0 0.0
    %552 = vmatpush1.msra.mxu0 0.0
    %553 = vmatprep.subr.mxu0 0.0
    %554 = vmatpush1.msra.mxu0 0.0
    %555 = vmatprep.subr.mxu0 0.0
    %556 = vmatpush1.msra.mxu0 0.0
    %557 = vmatprep.subr.mxu0 0.0
    %558 = vmatpush1.msra.mxu0 0.0
    %559 = vmatprep.subr.mxu0 0.0
    %560 = vmatpush1.msra.mxu0 0.0
    %561 = vmatprep.subr.mxu0 0.0
    %562 = vmatpush1.msra.mxu0 0.0
    %563 = vmatprep.subr.mxu0 0.0
    %564 = vmatpush1.msra.mxu0 0.0
    %565 = vmatprep.subr.mxu0 0.0
    %566 = vmatpush1.msra.mxu0 0.0
    %567 = vmatprep.subr.mxu0 0.0
    %568 = vmatpush1.msra.mxu0 0.0
    %569 = vmatprep.subr.mxu0 0.0
    %570 = vmatpush1.msra.mxu0 0.0
    %571 = vmatprep.subr.mxu0 0.0
    %572 = vmatpush1.msra.mxu0 0.0
    %573 = vmatprep.subr.mxu0 0.0
    %574 = vmatpush1.msra.mxu0 0.0
    %575 = vmatprep.subr.mxu0 0.0
    %576 = vmatpush1.msra.mxu0 0.0
    %577 = vmatprep.subr.mxu0 0.0
    %578 = vmatpush1.msra.mxu0 0.0
    %579 = vmatprep.subr.mxu0 0.0
    %580 = vmatpush1.msra.mxu0 0.0
    %581 = vmatprep.subr.mxu0 0.0
    %582 = vmatpush1.msra.mxu0 0.0
    %583 = vmatprep.subr.mxu0 0.0
    %584 = vmatpush1.msra.mxu0 0.0
    %585 = vmatprep.subr.mxu0 0.0
    %586 = vmatpush1.msra.mxu0 0.0
    %587 = vmatprep.subr.mxu0 0.0
    %588 = vmatpush1.msra.mxu0 0.0
    %589 = vmatprep.subr.mxu0 0.0
    %590 = vmatpush1.msra.mxu0 0.0
    %591 = vmatprep.subr.mxu0 0.0
    %592 = vmatpush1.msra.mxu0 0.0
    %593 = vmatprep.subr.mxu0 0.0
    %594 = vmatpush1.msra.mxu0 0.0
    %595 = vmatprep.subr.mxu0 0.0
    %596 = vmatpush1.msra.mxu0 0.0
    %597 = vmatprep.subr.mxu0 0.0
    %598 = vmatpush1.msra.mxu0 0.0
    %599 = vmatprep.subr.mxu0 0.0
    %600 = vmatpush1.msra.mxu0 0.0
    %601 = vmatprep.mubr.f32.mxu0 0.0
    %602 = vmatmul.mubr.f32.gmra.mrb[0].mxu0 %v526
    %v603 = vpop.f32.mrb[0].mxu0
    %v604 = vadd.f32 0.0, %v603
    %v605 = vpop.f32.mrb[0].mxu0
    %606 = vmatprep.mubr.f32.mxu0 0.0
    %607 = vmatmul.mubr.f32.gmra.mrb[0].mxu0 %v529
    %v608 = vpop.f32.mrb[0].mxu0
    %v609 = vadd.f32 0.0, %v608
    %v610 = vpop.f32.mrb[0].mxu0
    %611 = vmatprep.mubr.f32.mxu0 0.0
    %612 = vmatmul.mubr.f32.gmra.mrb[0].mxu0 %v532
    %v613 = vpop.f32.mrb[0].mxu0
    %v614 = vadd.f32 0.0, %v613
    %v615 = vpop.f32.mrb[0].mxu0
    %616 = vmatprep.mubr.f32.mxu0 0.0
    %617 = vmatmul.mubr.f32.gmra.mrb[0].mxu0 %v535
    %v618 = vpop.f32.mrb[0].mxu0
    %v619 = vadd.f32 0.0, %v618
    %v620 = vpop.f32.mrb[0].mxu0
    %621 = vdwg.mxu0
    %v622 = vadd.f32 %v232, %v604
    %v623 = vadd.f32 %v264, %v609
    %v624 = vadd.f32 %v296, %v614
    %v625 = vadd.f32 %v328, %v619
    %v626 = vld [vmem:[%s5] sm:$0x1]
    %v627 = vld [vmem:[%s6] sm:$0x1]
    %v628 = vsel %vm346, %v622, 0.0
    %629 = vadd.xlane.f32.xlu0 %v628
    %v630 = vpop.xlane.xlu0 %629
    %v631 = vsel %vm346, %v623, 0.0
    %632 = vadd.xlane.f32.xlu0 %v631
    %v633 = vpop.xlane.xlu0 %632
    %v634 = vsel %vm346, %v624, 0.0
    %635 = vadd.xlane.f32.xlu0 %v634
    %v636 = vpop.xlane.xlu0 %635
    %v637 = vsel %vm346, %v625, 0.0
    %638 = vadd.xlane.f32.xlu0 %v637
    %v639 = vpop.xlane.xlu0 %638
    %v640 = vrcp.pop 16.0
    %v641 = vmul.f32 %v630, %v640
    %v642 = vmul.f32 %v633, %v640
    %v643 = vmul.f32 %v636, %v640
    %v644 = vmul.f32 %v639, %v640
    %v645 = vsub.f32 %v622, %v641
    %v646 = vsub.f32 %v623, %v642
    %v647 = vsub.f32 %v624, %v643
    %v648 = vsub.f32 %v625, %v644
    %v649 = vmul.f32 %v645, %v645
    %v650 = vmul.f32 %v646, %v646
    %v651 = vmul.f32 %v647, %v647
    %v652 = vmul.f32 %v648, %v648
    %v653 = vsel %vm346, %v649, 0.0
    %654 = vadd.xlane.f32.xlu0 %v653
    %v655 = vpop.xlane.xlu0 %654
    %v656 = vsel %vm346, %v650, 0.0
    %657 = vadd.xlane.f32.xlu0 %v656
    %v658 = vpop.xlane.xlu0 %657
    %v659 = vsel %vm346, %v651, 0.0
    %660 = vadd.xlane.f32.xlu0 %v659
    %v661 = vpop.xlane.xlu0 %660
    %v662 = vsel %vm346, %v652, 0.0
    %663 = vadd.xlane.f32.xlu0 %v662
    %v664 = vpop.xlane.xlu0 %663
    %v665 = vmul.f32 %v655, %v640
    %v666 = vmul.f32 %v658, %v640
    %v667 = vmul.f32 %v661, %v640
    %v668 = vmul.f32 %v664, %v640
    %v669 = vadd.f32 %v665, 1e-05
    %v670 = vadd.f32 %v666, 1e-05
    %v671 = vadd.f32 %v667, 1e-05
    %v672 = vadd.f32 %v668, 1e-05
    %v673 = vrsqrt.pop %v669
    %v674 = vrsqrt.pop %v670
    %v675 = vrsqrt.pop %v671
    %v676 = vrsqrt.pop %v672
    %v677 = vmul.f32 %v645, %v673
    %v678 = vmul.f32 %v646, %v674
    %v679 = vmul.f32 %v647, %v675
    %v680 = vmul.f32 %v648, %v676
    %v682 = vlaneseq
    %v683 = vshrl.u32 %v682, 7
    %v684 = vsub.s32 0, %v683
    %v685 = vrot.slane %v626, %v684
    %v687 = vmul.f32 %v677, %v685
    %v688 = vmul.f32 %v678, %v685
    %v689 = vmul.f32 %v679, %v685
    %v690 = vmul.f32 %v680, %v685
    %v692 = vlaneseq
    %v693 = vshrl.u32 %v692, 7
    %v694 = vsub.s32 0, %v693
    %v695 = vrot.slane %v627, %v694
    %v697 = vadd.f32 %v687, %v695
    %v698 = vadd.f32 %v688, %v695
    %v699 = vadd.f32 %v689, %v695
    %v700 = vadd.f32 %v690, %v695
    %v701 = vld [vmem:[%s3] sm:$0xff]
    %v702 = vld [vmem:[%s3 + $0x8] sm:$0xff]
    %v703 = vld [vmem:[%s4] sm:$0x1]
    %v705 = vlaneseq
    %v706 = vshrl.u32 %v705, 7
    %v707 = vsub.s32 0, %v706
    %v708 = vrot.slane %v703, %v707
    %v711 = vsel %vm346, %v697, 0
    %v714 = vsel %vm346, %v698, 0
    %v717 = vsel %vm346, %v699, 0
    %v720 = vsel %vm346, %v700, 0
    %722 = vmatprep.subr.mxu0 0.0
    %723 = vmatpush1.msra.mxu0 %v701
    %724 = vmatprep.subr.mxu0 0.0
    %725 = vmatpush1.msra.mxu0 %v702
    %726 = vmatprep.subr.mxu0 0.0
    %727 = vmatpush1.msra.mxu0 0.0
    %728 = vmatprep.subr.mxu0 0.0
    %729 = vmatpush1.msra.mxu0 0.0
    %730 = vmatprep.subr.mxu0 0.0
    %731 = vmatpush1.msra.mxu0 0.0
    %732 = vmatprep.subr.mxu0 0.0
    %733 = vmatpush1.msra.mxu0 0.0
    %734 = vmatprep.subr.mxu0 0.0
    %735 = vmatpush1.msra.mxu0 0.0
    %736 = vmatprep.subr.mxu0 0.0
    %737 = vmatpush1.msra.mxu0 0.0
    %738 = vmatprep.subr.mxu0 0.0
    %739 = vmatpush1.msra.mxu0 0.0
    %740 = vmatprep.subr.mxu0 0.0
    %741 = vmatpush1.msra.mxu0 0.0
    %742 = vmatprep.subr.mxu0 0.0
    %743 = vmatpush1.msra.mxu0 0.0
    %744 = vmatprep.subr.mxu0 0.0
    %745 = vmatpush1.msra.mxu0 0.0
    %746 = vmatprep.subr.mxu0 0.0
    %747 = vmatpush1.msra.mxu0 0.0
    %748 = vmatprep.subr.mxu0 0.0
    %749 = vmatpush1.msra.mxu0 0.0
    %750 = vmatprep.subr.mxu0 0.0
    %751 = vmatpush1.msra.mxu0 0.0
    %752 = vmatprep.subr.mxu0 0.0
    %753 = vmatpush1.msra.mxu0 0.0
    %754 = vmatprep.subr.mxu0 0.0
    %755 = vmatpush1.msra.mxu0 0.0
    %756 = vmatprep.subr.mxu0 0.0
    %757 = vmatpush1.msra.mxu0 0.0
    %758 = vmatprep.subr.mxu0 0.0
    %759 = vmatpush1.msra.mxu0 0.0
    %760 = vmatprep.subr.mxu0 0.0
    %761 = vmatpush1.msra.mxu0 0.0
    %762 = vmatprep.subr.mxu0 0.0
    %763 = vmatpush1.msra.mxu0 0.0
    %764 = vmatprep.subr.mxu0 0.0
    %765 = vmatpush1.msra.mxu0 0.0
    %766 = vmatprep.subr.mxu0 0.0
    %767 = vmatpush1.msra.mxu0 0.0
    %768 = vmatprep.subr.mxu0 0.0
    %769 = vmatpush1.msra.mxu0 0.0
    %770 = vmatprep.subr.mxu0 0.0
    %771 = vmatpush1.msra.mxu0 0.0
    %772 = vmatprep.subr.mxu0 0.0
    %773 = vmatpush1.msra.mxu0 0.0
    %774 = vmatprep.subr.mxu0 0.0
    %775 = vmatpush1.msra.mxu0 0.0
    %776 = vmatprep.subr.mxu0 0.0
    %777 = vmatpush1.msra.mxu0 0.0
    %778 = vmatprep.subr.mxu0 0.0
    %779 = vmatpush1.msra.mxu0 0.0
    %780 = vmatprep.subr.mxu0 0.0
    %781 = vmatpush1.msra.mxu0 0.0
    %782 = vmatprep.subr.mxu0 0.0
    %783 = vmatpush1.msra.mxu0 0.0
    %784 = vmatprep.subr.mxu0 0.0
    %785 = vmatpush1.msra.mxu0 0.0
    %786 = vmatprep.mubr.f32.mxu0 0.0
    %787 = vmatmul.mubr.f32.gmra.mrb[0].mxu0 %v711
    %v788 = vpop.f32.mrb[0].mxu0
    %v789 = vadd.f32 %v708, %v788
    %v790 = vpop.f32.mrb[0].mxu0
    %791 = vmatprep.mubr.f32.mxu0 0.0
    %792 = vmatmul.mubr.f32.gmra.mrb[0].mxu0 %v714
    %v793 = vpop.f32.mrb[0].mxu0
    %v794 = vadd.f32 %v708, %v793
    %v795 = vpop.f32.mrb[0].mxu0
    %796 = vmatprep.mubr.f32.mxu0 0.0
    %797 = vmatmul.mubr.f32.gmra.mrb[0].mxu0 %v717
    %v798 = vpop.f32.mrb[0].mxu0
    %v799 = vadd.f32 %v708, %v798
    %v800 = vpop.f32.mrb[0].mxu0
    %801 = vmatprep.mubr.f32.mxu0 0.0
    %802 = vmatmul.mubr.f32.gmra.mrb[0].mxu0 %v720
    %v803 = vpop.f32.mrb[0].mxu0
    %v804 = vadd.f32 %v708, %v803
    %v805 = vpop.f32.mrb[0].mxu0
    %806 = vdwg.mxu0
    %v807 = vadd.f32 %v697, %v789
    %v808 = vadd.f32 %v698, %v794
    %v809 = vadd.f32 %v699, %v799
    %v810 = vadd.f32 %v700, %v804
    %v811 = vld [vmem:[%s7] sm:$0x1]
    %v812 = vld [vmem:[%s8] sm:$0x1]
    %v813 = vsel %vm346, %v807, 0.0
    %814 = vadd.xlane.f32.xlu0 %v813
    %v815 = vpop.xlane.xlu0 %814
    %v816 = vsel %vm346, %v808, 0.0
    %817 = vadd.xlane.f32.xlu0 %v816
    %v818 = vpop.xlane.xlu0 %817
    %v819 = vsel %vm346, %v809, 0.0
    %820 = vadd.xlane.f32.xlu0 %v819
    %v821 = vpop.xlane.xlu0 %820
    %v822 = vsel %vm346, %v810, 0.0
    %823 = vadd.xlane.f32.xlu0 %v822
    %v824 = vpop.xlane.xlu0 %823
    %v825 = vmul.f32 %v815, %v640
    %v826 = vmul.f32 %v818, %v640
    %v827 = vmul.f32 %v821, %v640
    %v828 = vmul.f32 %v824, %v640
    %v829 = vsub.f32 %v807, %v825
    %v830 = vsub.f32 %v808, %v826
    %v831 = vsub.f32 %v809, %v827
    %v832 = vsub.f32 %v810, %v828
    %v833 = vmul.f32 %v829, %v829
    %v834 = vmul.f32 %v830, %v830
    %v835 = vmul.f32 %v831, %v831
    %v836 = vmul.f32 %v832, %v832
    %v837 = vsel %vm346, %v833, 0.0
    %838 = vadd.xlane.f32.xlu0 %v837
    %v839 = vpop.xlane.xlu0 %838
    %v840 = vsel %vm346, %v834, 0.0
    %841 = vadd.xlane.f32.xlu0 %v840
    %v842 = vpop.xlane.xlu0 %841
    %v843 = vsel %vm346, %v835, 0.0
    %844 = vadd.xlane.f32.xlu0 %v843
    %v845 = vpop.xlane.xlu0 %844
    %v846 = vsel %vm346, %v836, 0.0
    %847 = vadd.xlane.f32.xlu0 %v846
    %v848 = vpop.xlane.xlu0 %847
    %v849 = vmul.f32 %v839, %v640
    %v850 = vmul.f32 %v842, %v640
    %v851 = vmul.f32 %v845, %v640
    %v852 = vmul.f32 %v848, %v640
    %v853 = vadd.f32 %v849, 1e-05
    %v854 = vadd.f32 %v850, 1e-05
    %v855 = vadd.f32 %v851, 1e-05
    %v856 = vadd.f32 %v852, 1e-05
    %v857 = vrsqrt.pop %v853
    %v858 = vrsqrt.pop %v854
    %v859 = vrsqrt.pop %v855
    %v860 = vrsqrt.pop %v856
    %v861 = vmul.f32 %v829, %v857
    %v862 = vmul.f32 %v830, %v858
    %v863 = vmul.f32 %v831, %v859
    %v864 = vmul.f32 %v832, %v860
    %v866 = vlaneseq
    %v867 = vshrl.u32 %v866, 7
    %v868 = vsub.s32 0, %v867
    %v869 = vrot.slane %v811, %v868
    %v871 = vmul.f32 %v861, %v869
    %v872 = vmul.f32 %v862, %v869
    %v873 = vmul.f32 %v863, %v869
    %v874 = vmul.f32 %v864, %v869
    %v876 = vlaneseq
    %v877 = vshrl.u32 %v876, 7
    %v878 = vsub.s32 0, %v877
    %v879 = vrot.slane %v812, %v878
    %v881 = vadd.f32 %v871, %v879
    %v882 = vadd.f32 %v872, %v879
    %v883 = vadd.f32 %v873, %v879
    %v884 = vadd.f32 %v874, %v879
    %885 = vxpose.xlu0.b32.start [1/16] %v881, 128
    %886 = vxpose.xlu0.b32.cont [2/16] 0.0, 128
    %887 = vxpose.xlu0.b32.cont [3/16] 0.0, 128
    %888 = vxpose.xlu0.b32.cont [4/16] 0.0, 128
    %889 = vxpose.xlu0.b32.cont [5/16] 0.0, 128
    %890 = vxpose.xlu0.b32.cont [6/16] 0.0, 128
    %891 = vxpose.xlu0.b32.cont [7/16] 0.0, 128
    %892 = vxpose.xlu0.b32.cont [8/16] 0.0, 128
    %893 = vxpose.xlu0.b32.cont [9/16] 0.0, 128
    %894 = vxpose.xlu0.b32.cont [10/16] 0.0, 128
    %895 = vxpose.xlu0.b32.cont [11/16] 0.0, 128
    %896 = vxpose.xlu0.b32.cont [12/16] 0.0, 128
    %897 = vxpose.xlu0.b32.cont [13/16] 0.0, 128
    %898 = vxpose.xlu0.b32.cont [14/16] 0.0, 128
    %899 = vxpose.xlu0.b32.cont [15/16] 0.0, 128
    %900 = vxpose.xlu0.b32.end [16/16] 0.0, 128
    %v901 = vpop.trf.xlu0
    %v902 = vpop.trf.xlu0
    %v903 = vpop.trf.xlu0
    %v904 = vpop.trf.xlu0
    %v905 = vpop.trf.xlu0
    %v906 = vpop.trf.xlu0
    %v907 = vpop.trf.xlu0
    %v908 = vpop.trf.xlu0
    %v909 = vpop.trf.xlu0
    %v910 = vpop.trf.xlu0
    %v911 = vpop.trf.xlu0
    %v912 = vpop.trf.xlu0
    %v913 = vpop.trf.xlu0
    %v914 = vpop.trf.xlu0
    %v915 = vpop.trf.xlu0
    %v916 = vpop.trf.xlu0
    %917 = vxpose.xlu0.b32.start [1/16] %v882, 128
    %918 = vxpose.xlu0.b32.cont [2/16] 0.0, 128
    %919 = vxpose.xlu0.b32.cont [3/16] 0.0, 128
    %920 = vxpose.xlu0.b32.cont [4/16] 0.0, 128
    %921 = vxpose.xlu0.b32.cont [5/16] 0.0, 128
    %922 = vxpose.xlu0.b32.cont [6/16] 0.0, 128
    %923 = vxpose.xlu0.b32.cont [7/16] 0.0, 128
    %924 = vxpose.xlu0.b32.cont [8/16] 0.0, 128
    %925 = vxpose.xlu0.b32.cont [9/16] 0.0, 128
    %926 = vxpose.xlu0.b32.cont [10/16] 0.0, 128
    %927 = vxpose.xlu0.b32.cont [11/16] 0.0, 128
    %928 = vxpose.xlu0.b32.cont [12/16] 0.0, 128
    %929 = vxpose.xlu0.b32.cont [13/16] 0.0, 128
    %930 = vxpose.xlu0.b32.cont [14/16] 0.0, 128
    %931 = vxpose.xlu0.b32.cont [15/16] 0.0, 128
    %932 = vxpose.xlu0.b32.end [16/16] 0.0, 128
    %v933 = vpop.trf.xlu0
    %v934 = vpop.trf.xlu0
    %v935 = vpop.trf.xlu0
    %v936 = vpop.trf.xlu0
    %v937 = vpop.trf.xlu0
    %v938 = vpop.trf.xlu0
    %v939 = vpop.trf.xlu0
    %v940 = vpop.trf.xlu0
    %v941 = vpop.trf.xlu0
    %v942 = vpop.trf.xlu0
    %v943 = vpop.trf.xlu0
    %v944 = vpop.trf.xlu0
    %v945 = vpop.trf.xlu0
    %v946 = vpop.trf.xlu0
    %v947 = vpop.trf.xlu0
    %v948 = vpop.trf.xlu0
    %949 = vxpose.xlu0.b32.start [1/16] %v883, 128
    %950 = vxpose.xlu0.b32.cont [2/16] 0.0, 128
    %951 = vxpose.xlu0.b32.cont [3/16] 0.0, 128
    %952 = vxpose.xlu0.b32.cont [4/16] 0.0, 128
    %953 = vxpose.xlu0.b32.cont [5/16] 0.0, 128
    %954 = vxpose.xlu0.b32.cont [6/16] 0.0, 128
    %955 = vxpose.xlu0.b32.cont [7/16] 0.0, 128
    %956 = vxpose.xlu0.b32.cont [8/16] 0.0, 128
    %957 = vxpose.xlu0.b32.cont [9/16] 0.0, 128
    %958 = vxpose.xlu0.b32.cont [10/16] 0.0, 128
    %959 = vxpose.xlu0.b32.cont [11/16] 0.0, 128
    %960 = vxpose.xlu0.b32.cont [12/16] 0.0, 128
    %961 = vxpose.xlu0.b32.cont [13/16] 0.0, 128
    %962 = vxpose.xlu0.b32.cont [14/16] 0.0, 128
    %963 = vxpose.xlu0.b32.cont [15/16] 0.0, 128
    %964 = vxpose.xlu0.b32.end [16/16] 0.0, 128
    %v965 = vpop.trf.xlu0
    %v966 = vpop.trf.xlu0
    %v967 = vpop.trf.xlu0
    %v968 = vpop.trf.xlu0
    %v969 = vpop.trf.xlu0
    %v970 = vpop.trf.xlu0
    %v971 = vpop.trf.xlu0
    %v972 = vpop.trf.xlu0
    %v973 = vpop.trf.xlu0
    %v974 = vpop.trf.xlu0
    %v975 = vpop.trf.xlu0
    %v976 = vpop.trf.xlu0
    %v977 = vpop.trf.xlu0
    %v978 = vpop.trf.xlu0
    %v979 = vpop.trf.xlu0
    %v980 = vpop.trf.xlu0
    %981 = vxpose.xlu0.b32.start [1/16] %v884, 128
    %982 = vxpose.xlu0.b32.cont [2/16] 0.0, 128
    %983 = vxpose.xlu0.b32.cont [3/16] 0.0, 128
    %984 = vxpose.xlu0.b32.cont [4/16] 0.0, 128
    %985 = vxpose.xlu0.b32.cont [5/16] 0.0, 128
    %986 = vxpose.xlu0.b32.cont [6/16] 0.0, 128
    %987 = vxpose.xlu0.b32.cont [7/16] 0.0, 128
    %988 = vxpose.xlu0.b32.cont [8/16] 0.0, 128
    %989 = vxpose.xlu0.b32.cont [9/16] 0.0, 128
    %990 = vxpose.xlu0.b32.cont [10/16] 0.0, 128
    %991 = vxpose.xlu0.b32.cont [11/16] 0.0, 128
    %992 = vxpose.xlu0.b32.cont [12/16] 0.0, 128
    %993 = vxpose.xlu0.b32.cont [13/16] 0.0, 128
    %994 = vxpose.xlu0.b32.cont [14/16] 0.0, 128
    %995 = vxpose.xlu0.b32.cont [15/16] 0.0, 128
    %996 = vxpose.xlu0.b32.end [16/16] 0.0, 128
    %v997 = vpop.trf.xlu0
    %v998 = vpop.trf.xlu0
    %v999 = vpop.trf.xlu0
    %v1000 = vpop.trf.xlu0
    %v1001 = vpop.trf.xlu0
    %v1002 = vpop.trf.xlu0
    %v1003 = vpop.trf.xlu0
    %v1004 = vpop.trf.xlu0
    %v1005 = vpop.trf.xlu0
    %v1006 = vpop.trf.xlu0
    %v1007 = vpop.trf.xlu0
    %v1008 = vpop.trf.xlu0
    %v1009 = vpop.trf.xlu0
    %v1010 = vpop.trf.xlu0
    %v1011 = vpop.trf.xlu0
    %v1012 = vpop.trf.xlu0
    %v1013 = vcombine.low %v901, %v965
    %v1014 = vcombine.high %v901, %v965
    %v1016 = vunpack.c.l.s4 1983009808
    %v1017 = vunpack.c.0.s8 %v1016
    %v1018 = vlaneseq
    %v1019 = vshrl.u32 %v1018, 7
    %v1020 = vsub.s32 %v1017, %v1019
    %v1021 = vrot.slane %v1013, %v1020
    %v1023 = vunpack.c.l.s4 1983009808
    %v1024 = vunpack.c.0.s8 %v1023
    %v1025 = vlaneseq
    %v1026 = vshrl.u32 %v1025, 7
    %v1027 = vsub.s32 %v1024, %v1026
    %v1028 = vrot.slane %v1014, %v1027
    %v1029 = vcombine.low %v933, %v997
    %v1030 = vcombine.high %v933, %v997
    %v1032 = vunpack.c.l.s4 1983009808
    %v1033 = vunpack.c.0.s8 %v1032
    %v1034 = vlaneseq
    %v1035 = vshrl.u32 %v1034, 7
    %v1036 = vsub.s32 %v1033, %v1035
    %v1037 = vrot.slane %v1029, %v1036
    %v1039 = vunpack.c.l.s4 1983009808
    %v1040 = vunpack.c.0.s8 %v1039
    %v1041 = vlaneseq
    %v1042 = vshrl.u32 %v1041, 7
    %v1043 = vsub.s32 %v1040, %v1042
    %v1044 = vrot.slane %v1030, %v1043
    %v1045 = vcombine.low %v1021, %v1037
    %v1046 = vcombine.high %v1021, %v1037
    %v1048 = vunpack.c.l.s4 1934713408
    %v1049 = vunpack.c.0.s8 %v1048
    %v1050 = vlaneseq
    %v1051 = vshrl.u32 %v1050, 7
    %v1052 = vsub.s32 %v1049, %v1051
    %v1053 = vrot.slane %v1045, %v1052
    %v1055 = vunpack.c.l.s4 1934713408
    %v1056 = vunpack.c.0.s8 %v1055
    %v1057 = vlaneseq
    %v1058 = vshrl.u32 %v1057, 7
    %v1059 = vsub.s32 %v1056, %v1058
    %v1060 = vrot.slane %v1046, %v1059
    %v1061 = vcombine.low %v1028, %v1044
    %v1062 = vcombine.high %v1028, %v1044
    %v1064 = vunpack.c.l.s4 1934713408
    %v1065 = vunpack.c.0.s8 %v1064
    %v1066 = vlaneseq
    %v1067 = vshrl.u32 %v1066, 7
    %v1068 = vsub.s32 %v1065, %v1067
    %v1069 = vrot.slane %v1061, %v1068
    %v1071 = vunpack.c.l.s4 1934713408
    %v1072 = vunpack.c.0.s8 %v1071
    %v1073 = vlaneseq
    %v1074 = vshrl.u32 %v1073, 7
    %v1075 = vsub.s32 %v1072, %v1074
    %v1076 = vrot.slane %v1062, %v1075
    %v1077 = vcombine.high %v1053, 0.0
    %v1078 = vcombine.high %v1060, 0.0
    %v1079 = vcombine.high %v1069, 0.0
    %v1080 = vcombine.high %v1076, 0.0
    %v1081 = vcombine.low %v902, %v966
    %v1082 = vcombine.high %v902, %v966
    %v1084 = vunpack.c.l.s4 1983009808
    %v1085 = vunpack.c.0.s8 %v1084
    %v1086 = vlaneseq
    %v1087 = vshrl.u32 %v1086, 7
    %v1088 = vsub.s32 %v1085, %v1087
    %v1089 = vrot.slane %v1081, %v1088
    %v1091 = vunpack.c.l.s4 1983009808
    %v1092 = vunpack.c.0.s8 %v1091
    %v1093 = vlaneseq
    %v1094 = vshrl.u32 %v1093, 7
    %v1095 = vsub.s32 %v1092, %v1094
    %v1096 = vrot.slane %v1082, %v1095
    %v1097 = vcombine.low %v934, %v998
    %v1098 = vcombine.high %v934, %v998
    %v1100 = vunpack.c.l.s4 1983009808
    %v1101 = vunpack.c.0.s8 %v1100
    %v1102 = vlaneseq
    %v1103 = vshrl.u32 %v1102, 7
    %v1104 = vsub.s32 %v1101, %v1103
    %v1105 = vrot.slane %v1097, %v1104
    %v1107 = vunpack.c.l.s4 1983009808
    %v1108 = vunpack.c.0.s8 %v1107
    %v1109 = vlaneseq
    %v1110 = vshrl.u32 %v1109, 7
    %v1111 = vsub.s32 %v1108, %v1110
    %v1112 = vrot.slane %v1098, %v1111
    %v1113 = vcombine.low %v1089, %v1105
    %v1114 = vcombine.high %v1089, %v1105
    %v1116 = vunpack.c.l.s4 1934713408
    %v1117 = vunpack.c.0.s8 %v1116
    %v1118 = vlaneseq
    %v1119 = vshrl.u32 %v1118, 7
    %v1120 = vsub.s32 %v1117, %v1119
    %v1121 = vrot.slane %v1113, %v1120
    %v1123 = vunpack.c.l.s4 1934713408
    %v1124 = vunpack.c.0.s8 %v1123
    %v1125 = vlaneseq
    %v1126 = vshrl.u32 %v1125, 7
    %v1127 = vsub.s32 %v1124, %v1126
    %v1128 = vrot.slane %v1114, %v1127
    %v1129 = vcombine.low %v1096, %v1112
    %v1130 = vcombine.high %v1096, %v1112
    %v1132 = vunpack.c.l.s4 1934713408
    %v1133 = vunpack.c.0.s8 %v1132
    %v1134 = vlaneseq
    %v1135 = vshrl.u32 %v1134, 7
    %v1136 = vsub.s32 %v1133, %v1135
    %v1137 = vrot.slane %v1129, %v1136
    %v1139 = vunpack.c.l.s4 1934713408
    %v1140 = vunpack.c.0.s8 %v1139
    %v1141 = vlaneseq
    %v1142 = vshrl.u32 %v1141, 7
    %v1143 = vsub.s32 %v1140, %v1142
    %v1144 = vrot.slane %v1130, %v1143
    %v1145 = vcombine.high %v1121, 0.0
    %v1146 = vcombine.high %v1128, 0.0
    %v1147 = vcombine.high %v1137, 0.0
    %v1148 = vcombine.high %v1144, 0.0
    %1150 = vrot.lane.b32.xlu0 %v1077, 8
    %v1151 = vpop.permute.xlu0 %1150
    %1154 = vrot.lane.b32.xlu0 %v1060, 16
    %v1155 = vpop.permute.xlu0 %1154
    %1158 = vrot.lane.b32.xlu0 %v1078, 24
    %v1159 = vpop.permute.xlu0 %1158
    %1162 = vrot.lane.b32.xlu0 %v1069, 32
    %v1163 = vpop.permute.xlu0 %1162
    %1166 = vrot.lane.b32.xlu0 %v1079, 40
    %v1167 = vpop.permute.xlu0 %1166
    %1170 = vrot.lane.b32.xlu0 %v1076, 48
    %v1171 = vpop.permute.xlu0 %1170
    %1174 = vrot.lane.b32.xlu0 %v1080, 56
    %v1175 = vpop.permute.xlu0 %1174
    %1178 = vrot.lane.b32.xlu0 %v1121, 64
    %v1179 = vpop.permute.xlu0 %1178
    %1182 = vrot.lane.b32.xlu0 %v1145, 72
    %v1183 = vpop.permute.xlu0 %1182
    %1186 = vrot.lane.b32.xlu0 %v1128, 80
    %v1187 = vpop.permute.xlu0 %1186
    %1190 = vrot.lane.b32.xlu0 %v1146, 88
    %v1191 = vpop.permute.xlu0 %1190
    %1194 = vrot.lane.b32.xlu0 %v1137, 96
    %v1195 = vpop.permute.xlu0 %1194
    %1198 = vrot.lane.b32.xlu0 %v1147, 104
    %v1199 = vpop.permute.xlu0 %1198
    %1202 = vrot.lane.b32.xlu0 %v1144, 112
    %v1203 = vpop.permute.xlu0 %1202
    %1206 = vrot.lane.b32.xlu0 %v1148, 120
    %v1207 = vpop.permute.xlu0 %1206
    %vm1209 = vcmask 64512
    %v1210 = vsel %vm1209, %v1053, %v1151
    %v1211 = vsel %vm346, %v1210, %v1155
    %vm1212 = vcmask 195584
    %v1213 = vsel %vm1212, %v1211, %v1159
    %v1214 = vsel %vm444, %v1213, %v1163
    %vm1215 = vcmask 326656
    %v1216 = vsel %vm1215, %v1214, %v1167
    %vm1217 = vcmask 392192
    %v1218 = vsel %vm1217, %v1216, %v1171
    %vm1219 = vcmask 457728
    %v1220 = vsel %vm1219, %v1218, %v1175
    %vm1221 = vcmask 523264
    %v1222 = vsel %vm1221, %v1220, %v1179
    %vm1223 = vcmask 588800
    %v1224 = vsel %vm1223, %v1222, %v1183
    %vm1225 = vcmask 654336
    %v1226 = vsel %vm1225, %v1224, %v1187
    %vm1227 = vcmask 719872
    %v1228 = vsel %vm1227, %v1226, %v1191
    %vm1229 = vcmask 785408
    %v1230 = vsel %vm1229, %v1228, %v1195
    %vm1231 = vcmask 850944
    %v1232 = vsel %vm1231, %v1230, %v1199
    %vm1233 = vcmask 916480
    %v1234 = vsel %vm1233, %v1232, %v1203
    %vm1235 = vcmask 982016
    %v1236 = vsel %vm1235, %v1234, %v1207
    %1237 = vst [vmem:[#allocation2] sm:$0xf] %v1236
    // Predicated region
    $region38: #{tpu_custom_call.1} parent=1 // pred_check
      _
    $region39: #{tpu_custom_call.1} parent=1 // pred_check_branch
      %1239 = sbr.rel (0) target = $region41
    $region40: #{tpu_custom_call.1} parent=1 // pred_region
      %s1241 = ssub.s32 64, 64
      %1242 = vsyncadd [#allocation3], %s1241
      %s1244 = sshll.u32 [#allocation2], 4
      %s1245 = int_to_ptr.vmem [resolvable:$true] %s1244
      %1247 = dma.vmem_to_hbm [thread:$0]  %s1245, 64, %s9, [#allocation3]
    $region41: #{tpu_custom_call.1} parent=1 // pred_fallthru
      _
    // Predicated region
    $region42: #{tpu_custom_call.1} parent=1 // pred_check
      _
    $region43: #{tpu_custom_call.1} parent=1 // pred_check_branch
      %1249 = sbr.rel (0) target = $region45
    $region44: #{tpu_custom_call.1} parent=1 // pred_region
      %1250 = dma.done [#allocation3], 64
    $region45: #{tpu_custom_call.1} parent=1 // pred_fallthru
      _
    %1251 = vsyncpa [#allocation3], 1

// kernel: tpu_custom_call.1
$region0: #{tpu_custom_call.1}
  #allocation0 [shape = 'u32[]', space=smem, size = 0x4, offset = 0x4, fixed_abs, tag = 'smem constant byte address 0x4 - core index']
  #allocation1 [shape = 'u32[144,128]{1,0:T(1,128)}', space=vmem, size = 0x12000, scoped, tag = 'internal scratch']
  %s0 = inlined_call_operand.vmem [shape: f32[4,128], index: 0, kind: input, shape index: {}]
  %s1 = inlined_call_operand.vmem [shape: f32[16,32], index: 1, kind: input, shape index: {}]
  %s2 = inlined_call_operand.vmem [shape: f32[32,16], index: 2, kind: input, shape index: {}]
  %s3 = inlined_call_operand.vmem [shape: f32[16,16], index: 3, kind: input, shape index: {}]
  %s4 = inlined_call_operand.vmem [shape: f32[1,16], index: 4, kind: input, shape index: {}]
  %s5 = inlined_call_operand.vmem [shape: f32[1,16], index: 5, kind: input, shape index: {}]
  %s6 = inlined_call_operand.vmem [shape: f32[1,16], index: 6, kind: input, shape index: {}]
  %s7 = inlined_call_operand.vmem [shape: f32[1,16], index: 7, kind: input, shape index: {}]
  %s8 = inlined_call_operand.vmem [shape: f32[1,16], index: 8, kind: input, shape index: {}]
  %s9 = inlined_call_operand.hbm [shape: f32[4,128], index: 9, kind: output, shape index: {}]
  %s10 = sld [smem:[#allocation0]]
  $region46: #{tpu_custom_call.1} parent=0
    _
  %s12 = ssub.s32 1, %s10
  %s13 = scalar_select 0, %s12, %s10
  $region1: #{tpu_custom_call.1} parent=0
    #allocation2 [shape = 'u8[2048]{0}', space=vmem, size = 0x800, scoped, tag = 'output window, operand 0, single buffered']
    #allocation3 [shape = 's32[1]{0}', space=sflag, size = 0x4, scoped, tag = 'scoped memory for tpu_custom_call.1']
    %14 = vsyncpa [#allocation3], 0
    // Predicated region
    $region2: #{tpu_custom_call.1} parent=1 // pred_check
      _
    $region3: #{tpu_custom_call.1} parent=1 // pred_check_branch
      %16 = sbr.rel (0) target = $region5
    $region4: #{tpu_custom_call.1} parent=1 // pred_region
      _
    $region5: #{tpu_custom_call.1} parent=1 // pred_fallthru
      _
    // Predicated region
    $region6: #{tpu_custom_call.1} parent=1 // pred_check
      _
    $region7: #{tpu_custom_call.1} parent=1 // pred_check_branch
      %18 = sbr.rel (0) target = $region9
    $region8: #{tpu_custom_call.1} parent=1 // pred_region
      _
    $region9: #{tpu_custom_call.1} parent=1 // pred_fallthru
      _
    // Predicated region
    $region10: #{tpu_custom_call.1} parent=1 // pred_check
      _
    $region11: #{tpu_custom_call.1} parent=1 // pred_check_branch
      %20 = sbr.rel (0) target = $region13
    $region12: #{tpu_custom_call.1} parent=1 // pred_region
      _
    $region13: #{tpu_custom_call.1} parent=1 // pred_fallthru
      _
    // Predicated region
    $region14: #{tpu_custom_call.1} parent=1 // pred_check
      _
    $region15: #{tpu_custom_call.1} parent=1 // pred_check_branch
      %22 = sbr.rel (0) target = $region17
    $region16: #{tpu_custom_call.1} parent=1 // pred_region
      _
    $region17: #{tpu_custom_call.1} parent=1 // pred_fallthru
      _
    // Predicated region
    $region18: #{tpu_custom_call.1} parent=1 // pred_check
      _
    $region19: #{tpu_custom_call.1} parent=1 // pred_check_branch
      %24 = sbr.rel (0) target = $region21
    $region20: #{tpu_custom_call.1} parent=1 // pred_region
      _
    $region21: #{tpu_custom_call.1} parent=1 // pred_fallthru
      _
    // Predicated region
    $region22: #{tpu_custom_call.1} parent=1 // pred_check
      _
    $region23: #{tpu_custom_call.1} parent=1 // pred_check_branch
      %26 = sbr.rel (0) target = $region25
    $region24: #{tpu_custom_call.1} parent=1 // pred_region
      _
    $region25: #{tpu_custom_call.1} parent=1 // pred_fallthru
      _
    // Predicated region
    $region26: #{tpu_custom_call.1} parent=1 // pred_check
      _
    $region27: #{tpu_custom_call.1} parent=1 // pred_check_branch
      %28 = sbr.rel (0) target = $region29
    $region28: #{tpu_custom_call.1} parent=1 // pred_region
      _
    $region29: #{tpu_custom_call.1} parent=1 // pred_fallthru
      _
    // Predicated region
    $region30: #{tpu_custom_call.1} parent=1 // pred_check
      _
    $region31: #{tpu_custom_call.1} parent=1 // pred_check_branch
      %30 = sbr.rel (0) target = $region33
    $region32: #{tpu_custom_call.1} parent=1 // pred_region
      _
    $region33: #{tpu_custom_call.1} parent=1 // pred_fallthru
      _
    // Predicated region
    $region34: #{tpu_custom_call.1} parent=1 // pred_check
      _
    $region35: #{tpu_custom_call.1} parent=1 // pred_check_branch
      %32 = sbr.rel (0) target = $region37
    $region36: #{tpu_custom_call.1} parent=1 // pred_region
      _
    $region37: #{tpu_custom_call.1} parent=1 // pred_fallthru
      _
    %v33 = vld [vmem:[%s0] sm:$0xf]
    %35 = vrot.lane.b32.xlu0 %v33, 120
    %v36 = vpop.permute.xlu0 %35
    %38 = vrot.lane.b32.xlu0 %v33, 112
    %v39 = vpop.permute.xlu0 %38
    %41 = vrot.lane.b32.xlu0 %v33, 104
    %v42 = vpop.permute.xlu0 %41
    %44 = vrot.lane.b32.xlu0 %v33, 96
    %v45 = vpop.permute.xlu0 %44
    %47 = vrot.lane.b32.xlu0 %v33, 88
    %v48 = vpop.permute.xlu0 %47
    %50 = vrot.lane.b32.xlu0 %v33, 80
    %v51 = vpop.permute.xlu0 %50
    %53 = vrot.lane.b32.xlu0 %v33, 72
    %v54 = vpop.permute.xlu0 %53
    %56 = vrot.lane.b32.xlu0 %v33, 64
    %v57 = vpop.permute.xlu0 %56
    %59 = vrot.lane.b32.xlu0 %v33, 56
    %v60 = vpop.permute.xlu0 %59
    %62 = vrot.lane.b32.xlu0 %v33, 48
    %v63 = vpop.permute.xlu0 %62
    %65 = vrot.lane.b32.xlu0 %v33, 40
    %v66 = vpop.permute.xlu0 %65
    %68 = vrot.lane.b32.xlu0 %v33, 32
    %v69 = vpop.permute.xlu0 %68
    %71 = vrot.lane.b32.xlu0 %v33, 24
    %v72 = vpop.permute.xlu0 %71
    %74 = vrot.lane.b32.xlu0 %v33, 16
    %v75 = vpop.permute.xlu0 %74
    %77 = vrot.lane.b32.xlu0 %v33, 8
    %v78 = vpop.permute.xlu0 %77
    %v80 = vcombine.low %v33, %v39
    %v82 = vunpack.c.l.s4 1983009808
    %v83 = vunpack.c.0.s8 %v82
    %v84 = vlaneseq
    %v85 = vshrl.u32 %v84, 7
    %v86 = vsub.s32 %v83, %v85
    %v87 = vrot.slane %v80, %v86
    %v88 = vcombine.low %v36, %v42
    %v90 = vunpack.c.l.s4 1983009808
    %v91 = vunpack.c.0.s8 %v90
    %v92 = vlaneseq
    %v93 = vshrl.u32 %v92, 7
    %v94 = vsub.s32 %v91, %v93
    %v95 = vrot.slane %v88, %v94
    %v96 = vcombine.low %v45, %v51
    %v98 = vunpack.c.l.s4 1983009808
    %v99 = vunpack.c.0.s8 %v98
    %v100 = vlaneseq
    %v101 = vshrl.u32 %v100, 7
    %v102 = vsub.s32 %v99, %v101
    %v103 = vrot.slane %v96, %v102
    %v104 = vcombine.low %v48, %v54
    %v106 = vunpack.c.l.s4 1983009808
    %v107 = vunpack.c.0.s8 %v106
    %v108 = vlaneseq
    %v109 = vshrl.u32 %v108, 7
    %v110 = vsub.s32 %v107, %v109
    %v111 = vrot.slane %v104, %v110
    %v112 = vcombine.low %v87, %v95
    %v113 = vcombine.high %v87, %v95
    %v115 = vunpack.c.l.s4 1934713408
    %v116 = vunpack.c.0.s8 %v115
    %v117 = vlaneseq
    %v118 = vshrl.u32 %v117, 7
    %v119 = vsub.s32 %v116, %v118
    %v120 = vrot.slane %v112, %v119
    %v122 = vunpack.c.l.s4 1934713408
    %v123 = vunpack.c.0.s8 %v122
    %v124 = vlaneseq
    %v125 = vshrl.u32 %v124, 7
    %v126 = vsub.s32 %v123, %v125
    %v127 = vrot.slane %v113, %v126
    %v128 = vcombine.low %v103, %v111
    %v129 = vcombine.high %v103, %v111
    %v131 = vunpack.c.l.s4 1934713408
    %v132 = vunpack.c.0.s8 %v131
    %v133 = vlaneseq
    %v134 = vshrl.u32 %v133, 7
    %v135 = vsub.s32 %v132, %v134
    %v136 = vrot.slane %v128, %v135
    %v138 = vunpack.c.l.s4 1934713408
    %v139 = vunpack.c.0.s8 %v138
    %v140 = vlaneseq
    %v141 = vshrl.u32 %v140, 7
    %v142 = vsub.s32 %v139, %v141
    %v143 = vrot.slane %v129, %v142
    %v144 = vcombine.low %v120, %v136
    %v145 = vcombine.high %v120, %v136
    %v146 = vcombine.low %v127, %v143
    %v147 = vcombine.high %v127, %v143
    %v148 = vcombine.low %v57, %v63
    %v150 = vunpack.c.l.s4 1983009808
    %v151 = vunpack.c.0.s8 %v150
    %v152 = vlaneseq
    %v153 = vshrl.u32 %v152, 7
    %v154 = vsub.s32 %v151, %v153
    %v155 = vrot.slane %v148, %v154
    %v156 = vcombine.low %v60, %v66
    %v158 = vunpack.c.l.s4 1983009808
    %v159 = vunpack.c.0.s8 %v158
    %v160 = vlaneseq
    %v161 = vshrl.u32 %v160, 7
    %v162 = vsub.s32 %v159, %v161
    %v163 = vrot.slane %v156, %v162
    %v164 = vcombine.low %v69, %v75
    %v166 = vunpack.c.l.s4 1983009808
    %v167 = vunpack.c.0.s8 %v166
    %v168 = vlaneseq
    %v169 = vshrl.u32 %v168, 7
    %v170 = vsub.s32 %v167, %v169
    %v171 = vrot.slane %v164, %v170
    %v172 = vcombine.low %v72, %v78
    %v174 = vunpack.c.l.s4 1983009808
    %v175 = vunpack.c.0.s8 %v174
    %v176 = vlaneseq
    %v177 = vshrl.u32 %v176, 7
    %v178 = vsub.s32 %v175, %v177
    %v179 = vrot.slane %v172, %v178
    %v180 = vcombine.low %v155, %v163
    %v181 = vcombine.high %v155, %v163
    %v183 = vunpack.c.l.s4 1934713408
    %v184 = vunpack.c.0.s8 %v183
    %v185 = vlaneseq
    %v186 = vshrl.u32 %v185, 7
    %v187 = vsub.s32 %v184, %v186
    %v188 = vrot.slane %v180, %v187
    %v190 = vunpack.c.l.s4 1934713408
    %v191 = vunpack.c.0.s8 %v190
    %v192 = vlaneseq
    %v193 = vshrl.u32 %v192, 7
    %v194 = vsub.s32 %v191, %v193
    %v195 = vrot.slane %v181, %v194
    %v196 = vcombine.low %v171, %v179
    %v197 = vcombine.high %v171, %v179
    %v199 = vunpack.c.l.s4 1934713408
    %v200 = vunpack.c.0.s8 %v199
    %v201 = vlaneseq
    %v202 = vshrl.u32 %v201, 7
    %v203 = vsub.s32 %v200, %v202
    %v204 = vrot.slane %v196, %v203
    %v206 = vunpack.c.l.s4 1934713408
    %v207 = vunpack.c.0.s8 %v206
    %v208 = vlaneseq
    %v209 = vshrl.u32 %v208, 7
    %v210 = vsub.s32 %v207, %v209
    %v211 = vrot.slane %v197, %v210
    %v212 = vcombine.low %v188, %v204
    %v213 = vcombine.high %v188, %v204
    %v214 = vcombine.low %v195, %v211
    %v215 = vcombine.high %v195, %v211
    %216 = vxpose.xlu0.b32.start [1/16] %v144, 128
    %217 = vxpose.xlu0.b32.cont [2/16] %v212, 128
    %218 = vxpose.xlu0.b32.cont [3/16] 0.0, 128
    %219 = vxpose.xlu0.b32.cont [4/16] 0.0, 128
    %220 = vxpose.xlu0.b32.cont [5/16] 0.0, 128
    %221 = vxpose.xlu0.b32.cont [6/16] 0.0, 128
    %222 = vxpose.xlu0.b32.cont [7/16] 0.0, 128
    %223 = vxpose.xlu0.b32.cont [8/16] 0.0, 128
    %224 = vxpose.xlu0.b32.cont [9/16] 0.0, 128
    %225 = vxpose.xlu0.b32.cont [10/16] 0.0, 128
    %226 = vxpose.xlu0.b32.cont [11/16] 0.0, 128
    %227 = vxpose.xlu0.b32.cont [12/16] 0.0, 128
    %228 = vxpose.xlu0.b32.cont [13/16] 0.0, 128
    %229 = vxpose.xlu0.b32.cont [14/16] 0.0, 128
    %230 = vxpose.xlu0.b32.cont [15/16] 0.0, 128
    %231 = vxpose.xlu0.b32.end [16/16] 0.0, 128
    %v232 = vpop.trf.xlu0
    %v233 = vpop.trf.xlu0
    %v234 = vpop.trf.xlu0
    %v235 = vpop.trf.xlu0
    %v236 = vpop.trf.xlu0
    %v237 = vpop.trf.xlu0
    %v238 = vpop.trf.xlu0
    %v239 = vpop.trf.xlu0
    %v240 = vpop.trf.xlu0
    %v241 = vpop.trf.xlu0
    %v242 = vpop.trf.xlu0
    %v243 = vpop.trf.xlu0
    %v244 = vpop.trf.xlu0
    %v245 = vpop.trf.xlu0
    %v246 = vpop.trf.xlu0
    %v247 = vpop.trf.xlu0
    %248 = vxpose.xlu0.b32.start [1/16] %v145, 128
    %249 = vxpose.xlu0.b32.cont [2/16] %v213, 128
    %250 = vxpose.xlu0.b32.cont [3/16] 0.0, 128
    %251 = vxpose.xlu0.b32.cont [4/16] 0.0, 128
    %252 = vxpose.xlu0.b32.cont [5/16] 0.0, 128
    %253 = vxpose.xlu0.b32.cont [6/16] 0.0, 128
    %254 = vxpose.xlu0.b32.cont [7/16] 0.0, 128
    %255 = vxpose.xlu0.b32.cont [8/16] 0.0, 128
    %256 = vxpose.xlu0.b32.cont [9/16] 0.0, 128
    %257 = vxpose.xlu0.b32.cont [10/16] 0.0, 128
    %258 = vxpose.xlu0.b32.cont [11/16] 0.0, 128
    %259 = vxpose.xlu0.b32.cont [12/16] 0.0, 128
    %260 = vxpose.xlu0.b32.cont [13/16] 0.0, 128
    %261 = vxpose.xlu0.b32.cont [14/16] 0.0, 128
    %262 = vxpose.xlu0.b32.cont [15/16] 0.0, 128
    %263 = vxpose.xlu0.b32.end [16/16] 0.0, 128
    %v264 = vpop.trf.xlu0
    %v265 = vpop.trf.xlu0
    %v266 = vpop.trf.xlu0
    %v267 = vpop.trf.xlu0
    %v268 = vpop.trf.xlu0
    %v269 = vpop.trf.xlu0
    %v270 = vpop.trf.xlu0
    %v271 = vpop.trf.xlu0
    %v272 = vpop.trf.xlu0
    %v273 = vpop.trf.xlu0
    %v274 = vpop.trf.xlu0
    %v275 = vpop.trf.xlu0
    %v276 = vpop.trf.xlu0
    %v277 = vpop.trf.xlu0
    %v278 = vpop.trf.xlu0
    %v279 = vpop.trf.xlu0
    %280 = vxpose.xlu0.b32.start [1/16] %v146, 128
    %281 = vxpose.xlu0.b32.cont [2/16] %v214, 128
    %282 = vxpose.xlu0.b32.cont [3/16] 0.0, 128
    %283 = vxpose.xlu0.b32.cont [4/16] 0.0, 128
    %284 = vxpose.xlu0.b32.cont [5/16] 0.0, 128
    %285 = vxpose.xlu0.b32.cont [6/16] 0.0, 128
    %286 = vxpose.xlu0.b32.cont [7/16] 0.0, 128
    %287 = vxpose.xlu0.b32.cont [8/16] 0.0, 128
    %288 = vxpose.xlu0.b32.cont [9/16] 0.0, 128
    %289 = vxpose.xlu0.b32.cont [10/16] 0.0, 128
    %290 = vxpose.xlu0.b32.cont [11/16] 0.0, 128
    %291 = vxpose.xlu0.b32.cont [12/16] 0.0, 128
    %292 = vxpose.xlu0.b32.cont [13/16] 0.0, 128
    %293 = vxpose.xlu0.b32.cont [14/16] 0.0, 128
    %294 = vxpose.xlu0.b32.cont [15/16] 0.0, 128
    %295 = vxpose.xlu0.b32.end [16/16] 0.0, 128
    %v296 = vpop.trf.xlu0
    %v297 = vpop.trf.xlu0
    %v298 = vpop.trf.xlu0
    %v299 = vpop.trf.xlu0
    %v300 = vpop.trf.xlu0
    %v301 = vpop.trf.xlu0
    %v302 = vpop.trf.xlu0
    %v303 = vpop.trf.xlu0
    %v304 = vpop.trf.xlu0
    %v305 = vpop.trf.xlu0
    %v306 = vpop.trf.xlu0
    %v307 = vpop.trf.xlu0
    %v308 = vpop.trf.xlu0
    %v309 = vpop.trf.xlu0
    %v310 = vpop.trf.xlu0
    %v311 = vpop.trf.xlu0
    %312 = vxpose.xlu0.b32.start [1/16] %v147, 128
    %313 = vxpose.xlu0.b32.cont [2/16] %v215, 128
    %314 = vxpose.xlu0.b32.cont [3/16] 0.0, 128
    %315 = vxpose.xlu0.b32.cont [4/16] 0.0, 128
    %316 = vxpose.xlu0.b32.cont [5/16] 0.0, 128
    %317 = vxpose.xlu0.b32.cont [6/16] 0.0, 128
    %318 = vxpose.xlu0.b32.cont [7/16] 0.0, 128
    %319 = vxpose.xlu0.b32.cont [8/16] 0.0, 128
    %320 = vxpose.xlu0.b32.cont [9/16] 0.0, 128
    %321 = vxpose.xlu0.b32.cont [10/16] 0.0, 128
    %322 = vxpose.xlu0.b32.cont [11/16] 0.0, 128
    %323 = vxpose.xlu0.b32.cont [12/16] 0.0, 128
    %324 = vxpose.xlu0.b32.cont [13/16] 0.0, 128
    %325 = vxpose.xlu0.b32.cont [14/16] 0.0, 128
    %326 = vxpose.xlu0.b32.cont [15/16] 0.0, 128
    %327 = vxpose.xlu0.b32.end [16/16] 0.0, 128
    %v328 = vpop.trf.xlu0
    %v329 = vpop.trf.xlu0
    %v330 = vpop.trf.xlu0
    %v331 = vpop.trf.xlu0
    %v332 = vpop.trf.xlu0
    %v333 = vpop.trf.xlu0
    %v334 = vpop.trf.xlu0
    %v335 = vpop.trf.xlu0
    %v336 = vpop.trf.xlu0
    %v337 = vpop.trf.xlu0
    %v338 = vpop.trf.xlu0
    %v339 = vpop.trf.xlu0
    %v340 = vpop.trf.xlu0
    %v341 = vpop.trf.xlu0
    %v342 = vpop.trf.xlu0
    %v343 = vpop.trf.xlu0
    %v344 = vld [vmem:[%s1] sm:$0xff]
    %v345 = vld [vmem:[%s1 + $0x8] sm:$0xff]
    %vm346 = vcmask 130048
    %v348 = vsel %vm346, %v232, 0
    %v351 = vsel %vm346, %v264, 0
    %v354 = vsel %vm346, %v296, 0
    %v357 = vsel %vm346, %v328, 0
    %359 = vmatprep.subr.mxu0 0.0
    %360 = vmatpush1.msra.mxu0 %v344
    %361 = vmatprep.subr.mxu0 0.0
    %362 = vmatpush1.msra.mxu0 %v345
    %363 = vmatprep.subr.mxu0 0.0
    %364 = vmatpush1.msra.mxu0 0.0
    %365 = vmatprep.subr.mxu0 0.0
    %366 = vmatpush1.msra.mxu0 0.0
    %367 = vmatprep.subr.mxu0 0.0
    %368 = vmatpush1.msra.mxu0 0.0
    %369 = vmatprep.subr.mxu0 0.0
    %370 = vmatpush1.msra.mxu0 0.0
    %371 = vmatprep.subr.mxu0 0.0
    %372 = vmatpush1.msra.mxu0 0.0
    %373 = vmatprep.subr.mxu0 0.0
    %374 = vmatpush1.msra.mxu0 0.0
    %375 = vmatprep.subr.mxu0 0.0
    %376 = vmatpush1.msra.mxu0 0.0
    %377 = vmatprep.subr.mxu0 0.0
    %378 = vmatpush1.msra.mxu0 0.0
    %379 = vmatprep.subr.mxu0 0.0
    %380 = vmatpush1.msra.mxu0 0.0
    %381 = vmatprep.subr.mxu0 0.0
    %382 = vmatpush1.msra.mxu0 0.0
    %383 = vmatprep.subr.mxu0 0.0
    %384 = vmatpush1.msra.mxu0 0.0
    %385 = vmatprep.subr.mxu0 0.0
    %386 = vmatpush1.msra.mxu0 0.0
    %387 = vmatprep.subr.mxu0 0.0
    %388 = vmatpush1.msra.mxu0 0.0
    %389 = vmatprep.subr.mxu0 0.0
    %390 = vmatpush1.msra.mxu0 0.0
    %391 = vmatprep.subr.mxu0 0.0
    %392 = vmatpush1.msra.mxu0 0.0
    %393 = vmatprep.subr.mxu0 0.0
    %394 = vmatpush1.msra.mxu0 0.0
    %395 = vmatprep.subr.mxu0 0.0
    %396 = vmatpush1.msra.mxu0 0.0
    %397 = vmatprep.subr.mxu0 0.0
    %398 = vmatpush1.msra.mxu0 0.0
    %399 = vmatprep.subr.mxu0 0.0
    %400 = vmatpush1.msra.mxu0 0.0
    %401 = vmatprep.subr.mxu0 0.0
    %402 = vmatpush1.msra.mxu0 0.0
    %403 = vmatprep.subr.mxu0 0.0
    %404 = vmatpush1.msra.mxu0 0.0
    %405 = vmatprep.subr.mxu0 0.0
    %406 = vmatpush1.msra.mxu0 0.0
    %407 = vmatprep.subr.mxu0 0.0
    %408 = vmatpush1.msra.mxu0 0.0
    %409 = vmatprep.subr.mxu0 0.0
    %410 = vmatpush1.msra.mxu0 0.0
    %411 = vmatprep.subr.mxu0 0.0
    %412 = vmatpush1.msra.mxu0 0.0
    %413 = vmatprep.subr.mxu0 0.0
    %414 = vmatpush1.msra.mxu0 0.0
    %415 = vmatprep.subr.mxu0 0.0
    %416 = vmatpush1.msra.mxu0 0.0
    %417 = vmatprep.subr.mxu0 0.0
    %418 = vmatpush1.msra.mxu0 0.0
    %419 = vmatprep.subr.mxu0 0.0
    %420 = vmatpush1.msra.mxu0 0.0
    %421 = vmatprep.subr.mxu0 0.0
    %422 = vmatpush1.msra.mxu0 0.0
    %423 = vmatprep.mubr.f32.mxu0 0.0
    %424 = vmatmul.mubr.f32.gmra.mrb[0].mxu0 %v348
    %v425 = vpop.f32.mrb[0].mxu0
    %v426 = vadd.f32 0.0, %v425
    %v427 = vpop.f32.mrb[0].mxu0
    %428 = vmatprep.mubr.f32.mxu0 0.0
    %429 = vmatmul.mubr.f32.gmra.mrb[0].mxu0 %v351
    %v430 = vpop.f32.mrb[0].mxu0
    %v431 = vadd.f32 0.0, %v430
    %v432 = vpop.f32.mrb[0].mxu0
    %433 = vmatprep.mubr.f32.mxu0 0.0
    %434 = vmatmul.mubr.f32.gmra.mrb[0].mxu0 %v354
    %v435 = vpop.f32.mrb[0].mxu0
    %v436 = vadd.f32 0.0, %v435
    %v437 = vpop.f32.mrb[0].mxu0
    %438 = vmatprep.mubr.f32.mxu0 0.0
    %439 = vmatmul.mubr.f32.gmra.mrb[0].mxu0 %v357
    %v440 = vpop.f32.mrb[0].mxu0
    %v441 = vadd.f32 0.0, %v440
    %v442 = vpop.f32.mrb[0].mxu0
    %443 = vdwg.mxu0
    %vm444 = vcmask 261120
    %v445 = vsel %vm444, %v426, -inf
    %v446 = vrot.slane %v445, 4
    %v447 = vmax.f32 %v445, %v446
    %v448 = vrot.slane %v447, 2
    %v449 = vmax.f32 %v447, %v448
    %v450 = vrot.slane %v449, 1
    %v451 = vmax.f32 %v449, %v450
    %v452 = vsel %vm444, %v431, -inf
    %v453 = vrot.slane %v452, 4
    %v454 = vmax.f32 %v452, %v453
    %v455 = vrot.slane %v454, 2
    %v456 = vmax.f32 %v454, %v455
    %v457 = vrot.slane %v456, 1
    %v458 = vmax.f32 %v456, %v457
    %v459 = vsel %vm444, %v436, -inf
    %v460 = vrot.slane %v459, 4
    %v461 = vmax.f32 %v459, %v460
    %v462 = vrot.slane %v461, 2
    %v463 = vmax.f32 %v461, %v462
    %v464 = vrot.slane %v463, 1
    %v465 = vmax.f32 %v463, %v464
    %v466 = vsel %vm444, %v441, -inf
    %v467 = vrot.slane %v466, 4
    %v468 = vmax.f32 %v466, %v467
    %v469 = vrot.slane %v468, 2
    %v470 = vmax.f32 %v468, %v469
    %v471 = vrot.slane %v470, 1
    %v472 = vmax.f32 %v470, %v471
    %v473 = vsub.f32 %v426, %v451
    %v474 = vsub.f32 %v431, %v458
    %v475 = vsub.f32 %v436, %v465
    %v476 = vsub.f32 %v441, %v472
    %v477 = vmul.f32 %v473, 1.442695
    %v478 = vpow.pop %v477
    %v479 = vmul.f32 %v474, 1.442695
    %v480 = vpow.pop %v479
    %v481 = vmul.f32 %v475, 1.442695
    %v482 = vpow.pop %v481
    %v483 = vmul.f32 %v476, 1.442695
    %v484 = vpow.pop %v483
    %v485 = vsel %vm444, %v478, 0.0
    %v486 = vrot.slane %v485, 4
    %v487 = vadd.f32 %v485, %v486
    %v488 = vrot.slane %v487, 2
    %v489 = vadd.f32 %v487, %v488
    %v490 = vrot.slane %v489, 1
    %v491 = vadd.f32 %v489, %v490
    %v492 = vsel %vm444, %v480, 0.0
    %v493 = vrot.slane %v492, 4
    %v494 = vadd.f32 %v492, %v493
    %v495 = vrot.slane %v494, 2
    %v496 = vadd.f32 %v494, %v495
    %v497 = vrot.slane %v496, 1
    %v498 = vadd.f32 %v496, %v497
    %v499 = vsel %vm444, %v482, 0.0
    %v500 = vrot.slane %v499, 4
    %v501 = vadd.f32 %v499, %v500
    %v502 = vrot.slane %v501, 2
    %v503 = vadd.f32 %v501, %v502
    %v504 = vrot.slane %v503, 1
    %v505 = vadd.f32 %v503, %v504
    %v506 = vsel %vm444, %v484, 0.0
    %v507 = vrot.slane %v506, 4
    %v508 = vadd.f32 %v506, %v507
    %v509 = vrot.slane %v508, 2
    %v510 = vadd.f32 %v508, %v509
    %v511 = vrot.slane %v510, 1
    %v512 = vadd.f32 %v510, %v511
    %v513 = vrcp.pop %v491
    %v514 = vmul.f32 %v478, %v513
    %v515 = vrcp.pop %v498
    %v516 = vmul.f32 %v480, %v515
    %v517 = vrcp.pop %v505
    %v518 = vmul.f32 %v482, %v517
    %v519 = vrcp.pop %v512
    %v520 = vmul.f32 %v484, %v519
    %v521 = vld [vmem:[%s2] sm:$0xff]
    %v522 = vld [vmem:[%s2 + $0x8] sm:$0xff]
    %v523 = vld [vmem:[%s2 + $0x10] sm:$0xff]
    %v524 = vld [vmem:[%s2 + $0x18] sm:$0xff]
    %v526 = vsel %vm444, %v514, 0
    %v529 = vsel %vm444, %v516, 0
    %v532 = vsel %vm444, %v518, 0
    %v535 = vsel %vm444, %v520, 0
    %537 = vmatprep.subr.mxu0 0.0
    %538 = vmatpush1.msra.mxu0 %v521
    %539 = vmatprep.subr.mxu0 0.0
    %540 = vmatpush1.msra.mxu0 %v522
    %541 = vmatprep.subr.mxu0 0.0
    %542 = vmatpush1.msra.mxu0 %v523
    %543 = vmatprep.subr.mxu0 0.0
    %544 = vmatpush1.msra.mxu0 %v524
    %545 = vmatprep.subr.mxu0 0.0
    %546 = vmatpush1.msra.mxu0 0.0
    %547 = vmatprep.subr.mxu0 0.0
    %548 = vmatpush1.msra.mxu0 0.0
    %549 = vmatprep.subr.mxu0 0.0
    %550 = vmatpush1.msra.mxu0 0.0
    %551 = vmatprep.subr.mxu0 0.0
    %552 = vmatpush1.msra.mxu0 0.0
    %553 = vmatprep.subr.mxu0 0.0
    %554 = vmatpush1.msra.mxu0 0.0
    %555 = vmatprep.subr.mxu0 0.0
    %556 = vmatpush1.msra.mxu0 0.0
    %557 = vmatprep.subr.mxu0 0.0
    %558 = vmatpush1.msra.mxu0 0.0
    %559 = vmatprep.subr.mxu0 0.0
    %560 = vmatpush1.msra.mxu0 0.0
    %561 = vmatprep.subr.mxu0 0.0
    %562 = vmatpush1.msra.mxu0 0.0
    %563 = vmatprep.subr.mxu0 0.0
    %564 = vmatpush1.msra.mxu0 0.0
    %565 = vmatprep.subr.mxu0 0.0
    %566 = vmatpush1.msra.mxu0 0.0
    %567 = vmatprep.subr.mxu0 0.0
    %568 = vmatpush1.msra.mxu0 0.0
    %569 = vmatprep.subr.mxu0 0.0
    %570 = vmatpush1.msra.mxu0 0.0
    %571 = vmatprep.subr.mxu0 0.0
    %572 = vmatpush1.msra.mxu0 0.0
    %573 = vmatprep.subr.mxu0 0.0
    %574 = vmatpush1.msra.mxu0 0.0
    %575 = vmatprep.subr.mxu0 0.0
    %576 = vmatpush1.msra.mxu0 0.0
    %577 = vmatprep.subr.mxu0 0.0
    %578 = vmatpush1.msra.mxu0 0.0
    %579 = vmatprep.subr.mxu0 0.0
    %580 = vmatpush1.msra.mxu0 0.0
    %581 = vmatprep.subr.mxu0 0.0
    %582 = vmatpush1.msra.mxu0 0.0
    %583 = vmatprep.subr.mxu0 0.0
    %584 = vmatpush1.msra.mxu0 0.0
    %585 = vmatprep.subr.mxu0 0.0
    %586 = vmatpush1.msra.mxu0 0.0
    %587 = vmatprep.subr.mxu0 0.0
    %588 = vmatpush1.msra.mxu0 0.0
    %589 = vmatprep.subr.mxu0 0.0
    %590 = vmatpush1.msra.mxu0 0.0
    %591 = vmatprep.subr.mxu0 0.0
    %592 = vmatpush1.msra.mxu0 0.0
    %593 = vmatprep.subr.mxu0 0.0
    %594 = vmatpush1.msra.mxu0 0.0
    %595 = vmatprep.subr.mxu0 0.0
    %596 = vmatpush1.msra.mxu0 0.0
    %597 = vmatprep.subr.mxu0 0.0
    %598 = vmatpush1.msra.mxu0 0.0
    %599 = vmatprep.subr.mxu0 0.0
    %600 = vmatpush1.msra.mxu0 0.0
    %601 = vmatprep.mubr.f32.mxu0 0.0
    %602 = vmatmul.mubr.f32.gmra.mrb[0].mxu0 %v526
    %v603 = vpop.f32.mrb[0].mxu0
    %v604 = vadd.f32 0.0, %v603
    %v605 = vpop.f32.mrb[0].mxu0
    %606 = vmatprep.mubr.f32.mxu0 0.0
    %607 = vmatmul.mubr.f32.gmra.mrb[0].mxu0 %v529
    %v608 = vpop.f32.mrb[0].mxu0
    %v609 = vadd.f32 0.0, %v608
    %v610 = vpop.f32.mrb[0].mxu0
    %611 = vmatprep.mubr.f32.mxu0 0.0
    %612 = vmatmul.mubr.f32.gmra.mrb[0].mxu0 %v532
    %v613 = vpop.f32.mrb[0].mxu0
    %v614 = vadd.f32 0.0, %v613
    %v615 = vpop.f32.mrb[0].mxu0
    %616 = vmatprep.mubr.f32.mxu0 0.0
    %617 = vmatmul.mubr.f32.gmra.mrb[0].mxu0 %v535
    %v618 = vpop.f32.mrb[0].mxu0
    %v619 = vadd.f32 0.0, %v618
    %v620 = vpop.f32.mrb[0].mxu0
    %621 = vdwg.mxu0
    %v622 = vadd.f32 %v232, %v604
    %v623 = vadd.f32 %v264, %v609
    %v624 = vadd.f32 %v296, %v614
    %v625 = vadd.f32 %v328, %v619
    %v626 = vld [vmem:[%s5] sm:$0x1]
    %v627 = vld [vmem:[%s6] sm:$0x1]
    %v628 = vsel %vm346, %v622, 0.0
    %629 = vadd.xlane.f32.xlu0 %v628
    %v630 = vpop.xlane.xlu0 %629
    %v631 = vsel %vm346, %v623, 0.0
    %632 = vadd.xlane.f32.xlu0 %v631
    %v633 = vpop.xlane.xlu0 %632
    %v634 = vsel %vm346, %v624, 0.0
    %635 = vadd.xlane.f32.xlu0 %v634
    %v636 = vpop.xlane.xlu0 %635
    %v637 = vsel %vm346, %v625, 0.0
    %638 = vadd.xlane.f32.xlu0 %v637
    %v639 = vpop.xlane.xlu0 %638
    %v640 = vrcp.pop 16.0
    %v641 = vmul.f32 %v630, %v640
    %v642 = vmul.f32 %v633, %v640
    %v643 = vmul.f32 %v636, %v640
    %v644 = vmul.f32 %v639, %v640
    %v645 = vsub.f32 %v622, %v641
    %v646 = vsub.f32 %v623, %v642
    %v647 = vsub.f32 %v624, %v643
    %v648 = vsub.f32 %v625, %v644
    %v649 = vmul.f32 %v645, %v645
    %v650 = vmul.f32 %v646, %v646
    %v651 = vmul.f32 %v647, %v647
    %v652 = vmul.f32 %v648, %v648
    %v653 = vsel %vm346, %v649, 0.0
    %654 = vadd.xlane.f32.xlu0 %v653
    %v655 = vpop.xlane.xlu0 %654
    %v656 = vsel %vm346, %v650, 0.0
    %657 = vadd.xlane.f32.xlu0 %v656
    %v658 = vpop.xlane.xlu0 %657
    %v659 = vsel %vm346, %v651, 0.0
    %660 = vadd.xlane.f32.xlu0 %v659
    %v661 = vpop.xlane.xlu0 %660
    %v662 = vsel %vm346, %v652, 0.0
    %663 = vadd.xlane.f32.xlu0 %v662
    %v664 = vpop.xlane.xlu0 %663
    %v665 = vmul.f32 %v655, %v640
    %v666 = vmul.f32 %v658, %v640
    %v667 = vmul.f32 %v661, %v640
    %v668 = vmul.f32 %v664, %v640
    %v669 = vadd.f32 %v665, 1e-05
    %v670 = vadd.f32 %v666, 1e-05
    %v671 = vadd.f32 %v667, 1e-05
    %v672 = vadd.f32 %v668, 1e-05
    %v673 = vrsqrt.pop %v669
    %v674 = vrsqrt.pop %v670
    %v675 = vrsqrt.pop %v671
    %v676 = vrsqrt.pop %v672
    %v677 = vmul.f32 %v645, %v673
    %v678 = vmul.f32 %v646, %v674
    %v679 = vmul.f32 %v647, %v675
    %v680 = vmul.f32 %v648, %v676
    %v682 = vlaneseq
    %v683 = vshrl.u32 %v682, 7
    %v684 = vsub.s32 0, %v683
    %v685 = vrot.slane %v626, %v684
    %v687 = vmul.f32 %v677, %v685
    %v688 = vmul.f32 %v678, %v685
    %v689 = vmul.f32 %v679, %v685
    %v690 = vmul.f32 %v680, %v685
    %v692 = vlaneseq
    %v693 = vshrl.u32 %v692, 7
    %v694 = vsub.s32 0, %v693
    %v695 = vrot.slane %v627, %v694
    %v697 = vadd.f32 %v687, %v695
    %v698 = vadd.f32 %v688, %v695
    %v699 = vadd.f32 %v689, %v695
    %v700 = vadd.f32 %v690, %v695
    %v701 = vld [vmem:[%s3] sm:$0xff]
    %v702 = vld [vmem:[%s3 + $0x8] sm:$0xff]
    %v703 = vld [vmem:[%s4] sm:$0x1]
    %v705 = vlaneseq
    %v706 = vshrl.u32 %v705, 7
    %v707 = vsub.s32 0, %v706
    %v708 = vrot.slane %v703, %v707
    %v711 = vsel %vm346, %v697, 0
    %v714 = vsel %vm346, %v698, 0
    %v717 = vsel %vm346, %v699, 0
    %v720 = vsel %vm346, %v700, 0
    %722 = vmatprep.subr.mxu0 0.0
    %723 = vmatpush1.msra.mxu0 %v701
    %724 = vmatprep.subr.mxu0 0.0
    %725 = vmatpush1.msra.mxu0 %v702
    %726 = vmatprep.subr.mxu0 0.0
    %727 = vmatpush1.msra.mxu0 0.0
    %728 = vmatprep.subr.mxu0 0.0
    %729 = vmatpush1.msra.mxu0 0.0
    %730 = vmatprep.subr.mxu0 0.0
    %731 = vmatpush1.msra.mxu0 0.0
    %732 = vmatprep.subr.mxu0 0.0
    %733 = vmatpush1.msra.mxu0 0.0
    %734 = vmatprep.subr.mxu0 0.0
    %735 = vmatpush1.msra.mxu0 0.0
    %736 = vmatprep.subr.mxu0 0.0
    %737 = vmatpush1.msra.mxu0 0.0
    %738 = vmatprep.subr.mxu0 0.0
    %739 = vmatpush1.msra.mxu0 0.0
    %740 = vmatprep.subr.mxu0 0.0
    %741 = vmatpush1.msra.mxu0 0.0
    %742 = vmatprep.subr.mxu0 0.0
    %743 = vmatpush1.msra.mxu0 0.0
    %744 = vmatprep.subr.mxu0 0.0
    %745 = vmatpush1.msra.mxu0 0.0
    %746 = vmatprep.subr.mxu0 0.0
    %747 = vmatpush1.msra.mxu0 0.0
    %748 = vmatprep.subr.mxu0 0.0
    %749 = vmatpush1.msra.mxu0 0.0
    %750 = vmatprep.subr.mxu0 0.0
    %751 = vmatpush1.msra.mxu0 0.0
    %752 = vmatprep.subr.mxu0 0.0
    %753 = vmatpush1.msra.mxu0 0.0
    %754 = vmatprep.subr.mxu0 0.0
    %755 = vmatpush1.msra.mxu0 0.0
    %756 = vmatprep.subr.mxu0 0.0
    %757 = vmatpush1.msra.mxu0 0.0
    %758 = vmatprep.subr.mxu0 0.0
    %759 = vmatpush1.msra.mxu0 0.0
    %760 = vmatprep.subr.mxu0 0.0
    %761 = vmatpush1.msra.mxu0 0.0
    %762 = vmatprep.subr.mxu0 0.0
    %763 = vmatpush1.msra.mxu0 0.0
    %764 = vmatprep.subr.mxu0 0.0
    %765 = vmatpush1.msra.mxu0 0.0
    %766 = vmatprep.subr.mxu0 0.0
    %767 = vmatpush1.msra.mxu0 0.0
    %768 = vmatprep.subr.mxu0 0.0
    %769 = vmatpush1.msra.mxu0 0.0
    %770 = vmatprep.subr.mxu0 0.0
    %771 = vmatpush1.msra.mxu0 0.0
    %772 = vmatprep.subr.mxu0 0.0
    %773 = vmatpush1.msra.mxu0 0.0
    %774 = vmatprep.subr.mxu0 0.0
    %775 = vmatpush1.msra.mxu0 0.0
    %776 = vmatprep.subr.mxu0 0.0
    %777 = vmatpush1.msra.mxu0 0.0
    %778 = vmatprep.subr.mxu0 0.0
    %779 = vmatpush1.msra.mxu0 0.0
    %780 = vmatprep.subr.mxu0 0.0
    %781 = vmatpush1.msra.mxu0 0.0
    %782 = vmatprep.subr.mxu0 0.0
    %783 = vmatpush1.msra.mxu0 0.0
    %784 = vmatprep.subr.mxu0 0.0
    %785 = vmatpush1.msra.mxu0 0.0
    %786 = vmatprep.mubr.f32.mxu0 0.0
    %787 = vmatmul.mubr.f32.gmra.mrb[0].mxu0 %v711
    %v788 = vpop.f32.mrb[0].mxu0
    %v789 = vadd.f32 %v708, %v788
    %v790 = vpop.f32.mrb[0].mxu0
    %791 = vmatprep.mubr.f32.mxu0 0.0
    %792 = vmatmul.mubr.f32.gmra.mrb[0].mxu0 %v714
    %v793 = vpop.f32.mrb[0].mxu0
    %v794 = vadd.f32 %v708, %v793
    %v795 = vpop.f32.mrb[0].mxu0
    %796 = vmatprep.mubr.f32.mxu0 0.0
    %797 = vmatmul.mubr.f32.gmra.mrb[0].mxu0 %v717
    %v798 = vpop.f32.mrb[0].mxu0
    %v799 = vadd.f32 %v708, %v798
    %v800 = vpop.f32.mrb[0].mxu0
    %801 = vmatprep.mubr.f32.mxu0 0.0
    %802 = vmatmul.mubr.f32.gmra.mrb[0].mxu0 %v720
    %v803 = vpop.f32.mrb[0].mxu0
    %v804 = vadd.f32 %v708, %v803
    %v805 = vpop.f32.mrb[0].mxu0
    %806 = vdwg.mxu0
    %v807 = vadd.f32 %v697, %v789
    %v808 = vadd.f32 %v698, %v794
    %v809 = vadd.f32 %v699, %v799
    %v810 = vadd.f32 %v700, %v804
    %v811 = vld [vmem:[%s7] sm:$0x1]
    %v812 = vld [vmem:[%s8] sm:$0x1]
    %v813 = vsel %vm346, %v807, 0.0
    %814 = vadd.xlane.f32.xlu0 %v813
    %v815 = vpop.xlane.xlu0 %814
    %v816 = vsel %vm346, %v808, 0.0
    %817 = vadd.xlane.f32.xlu0 %v816
    %v818 = vpop.xlane.xlu0 %817
    %v819 = vsel %vm346, %v809, 0.0
    %820 = vadd.xlane.f32.xlu0 %v819
    %v821 = vpop.xlane.xlu0 %820
    %v822 = vsel %vm346, %v810, 0.0
    %823 = vadd.xlane.f32.xlu0 %v822
    %v824 = vpop.xlane.xlu0 %823
    %v825 = vmul.f32 %v815, %v640
    %v826 = vmul.f32 %v818, %v640
    %v827 = vmul.f32 %v821, %v640
    %v828 = vmul.f32 %v824, %v640
    %v829 = vsub.f32 %v807, %v825
    %v830 = vsub.f32 %v808, %v826
    %v831 = vsub.f32 %v809, %v827
    %v832 = vsub.f32 %v810, %v828
    %v833 = vmul.f32 %v829, %v829
    %v834 = vmul.f32 %v830, %v830
    %v835 = vmul.f32 %v831, %v831
    %v836 = vmul.f32 %v832, %v832
    %v837 = vsel %vm346, %v833, 0.0
    %838 = vadd.xlane.f32.xlu0 %v837
    %v839 = vpop.xlane.xlu0 %838
    %v840 = vsel %vm346, %v834, 0.0
    %841 = vadd.xlane.f32.xlu0 %v840
    %v842 = vpop.xlane.xlu0 %841
    %v843 = vsel %vm346, %v835, 0.0
    %844 = vadd.xlane.f32.xlu0 %v843
    %v845 = vpop.xlane.xlu0 %844
    %v846 = vsel %vm346, %v836, 0.0
    %847 = vadd.xlane.f32.xlu0 %v846
    %v848 = vpop.xlane.xlu0 %847
    %v849 = vmul.f32 %v839, %v640
    %v850 = vmul.f32 %v842, %v640
    %v851 = vmul.f32 %v845, %v640
    %v852 = vmul.f32 %v848, %v640
    %v853 = vadd.f32 %v849, 1e-05
    %v854 = vadd.f32 %v850, 1e-05
    %v855 = vadd.f32 %v851, 1e-05
    %v856 = vadd.f32 %v852, 1e-05
    %v857 = vrsqrt.pop %v853
    %v858 = vrsqrt.pop %v854
    %v859 = vrsqrt.pop %v855
    %v860 = vrsqrt.pop %v856
    %v861 = vmul.f32 %v829, %v857
    %v862 = vmul.f32 %v830, %v858
    %v863 = vmul.f32 %v831, %v859
    %v864 = vmul.f32 %v832, %v860
    %v866 = vlaneseq
    %v867 = vshrl.u32 %v866, 7
    %v868 = vsub.s32 0, %v867
    %v869 = vrot.slane %v811, %v868
    %v871 = vmul.f32 %v861, %v869
    %v872 = vmul.f32 %v862, %v869
    %v873 = vmul.f32 %v863, %v869
    %v874 = vmul.f32 %v864, %v869
    %v876 = vlaneseq
    %v877 = vshrl.u32 %v876, 7
    %v878 = vsub.s32 0, %v877
    %v879 = vrot.slane %v812, %v878
    %v881 = vadd.f32 %v871, %v879
    %v882 = vadd.f32 %v872, %v879
    %v883 = vadd.f32 %v873, %v879
    %v884 = vadd.f32 %v874, %v879
    %885 = vxpose.xlu0.b32.start [1/16] %v881, 128
    %886 = vxpose.xlu0.b32.cont [2/16] 0.0, 128
    %887 = vxpose.xlu0.b32.cont [3/16] 0.0, 128
    %888 = vxpose.xlu0.b32.cont [4/16] 0.0, 128
    %889 = vxpose.xlu0.b32.cont [5/16] 0.0, 128
    %890 = vxpose.xlu0.b32.cont [6/16] 0.0, 128
    %891 = vxpose.xlu0.b32.cont [7/16] 0.0, 128
    %892 = vxpose.xlu0.b32.cont [8/16] 0.0, 128
    %893 = vxpose.xlu0.b32.cont [9/16] 0.0, 128
    %894 = vxpose.xlu0.b32.cont [10/16] 0.0, 128
    %895 = vxpose.xlu0.b32.cont [11/16] 0.0, 128
    %896 = vxpose.xlu0.b32.cont [12/16] 0.0, 128
    %897 = vxpose.xlu0.b32.cont [13/16] 0.0, 128
    %898 = vxpose.xlu0.b32.cont [14/16] 0.0, 128
    %899 = vxpose.xlu0.b32.cont [15/16] 0.0, 128
    %900 = vxpose.xlu0.b32.end [16/16] 0.0, 128
    %v901 = vpop.trf.xlu0
    %v902 = vpop.trf.xlu0
    %v903 = vpop.trf.xlu0
    %v904 = vpop.trf.xlu0
    %v905 = vpop.trf.xlu0
    %v906 = vpop.trf.xlu0
    %v907 = vpop.trf.xlu0
    %v908 = vpop.trf.xlu0
    %v909 = vpop.trf.xlu0
    %v910 = vpop.trf.xlu0
    %v911 = vpop.trf.xlu0
    %v912 = vpop.trf.xlu0
    %v913 = vpop.trf.xlu0
    %v914 = vpop.trf.xlu0
    %v915 = vpop.trf.xlu0
    %v916 = vpop.trf.xlu0
    %917 = vxpose.xlu0.b32.start [1/16] %v882, 128
    %918 = vxpose.xlu0.b32.cont [2/16] 0.0, 128
    %919 = vxpose.xlu0.b32.cont [3/16] 0.0, 128
    %920 = vxpose.xlu0.b32.cont [4/16] 0.0, 128
    %921 = vxpose.xlu0.b32.cont [5/16] 0.0, 128
    %922 = vxpose.xlu0.b32.cont [6/16] 0.0, 128
    %923 = vxpose.xlu0.b32.cont [7/16] 0.0, 128
    %924 = vxpose.xlu0.b32.cont [8/16] 0.0, 128
    %925 = vxpose.xlu0.b32.cont [9/16] 0.0, 128
    %926 = vxpose.xlu0.b32.cont [10/16] 0.0, 128
    %927 = vxpose.xlu0.b32.cont [11/16] 0.0, 128
    %928 = vxpose.xlu0.b32.cont [12/16] 0.0, 128
    %929 = vxpose.xlu0.b32.cont [13/16] 0.0, 128
    %930 = vxpose.xlu0.b32.cont [14/16] 0.0, 128
    %931 = vxpose.xlu0.b32.cont [15/16] 0.0, 128
    %932 = vxpose.xlu0.b32.end [16/16] 0.0, 128
    %v933 = vpop.trf.xlu0
    %v934 = vpop.trf.xlu0
    %v935 = vpop.trf.xlu0
    %v936 = vpop.trf.xlu0
    %v937 = vpop.trf.xlu0
    %v938 = vpop.trf.xlu0
    %v939 = vpop.trf.xlu0
    %v940 = vpop.trf.xlu0
    %v941 = vpop.trf.xlu0
    %v942 = vpop.trf.xlu0
    %v943 = vpop.trf.xlu0
    %v944 = vpop.trf.xlu0
    %v945 = vpop.trf.xlu0
    %v946 = vpop.trf.xlu0
    %v947 = vpop.trf.xlu0
    %v948 = vpop.trf.xlu0
    %949 = vxpose.xlu0.b32.start [1/16] %v883, 128
    %950 = vxpose.xlu0.b32.cont [2/16] 0.0, 128
    %951 = vxpose.xlu0.b32.cont [3/16] 0.0, 128
    %952 = vxpose.xlu0.b32.cont [4/16] 0.0, 128
    %953 = vxpose.xlu0.b32.cont [5/16] 0.0, 128
    %954 = vxpose.xlu0.b32.cont [6/16] 0.0, 128
    %955 = vxpose.xlu0.b32.cont [7/16] 0.0, 128
    %956 = vxpose.xlu0.b32.cont [8/16] 0.0, 128
    %957 = vxpose.xlu0.b32.cont [9/16] 0.0, 128
    %958 = vxpose.xlu0.b32.cont [10/16] 0.0, 128
    %959 = vxpose.xlu0.b32.cont [11/16] 0.0, 128
    %960 = vxpose.xlu0.b32.cont [12/16] 0.0, 128
    %961 = vxpose.xlu0.b32.cont [13/16] 0.0, 128
    %962 = vxpose.xlu0.b32.cont [14/16] 0.0, 128
    %963 = vxpose.xlu0.b32.cont [15/16] 0.0, 128
    %964 = vxpose.xlu0.b32.end [16/16] 0.0, 128
    %v965 = vpop.trf.xlu0
    %v966 = vpop.trf.xlu0
    %v967 = vpop.trf.xlu0
    %v968 = vpop.trf.xlu0
    %v969 = vpop.trf.xlu0
    %v970 = vpop.trf.xlu0
    %v971 = vpop.trf.xlu0
    %v972 = vpop.trf.xlu0
    %v973 = vpop.trf.xlu0
    %v974 = vpop.trf.xlu0
    %v975 = vpop.trf.xlu0
    %v976 = vpop.trf.xlu0
    %v977 = vpop.trf.xlu0
    %v978 = vpop.trf.xlu0
    %v979 = vpop.trf.xlu0
    %v980 = vpop.trf.xlu0
    %981 = vxpose.xlu0.b32.start [1/16] %v884, 128
    %982 = vxpose.xlu0.b32.cont [2/16] 0.0, 128
    %983 = vxpose.xlu0.b32.cont [3/16] 0.0, 128
    %984 = vxpose.xlu0.b32.cont [4/16] 0.0, 128
    %985 = vxpose.xlu0.b32.cont [5/16] 0.0, 128
    %986 = vxpose.xlu0.b32.cont [6/16] 0.0, 128
    %987 = vxpose.xlu0.b32.cont [7/16] 0.0, 128
    %988 = vxpose.xlu0.b32.cont [8/16] 0.0, 128
    %989 = vxpose.xlu0.b32.cont [9/16] 0.0, 128
    %990 = vxpose.xlu0.b32.cont [10/16] 0.0, 128
    %991 = vxpose.xlu0.b32.cont [11/16] 0.0, 128
    %992 = vxpose.xlu0.b32.cont [12/16] 0.0, 128
    %993 = vxpose.xlu0.b32.cont [13/16] 0.0, 128
    %994 = vxpose.xlu0.b32.cont [14/16] 0.0, 128
    %995 = vxpose.xlu0.b32.cont [15/16] 0.0, 128
    %996 = vxpose.xlu0.b32.end [16/16] 0.0, 128
    %v997 = vpop.trf.xlu0
    %v998 = vpop.trf.xlu0
    %v999 = vpop.trf.xlu0
    %v1000 = vpop.trf.xlu0
    %v1001 = vpop.trf.xlu0
    %v1002 = vpop.trf.xlu0
    %v1003 = vpop.trf.xlu0
    %v1004 = vpop.trf.xlu0
    %v1005 = vpop.trf.xlu0
    %v1006 = vpop.trf.xlu0
    %v1007 = vpop.trf.xlu0
    %v1008 = vpop.trf.xlu0
    %v1009 = vpop.trf.xlu0
    %v1010 = vpop.trf.xlu0
    %v1011 = vpop.trf.xlu0
    %v1012 = vpop.trf.xlu0
    %v1013 = vcombine.low %v901, %v965
    %v1014 = vcombine.high %v901, %v965
    %v1016 = vunpack.c.l.s4 1983009808
    %v1017 = vunpack.c.0.s8 %v1016
    %v1018 = vlaneseq
    %v1019 = vshrl.u32 %v1018, 7
    %v1020 = vsub.s32 %v1017, %v1019
    %v1021 = vrot.slane %v1013, %v1020
    %v1023 = vunpack.c.l.s4 1983009808
    %v1024 = vunpack.c.0.s8 %v1023
    %v1025 = vlaneseq
    %v1026 = vshrl.u32 %v1025, 7
    %v1027 = vsub.s32 %v1024, %v1026
    %v1028 = vrot.slane %v1014, %v1027
    %v1029 = vcombine.low %v933, %v997
    %v1030 = vcombine.high %v933, %v997
    %v1032 = vunpack.c.l.s4 1983009808
    %v1033 = vunpack.c.0.s8 %v1032
    %v1034 = vlaneseq
    %v1035 = vshrl.u32 %v1034, 7
    %v1036 = vsub.s32 %v1033, %v1035
    %v1037 = vrot.slane %v1029, %v1036
    %v1039 = vunpack.c.l.s4 1983009808
    %v1040 = vunpack.c.0.s8 %v1039
    %v1041 = vlaneseq
    %v1042 = vshrl.u32 %v1041, 7
    %v1043 = vsub.s32 %v1040, %v1042
    %v1044 = vrot.slane %v1030, %v1043
    %v1045 = vcombine.low %v1021, %v1037
    %v1046 = vcombine.high %v1021, %v1037
    %v1048 = vunpack.c.l.s4 1934713408
    %v1049 = vunpack.c.0.s8 %v1048
    %v1050 = vlaneseq
    %v1051 = vshrl.u32 %v1050, 7
    %v1052 = vsub.s32 %v1049, %v1051
    %v1053 = vrot.slane %v1045, %v1052
    %v1055 = vunpack.c.l.s4 1934713408
    %v1056 = vunpack.c.0.s8 %v1055
    %v1057 = vlaneseq
    %v1058 = vshrl.u32 %v1057, 7
    %v1059 = vsub.s32 %v1056, %v1058
    %v1060 = vrot.slane %v1046, %v1059
    %v1061 = vcombine.low %v1028, %v1044
    %v1062 = vcombine.high %v1028, %v1044
    %v1064 = vunpack.c.l.s4 1934713408
    %v1065 = vunpack.c.0.s8 %v1064
    %v1066 = vlaneseq
    %v1067 = vshrl.u32 %v1066, 7
    %v1068 = vsub.s32 %v1065, %v1067
    %v1069 = vrot.slane %v1061, %v1068
    %v1071 = vunpack.c.l.s4 1934713408
    %v1072 = vunpack.c.0.s8 %v1071
    %v1073 = vlaneseq
    %v1074 = vshrl.u32 %v1073, 7
    %v1075 = vsub.s32 %v1072, %v1074
    %v1076 = vrot.slane %v1062, %v1075
    %v1077 = vcombine.high %v1053, 0.0
    %v1078 = vcombine.high %v1060, 0.0
    %v1079 = vcombine.high %v1069, 0.0
    %v1080 = vcombine.high %v1076, 0.0
    %v1081 = vcombine.low %v902, %v966
    %v1082 = vcombine.high %v902, %v966
    %v1084 = vunpack.c.l.s4 1983009808
    %v1085 = vunpack.c.0.s8 %v1084
    %v1086 = vlaneseq
    %v1087 = vshrl.u32 %v1086, 7
    %v1088 = vsub.s32 %v1085, %v1087
    %v1089 = vrot.slane %v1081, %v1088
    %v1091 = vunpack.c.l.s4 1983009808
    %v1092 = vunpack.c.0.s8 %v1091
    %v1093 = vlaneseq
    %v1094 = vshrl.u32 %v1093, 7
    %v1095 = vsub.s32 %v1092, %v1094
    %v1096 = vrot.slane %v1082, %v1095
    %v1097 = vcombine.low %v934, %v998
    %v1098 = vcombine.high %v934, %v998
    %v1100 = vunpack.c.l.s4 1983009808
    %v1101 = vunpack.c.0.s8 %v1100
    %v1102 = vlaneseq
    %v1103 = vshrl.u32 %v1102, 7
    %v1104 = vsub.s32 %v1101, %v1103
    %v1105 = vrot.slane %v1097, %v1104
    %v1107 = vunpack.c.l.s4 1983009808
    %v1108 = vunpack.c.0.s8 %v1107
    %v1109 = vlaneseq
    %v1110 = vshrl.u32 %v1109, 7
    %v1111 = vsub.s32 %v1108, %v1110
    %v1112 = vrot.slane %v1098, %v1111
    %v1113 = vcombine.low %v1089, %v1105
    %v1114 = vcombine.high %v1089, %v1105
    %v1116 = vunpack.c.l.s4 1934713408
    %v1117 = vunpack.c.0.s8 %v1116
    %v1118 = vlaneseq
    %v1119 = vshrl.u32 %v1118, 7
    %v1120 = vsub.s32 %v1117, %v1119
    %v1121 = vrot.slane %v1113, %v1120
    %v1123 = vunpack.c.l.s4 1934713408
    %v1124 = vunpack.c.0.s8 %v1123
    %v1125 = vlaneseq
    %v1126 = vshrl.u32 %v1125, 7
    %v1127 = vsub.s32 %v1124, %v1126
    %v1128 = vrot.slane %v1114, %v1127
    %v1129 = vcombine.low %v1096, %v1112
    %v1130 = vcombine.high %v1096, %v1112
    %v1132 = vunpack.c.l.s4 1934713408
    %v1133 = vunpack.c.0.s8 %v1132
    %v1134 = vlaneseq
    %v1135 = vshrl.u32 %v1134, 7
    %v1136 = vsub.s32 %v1133, %v1135
    %v1137 = vrot.slane %v1129, %v1136
    %v1139 = vunpack.c.l.s4 1934713408
    %v1140 = vunpack.c.0.s8 %v1139
    %v1141 = vlaneseq
    %v1142 = vshrl.u32 %v1141, 7
    %v1143 = vsub.s32 %v1140, %v1142
    %v1144 = vrot.slane %v1130, %v1143
    %v1145 = vcombine.high %v1121, 0.0
    %v1146 = vcombine.high %v1128, 0.0
    %v1147 = vcombine.high %v1137, 0.0
    %v1148 = vcombine.high %v1144, 0.0
    %1150 = vrot.lane.b32.xlu0 %v1077, 8
    %v1151 = vpop.permute.xlu0 %1150
    %1154 = vrot.lane.b32.xlu0 %v1060, 16
    %v1155 = vpop.permute.xlu0 %1154
    %1158 = vrot.lane.b32.xlu0 %v1078, 24
    %v1159 = vpop.permute.xlu0 %1158
    %1162 = vrot.lane.b32.xlu0 %v1069, 32
    %v1163 = vpop.permute.xlu0 %1162
    %1166 = vrot.lane.b32.xlu0 %v1079, 40
    %v1167 = vpop.permute.xlu0 %1166
    %1170 = vrot.lane.b32.xlu0 %v1076, 48
    %v1171 = vpop.permute.xlu0 %1170
    %1174 = vrot.lane.b32.xlu0 %v1080, 56
    %v1175 = vpop.permute.xlu0 %1174
    %1178 = vrot.lane.b32.xlu0 %v1121, 64
    %v1179 = vpop.permute.xlu0 %1178
    %1182 = vrot.lane.b32.xlu0 %v1145, 72
    %v1183 = vpop.permute.xlu0 %1182
    %1186 = vrot.lane.b32.xlu0 %v1128, 80
    %v1187 = vpop.permute.xlu0 %1186
    %1190 = vrot.lane.b32.xlu0 %v1146, 88
    %v1191 = vpop.permute.xlu0 %1190
    %1194 = vrot.lane.b32.xlu0 %v1137, 96
    %v1195 = vpop.permute.xlu0 %1194
    %1198 = vrot.lane.b32.xlu0 %v1147, 104
    %v1199 = vpop.permute.xlu0 %1198
    %1202 = vrot.lane.b32.xlu0 %v1144, 112
    %v1203 = vpop.permute.xlu0 %1202
    %1206 = vrot.lane.b32.xlu0 %v1148, 120
    %v1207 = vpop.permute.xlu0 %1206
    %vm1209 = vcmask 64512
    %v1210 = vsel %vm1209, %v1053, %v1151
    %v1211 = vsel %vm346, %v1210, %v1155
    %vm1212 = vcmask 195584
    %v1213 = vsel %vm1212, %v1211, %v1159
    %v1214 = vsel %vm444, %v1213, %v1163
    %vm1215 = vcmask 326656
    %v1216 = vsel %vm1215, %v1214, %v1167
    %vm1217 = vcmask 392192
    %v1218 = vsel %vm1217, %v1216, %v1171
    %vm1219 = vcmask 457728
    %v1220 = vsel %vm1219, %v1218, %v1175
    %vm1221 = vcmask 523264
    %v1222 = vsel %vm1221, %v1220, %v1179
    %vm1223 = vcmask 588800
    %v1224 = vsel %vm1223, %v1222, %v1183
    %vm1225 = vcmask 654336
    %v1226 = vsel %vm1225, %v1224, %v1187
    %vm1227 = vcmask 719872
    %v1228 = vsel %vm1227, %v1226, %v1191
    %vm1229 = vcmask 785408
    %v1230 = vsel %vm1229, %v1228, %v1195
    %vm1231 = vcmask 850944
    %v1232 = vsel %vm1231, %v1230, %v1199
    %vm1233 = vcmask 916480
    %v1234 = vsel %vm1233, %v1232, %v1203
    %vm1235 = vcmask 982016
    %v1236 = vsel %vm1235, %v1234, %v1207
    %1237 = vst [vmem:[#allocation2] sm:$0xf] %v1236
    // Predicated region
    $region38: #{tpu_custom_call.1} parent=1 // pred_check
      _
    $region39: #{tpu_custom_call.1} parent=1 // pred_check_branch
      %1239 = sbr.rel (0) target = $region41
    $region40: #{tpu_custom_call.1} parent=1 // pred_region
      %s1241 = ssub.s32 64, 64
      %1242 = vsyncadd [#allocation3], %s1241
      %s1244 = sshll.u32 [#allocation2], 4
      %s1245 = int_to_ptr.vmem [resolvable:$true] %s1244
      %1247 = dma.vmem_to_hbm [thread:$0]  %s1245, 64, %s9, [#allocation3]
    $region41: #{tpu_custom_call.1} parent=1 // pred_fallthru
      _
    // Predicated region
    $region42: #{tpu_custom_call.1} parent=1 // pred_check
      _
    $region43: #{tpu_custom_call.1} parent=1 // pred_check_branch
      %1249 = sbr.rel (0) target = $region45
    $region44: #{tpu_custom_call.1} parent=1 // pred_region
      %1250 = dma.done [#allocation3], 64
    $region45: #{tpu_custom_call.1} parent=1 // pred_fallthru
      _
    %1251 = vsyncpa [#allocation3], 1

// kernel: tpu_custom_call.1
$region0: #{tpu_custom_call.1}
  #allocation0 [shape = 'u32[]', space=smem, size = 0x4, offset = 0x4, fixed_abs, tag = 'smem constant byte address 0x4 - core index']
  #allocation1 [shape = 'u32[144,128]{1,0:T(1,128)}', space=vmem, size = 0x12000, scoped, tag = 'internal scratch']
  %s0 = inlined_call_operand.vmem [shape: f32[4,16,8], index: 0, kind: input, shape index: {}]
  %s1 = inlined_call_operand.vmem [shape: f32[16,32], index: 1, kind: input, shape index: {}]
  %s2 = inlined_call_operand.vmem [shape: f32[32,16], index: 2, kind: input, shape index: {}]
  %s3 = inlined_call_operand.vmem [shape: f32[16,16], index: 3, kind: input, shape index: {}]
  %s4 = inlined_call_operand.vmem [shape: f32[1,16], index: 4, kind: input, shape index: {}]
  %s5 = inlined_call_operand.vmem [shape: f32[1,16], index: 5, kind: input, shape index: {}]
  %s6 = inlined_call_operand.vmem [shape: f32[1,16], index: 6, kind: input, shape index: {}]
  %s7 = inlined_call_operand.vmem [shape: f32[1,16], index: 7, kind: input, shape index: {}]
  %s8 = inlined_call_operand.vmem [shape: f32[1,16], index: 8, kind: input, shape index: {}]
  %s9 = inlined_call_operand.vmem [shape: f32[4,16,8], index: 9, kind: output, shape index: {}]
  %s10 = sld [smem:[#allocation0]]
  $region46: #{tpu_custom_call.1} parent=0
    _
  %s12 = ssub.s32 1, %s10
  %s13 = scalar_select 0, %s12, %s10
  // Predicated region
  $region2: #{tpu_custom_call.1} parent=0 // pred_check
    _
  $region3: #{tpu_custom_call.1} parent=0 // pred_check_branch
    %15 = sbr.rel (0) target = $region5
  $region4: #{tpu_custom_call.1} parent=0 // pred_region
    _
  $region5: #{tpu_custom_call.1} parent=0 // pred_fallthru
    _
  // Predicated region
  $region6: #{tpu_custom_call.1} parent=0 // pred_check
    _
  $region7: #{tpu_custom_call.1} parent=0 // pred_check_branch
    %17 = sbr.rel (0) target = $region9
  $region8: #{tpu_custom_call.1} parent=0 // pred_region
    _
  $region9: #{tpu_custom_call.1} parent=0 // pred_fallthru
    _
  // Predicated region
  $region10: #{tpu_custom_call.1} parent=0 // pred_check
    _
  $region11: #{tpu_custom_call.1} parent=0 // pred_check_branch
    %19 = sbr.rel (0) target = $region13
  $region12: #{tpu_custom_call.1} parent=0 // pred_region
    _
  $region13: #{tpu_custom_call.1} parent=0 // pred_fallthru
    _
  // Predicated region
  $region14: #{tpu_custom_call.1} parent=0 // pred_check
    _
  $region15: #{tpu_custom_call.1} parent=0 // pred_check_branch
    %21 = sbr.rel (0) target = $region17
  $region16: #{tpu_custom_call.1} parent=0 // pred_region
    _
  $region17: #{tpu_custom_call.1} parent=0 // pred_fallthru
    _
  // Predicated region
  $region18: #{tpu_custom_call.1} parent=0 // pred_check
    _
  $region19: #{tpu_custom_call.1} parent=0 // pred_check_branch
    %23 = sbr.rel (0) target = $region21
  $region20: #{tpu_custom_call.1} parent=0 // pred_region
    _
  $region21: #{tpu_custom_call.1} parent=0 // pred_fallthru
    _
  // Predicated region
  $region22: #{tpu_custom_call.1} parent=0 // pred_check
    _
  $region23: #{tpu_custom_call.1} parent=0 // pred_check_branch
    %25 = sbr.rel (0) target = $region25
  $region24: #{tpu_custom_call.1} parent=0 // pred_region
    _
  $region25: #{tpu_custom_call.1} parent=0 // pred_fallthru
    _
  // Predicated region
  $region26: #{tpu_custom_call.1} parent=0 // pred_check
    _
  $region27: #{tpu_custom_call.1} parent=0 // pred_check_branch
    %27 = sbr.rel (0) target = $region29
  $region28: #{tpu_custom_call.1} parent=0 // pred_region
    _
  $region29: #{tpu_custom_call.1} parent=0 // pred_fallthru
    _
  // Predicated region
  $region30: #{tpu_custom_call.1} parent=0 // pred_check
    _
  $region31: #{tpu_custom_call.1} parent=0 // pred_check_branch
    %29 = sbr.rel (0) target = $region33
  $region32: #{tpu_custom_call.1} parent=0 // pred_region
    _
  $region33: #{tpu_custom_call.1} parent=0 // pred_fallthru
    _
  // Predicated region
  $region34: #{tpu_custom_call.1} parent=0 // pred_check
    _
  $region35: #{tpu_custom_call.1} parent=0 // pred_check_branch
    %31 = sbr.rel (0) target = $region37
  $region36: #{tpu_custom_call.1} parent=0 // pred_region
    _
  $region37: #{tpu_custom_call.1} parent=0 // pred_fallthru
    _
  %v32 = vld [vmem:[%s0] sm:$0xff]
  %v33 = vld [vmem:[%s0 + $0x8] sm:$0xff]
  %v34 = vld [vmem:[%s0 + $0x10] sm:$0xff]
  %v35 = vld [vmem:[%s0 + $0x18] sm:$0xff]
  %v36 = vld [vmem:[%s0 + $0x20] sm:$0xff]
  %v37 = vld [vmem:[%s0 + $0x28] sm:$0xff]
  %v38 = vld [vmem:[%s0 + $0x30] sm:$0xff]
  %v39 = vld [vmem:[%s0 + $0x38] sm:$0xff]
  %40 = vxpose.xlu0.b32.start [1/16] %v32, 128
  %41 = vxpose.xlu0.b32.cont [2/16] %v33, 128
  %42 = vxpose.xlu0.b32.cont [3/16] 0.0, 128
  %43 = vxpose.xlu0.b32.cont [4/16] 0.0, 128
  %44 = vxpose.xlu0.b32.cont [5/16] 0.0, 128
  %45 = vxpose.xlu0.b32.cont [6/16] 0.0, 128
  %46 = vxpose.xlu0.b32.cont [7/16] 0.0, 128
  %47 = vxpose.xlu0.b32.cont [8/16] 0.0, 128
  %48 = vxpose.xlu0.b32.cont [9/16] 0.0, 128
  %49 = vxpose.xlu0.b32.cont [10/16] 0.0, 128
  %50 = vxpose.xlu0.b32.cont [11/16] 0.0, 128
  %51 = vxpose.xlu0.b32.cont [12/16] 0.0, 128
  %52 = vxpose.xlu0.b32.cont [13/16] 0.0, 128
  %53 = vxpose.xlu0.b32.cont [14/16] 0.0, 128
  %54 = vxpose.xlu0.b32.cont [15/16] 0.0, 128
  %55 = vxpose.xlu0.b32.end [16/16] 0.0, 128
  %v56 = vpop.trf.xlu0
  %v57 = vpop.trf.xlu0
  %v58 = vpop.trf.xlu0
  %v59 = vpop.trf.xlu0
  %v60 = vpop.trf.xlu0
  %v61 = vpop.trf.xlu0
  %v62 = vpop.trf.xlu0
  %v63 = vpop.trf.xlu0
  %v64 = vpop.trf.xlu0
  %v65 = vpop.trf.xlu0
  %v66 = vpop.trf.xlu0
  %v67 = vpop.trf.xlu0
  %v68 = vpop.trf.xlu0
  %v69 = vpop.trf.xlu0
  %v70 = vpop.trf.xlu0
  %v71 = vpop.trf.xlu0
  %72 = vxpose.xlu0.b32.start [1/16] %v34, 128
  %73 = vxpose.xlu0.b32.cont [2/16] %v35, 128
  %74 = vxpose.xlu0.b32.cont [3/16] 0.0, 128
  %75 = vxpose.xlu0.b32.cont [4/16] 0.0, 128
  %76 = vxpose.xlu0.b32.cont [5/16] 0.0, 128
  %77 = vxpose.xlu0.b32.cont [6/16] 0.0, 128
  %78 = vxpose.xlu0.b32.cont [7/16] 0.0, 128
  %79 = vxpose.xlu0.b32.cont [8/16] 0.0, 128
  %80 = vxpose.xlu0.b32.cont [9/16] 0.0, 128
  %81 = vxpose.xlu0.b32.cont [10/16] 0.0, 128
  %82 = vxpose.xlu0.b32.cont [11/16] 0.0, 128
  %83 = vxpose.xlu0.b32.cont [12/16] 0.0, 128
  %84 = vxpose.xlu0.b32.cont [13/16] 0.0, 128
  %85 = vxpose.xlu0.b32.cont [14/16] 0.0, 128
  %86 = vxpose.xlu0.b32.cont [15/16] 0.0, 128
  %87 = vxpose.xlu0.b32.end [16/16] 0.0, 128
  %v88 = vpop.trf.xlu0
  %v89 = vpop.trf.xlu0
  %v90 = vpop.trf.xlu0
  %v91 = vpop.trf.xlu0
  %v92 = vpop.trf.xlu0
  %v93 = vpop.trf.xlu0
  %v94 = vpop.trf.xlu0
  %v95 = vpop.trf.xlu0
  %v96 = vpop.trf.xlu0
  %v97 = vpop.trf.xlu0
  %v98 = vpop.trf.xlu0
  %v99 = vpop.trf.xlu0
  %v100 = vpop.trf.xlu0
  %v101 = vpop.trf.xlu0
  %v102 = vpop.trf.xlu0
  %v103 = vpop.trf.xlu0
  %104 = vxpose.xlu0.b32.start [1/16] %v36, 128
  %105 = vxpose.xlu0.b32.cont [2/16] %v37, 128
  %106 = vxpose.xlu0.b32.cont [3/16] 0.0, 128
  %107 = vxpose.xlu0.b32.cont [4/16] 0.0, 128
  %108 = vxpose.xlu0.b32.cont [5/16] 0.0, 128
  %109 = vxpose.xlu0.b32.cont [6/16] 0.0, 128
  %110 = vxpose.xlu0.b32.cont [7/16] 0.0, 128
  %111 = vxpose.xlu0.b32.cont [8/16] 0.0, 128
  %112 = vxpose.xlu0.b32.cont [9/16] 0.0, 128
  %113 = vxpose.xlu0.b32.cont [10/16] 0.0, 128
  %114 = vxpose.xlu0.b32.cont [11/16] 0.0, 128
  %115 = vxpose.xlu0.b32.cont [12/16] 0.0, 128
  %116 = vxpose.xlu0.b32.cont [13/16] 0.0, 128
  %117 = vxpose.xlu0.b32.cont [14/16] 0.0, 128
  %118 = vxpose.xlu0.b32.cont [15/16] 0.0, 128
  %119 = vxpose.xlu0.b32.end [16/16] 0.0, 128
  %v120 = vpop.trf.xlu0
  %v121 = vpop.trf.xlu0
  %v122 = vpop.trf.xlu0
  %v123 = vpop.trf.xlu0
  %v124 = vpop.trf.xlu0
  %v125 = vpop.trf.xlu0
  %v126 = vpop.trf.xlu0
  %v127 = vpop.trf.xlu0
  %v128 = vpop.trf.xlu0
  %v129 = vpop.trf.xlu0
  %v130 = vpop.trf.xlu0
  %v131 = vpop.trf.xlu0
  %v132 = vpop.trf.xlu0
  %v133 = vpop.trf.xlu0
  %v134 = vpop.trf.xlu0
  %v135 = vpop.trf.xlu0
  %136 = vxpose.xlu0.b32.start [1/16] %v38, 128
  %137 = vxpose.xlu0.b32.cont [2/16] %v39, 128
  %138 = vxpose.xlu0.b32.cont [3/16] 0.0, 128
  %139 = vxpose.xlu0.b32.cont [4/16] 0.0, 128
  %140 = vxpose.xlu0.b32.cont [5/16] 0.0, 128
  %141 = vxpose.xlu0.b32.cont [6/16] 0.0, 128
  %142 = vxpose.xlu0.b32.cont [7/16] 0.0, 128
  %143 = vxpose.xlu0.b32.cont [8/16] 0.0, 128
  %144 = vxpose.xlu0.b32.cont [9/16] 0.0, 128
  %145 = vxpose.xlu0.b32.cont [10/16] 0.0, 128
  %146 = vxpose.xlu0.b32.cont [11/16] 0.0, 128
  %147 = vxpose.xlu0.b32.cont [12/16] 0.0, 128
  %148 = vxpose.xlu0.b32.cont [13/16] 0.0, 128
  %149 = vxpose.xlu0.b32.cont [14/16] 0.0, 128
  %150 = vxpose.xlu0.b32.cont [15/16] 0.0, 128
  %151 = vxpose.xlu0.b32.end [16/16] 0.0, 128
  %v152 = vpop.trf.xlu0
  %v153 = vpop.trf.xlu0
  %v154 = vpop.trf.xlu0
  %v155 = vpop.trf.xlu0
  %v156 = vpop.trf.xlu0
  %v157 = vpop.trf.xlu0
  %v158 = vpop.trf.xlu0
  %v159 = vpop.trf.xlu0
  %v160 = vpop.trf.xlu0
  %v161 = vpop.trf.xlu0
  %v162 = vpop.trf.xlu0
  %v163 = vpop.trf.xlu0
  %v164 = vpop.trf.xlu0
  %v165 = vpop.trf.xlu0
  %v166 = vpop.trf.xlu0
  %v167 = vpop.trf.xlu0
  %v168 = vld [vmem:[%s1] sm:$0xff]
  %v169 = vld [vmem:[%s1 + $0x8] sm:$0xff]
  %vm170 = vcmask 130048
  %v172 = vsel %vm170, %v56, 0
  %v175 = vsel %vm170, %v88, 0
  %v178 = vsel %vm170, %v120, 0
  %v181 = vsel %vm170, %v152, 0
  %183 = vmatprep.subr.mxu0 0.0
  %184 = vmatpush1.msra.mxu0 %v168
  %185 = vmatprep.subr.mxu0 0.0
  %186 = vmatpush1.msra.mxu0 %v169
  %187 = vmatprep.subr.mxu0 0.0
  %188 = vmatpush1.msra.mxu0 0.0
  %189 = vmatprep.subr.mxu0 0.0
  %190 = vmatpush1.msra.mxu0 0.0
  %191 = vmatprep.subr.mxu0 0.0
  %192 = vmatpush1.msra.mxu0 0.0
  %193 = vmatprep.subr.mxu0 0.0
  %194 = vmatpush1.msra.mxu0 0.0
  %195 = vmatprep.subr.mxu0 0.0
  %196 = vmatpush1.msra.mxu0 0.0
  %197 = vmatprep.subr.mxu0 0.0
  %198 = vmatpush1.msra.mxu0 0.0
  %199 = vmatprep.subr.mxu0 0.0
  %200 = vmatpush1.msra.mxu0 0.0
  %201 = vmatprep.subr.mxu0 0.0
  %202 = vmatpush1.msra.mxu0 0.0
  %203 = vmatprep.subr.mxu0 0.0
  %204 = vmatpush1.msra.mxu0 0.0
  %205 = vmatprep.subr.mxu0 0.0
  %206 = vmatpush1.msra.mxu0 0.0
  %207 = vmatprep.subr.mxu0 0.0
  %208 = vmatpush1.msra.mxu0 0.0
  %209 = vmatprep.subr.mxu0 0.0
  %210 = vmatpush1.msra.mxu0 0.0
  %211 = vmatprep.subr.mxu0 0.0
  %212 = vmatpush1.msra.mxu0 0.0
  %213 = vmatprep.subr.mxu0 0.0
  %214 = vmatpush1.msra.mxu0 0.0
  %215 = vmatprep.subr.mxu0 0.0
  %216 = vmatpush1.msra.mxu0 0.0
  %217 = vmatprep.subr.mxu0 0.0
  %218 = vmatpush1.msra.mxu0 0.0
  %219 = vmatprep.subr.mxu0 0.0
  %220 = vmatpush1.msra.mxu0 0.0
  %221 = vmatprep.subr.mxu0 0.0
  %222 = vmatpush1.msra.mxu0 0.0
  %223 = vmatprep.subr.mxu0 0.0
  %224 = vmatpush1.msra.mxu0 0.0
  %225 = vmatprep.subr.mxu0 0.0
  %226 = vmatpush1.msra.mxu0 0.0
  %227 = vmatprep.subr.mxu0 0.0
  %228 = vmatpush1.msra.mxu0 0.0
  %229 = vmatprep.subr.mxu0 0.0
  %230 = vmatpush1.msra.mxu0 0.0
  %231 = vmatprep.subr.mxu0 0.0
  %232 = vmatpush1.msra.mxu0 0.0
  %233 = vmatprep.subr.mxu0 0.0
  %234 = vmatpush1.msra.mxu0 0.0
  %235 = vmatprep.subr.mxu0 0.0
  %236 = vmatpush1.msra.mxu0 0.0
  %237 = vmatprep.subr.mxu0 0.0
  %238 = vmatpush1.msra.mxu0 0.0
  %239 = vmatprep.subr.mxu0 0.0
  %240 = vmatpush1.msra.mxu0 0.0
  %241 = vmatprep.subr.mxu0 0.0
  %242 = vmatpush1.msra.mxu0 0.0
  %243 = vmatprep.subr.mxu0 0.0
  %244 = vmatpush1.msra.mxu0 0.0
  %245 = vmatprep.subr.mxu0 0.0
  %246 = vmatpush1.msra.mxu0 0.0
  %247 = vmatprep.mubr.f32.mxu0 0.0
  %248 = vmatmul.mubr.f32.gmra.mrb[0].mxu0 %v172
  %v249 = vpop.f32.mrb[0].mxu0
  %v250 = vadd.f32 0.0, %v249
  %v251 = vpop.f32.mrb[0].mxu0
  %252 = vmatprep.mubr.f32.mxu0 0.0
  %253 = vmatmul.mubr.f32.gmra.mrb[0].mxu0 %v175
  %v254 = vpop.f32.mrb[0].mxu0
  %v255 = vadd.f32 0.0, %v254
  %v256 = vpop.f32.mrb[0].mxu0
  %257 = vmatprep.mubr.f32.mxu0 0.0
  %258 = vmatmul.mubr.f32.gmra.mrb[0].mxu0 %v178
  %v259 = vpop.f32.mrb[0].mxu0
  %v260 = vadd.f32 0.0, %v259
  %v261 = vpop.f32.mrb[0].mxu0
  %262 = vmatprep.mubr.f32.mxu0 0.0
  %263 = vmatmul.mubr.f32.gmra.mrb[0].mxu0 %v181
  %v264 = vpop.f32.mrb[0].mxu0
  %v265 = vadd.f32 0.0, %v264
  %v266 = vpop.f32.mrb[0].mxu0
  %267 = vdwg.mxu0
  %vm268 = vcmask 261120
  %v269 = vsel %vm268, %v250, -inf
  %v270 = vrot.slane %v269, 4
  %v271 = vmax.f32 %v269, %v270
  %v272 = vrot.slane %v271, 2
  %v273 = vmax.f32 %v271, %v272
  %v274 = vrot.slane %v273, 1
  %v275 = vmax.f32 %v273, %v274
  %v276 = vsel %vm268, %v255, -inf
  %v277 = vrot.slane %v276, 4
  %v278 = vmax.f32 %v276, %v277
  %v279 = vrot.slane %v278, 2
  %v280 = vmax.f32 %v278, %v279
  %v281 = vrot.slane %v280, 1
  %v282 = vmax.f32 %v280, %v281
  %v283 = vsel %vm268, %v260, -inf
  %v284 = vrot.slane %v283, 4
  %v285 = vmax.f32 %v283, %v284
  %v286 = vrot.slane %v285, 2
  %v287 = vmax.f32 %v285, %v286
  %v288 = vrot.slane %v287, 1
  %v289 = vmax.f32 %v287, %v288
  %v290 = vsel %vm268, %v265, -inf
  %v291 = vrot.slane %v290, 4
  %v292 = vmax.f32 %v290, %v291
  %v293 = vrot.slane %v292, 2
  %v294 = vmax.f32 %v292, %v293
  %v295 = vrot.slane %v294, 1
  %v296 = vmax.f32 %v294, %v295
  %v297 = vsub.f32 %v250, %v275
  %v298 = vsub.f32 %v255, %v282
  %v299 = vsub.f32 %v260, %v289
  %v300 = vsub.f32 %v265, %v296
  %v301 = vmul.f32 %v297, 1.442695
  %v302 = vpow.pop %v301
  %v303 = vmul.f32 %v298, 1.442695
  %v304 = vpow.pop %v303
  %v305 = vmul.f32 %v299, 1.442695
  %v306 = vpow.pop %v305
  %v307 = vmul.f32 %v300, 1.442695
  %v308 = vpow.pop %v307
  %v309 = vsel %vm268, %v302, 0.0
  %v310 = vrot.slane %v309, 4
  %v311 = vadd.f32 %v309, %v310
  %v312 = vrot.slane %v311, 2
  %v313 = vadd.f32 %v311, %v312
  %v314 = vrot.slane %v313, 1
  %v315 = vadd.f32 %v313, %v314
  %v316 = vsel %vm268, %v304, 0.0
  %v317 = vrot.slane %v316, 4
  %v318 = vadd.f32 %v316, %v317
  %v319 = vrot.slane %v318, 2
  %v320 = vadd.f32 %v318, %v319
  %v321 = vrot.slane %v320, 1
  %v322 = vadd.f32 %v320, %v321
  %v323 = vsel %vm268, %v306, 0.0
  %v324 = vrot.slane %v323, 4
  %v325 = vadd.f32 %v323, %v324
  %v326 = vrot.slane %v325, 2
  %v327 = vadd.f32 %v325, %v326
  %v328 = vrot.slane %v327, 1
  %v329 = vadd.f32 %v327, %v328
  %v330 = vsel %vm268, %v308, 0.0
  %v331 = vrot.slane %v330, 4
  %v332 = vadd.f32 %v330, %v331
  %v333 = vrot.slane %v332, 2
  %v334 = vadd.f32 %v332, %v333
  %v335 = vrot.slane %v334, 1
  %v336 = vadd.f32 %v334, %v335
  %v337 = vrcp.pop %v315
  %v338 = vmul.f32 %v302, %v337
  %v339 = vrcp.pop %v322
  %v340 = vmul.f32 %v304, %v339
  %v341 = vrcp.pop %v329
  %v342 = vmul.f32 %v306, %v341
  %v343 = vrcp.pop %v336
  %v344 = vmul.f32 %v308, %v343
  %v345 = vld [vmem:[%s2] sm:$0xff]
  %v346 = vld [vmem:[%s2 + $0x8] sm:$0xff]
  %v347 = vld [vmem:[%s2 + $0x10] sm:$0xff]
  %v348 = vld [vmem:[%s2 + $0x18] sm:$0xff]
  %v350 = vsel %vm268, %v338, 0
  %v353 = vsel %vm268, %v340, 0
  %v356 = vsel %vm268, %v342, 0
  %v359 = vsel %vm268, %v344, 0
  %361 = vmatprep.subr.mxu0 0.0
  %362 = vmatpush1.msra.mxu0 %v345
  %363 = vmatprep.subr.mxu0 0.0
  %364 = vmatpush1.msra.mxu0 %v346
  %365 = vmatprep.subr.mxu0 0.0
  %366 = vmatpush1.msra.mxu0 %v347
  %367 = vmatprep.subr.mxu0 0.0
  %368 = vmatpush1.msra.mxu0 %v348
  %369 = vmatprep.subr.mxu0 0.0
  %370 = vmatpush1.msra.mxu0 0.0
  %371 = vmatprep.subr.mxu0 0.0
  %372 = vmatpush1.msra.mxu0 0.0
  %373 = vmatprep.subr.mxu0 0.0
  %374 = vmatpush1.msra.mxu0 0.0
  %375 = vmatprep.subr.mxu0 0.0
  %376 = vmatpush1.msra.mxu0 0.0
  %377 = vmatprep.subr.mxu0 0.0
  %378 = vmatpush1.msra.mxu0 0.0
  %379 = vmatprep.subr.mxu0 0.0
  %380 = vmatpush1.msra.mxu0 0.0
  %381 = vmatprep.subr.mxu0 0.0
  %382 = vmatpush1.msra.mxu0 0.0
  %383 = vmatprep.subr.mxu0 0.0
  %384 = vmatpush1.msra.mxu0 0.0
  %385 = vmatprep.subr.mxu0 0.0
  %386 = vmatpush1.msra.mxu0 0.0
  %387 = vmatprep.subr.mxu0 0.0
  %388 = vmatpush1.msra.mxu0 0.0
  %389 = vmatprep.subr.mxu0 0.0
  %390 = vmatpush1.msra.mxu0 0.0
  %391 = vmatprep.subr.mxu0 0.0
  %392 = vmatpush1.msra.mxu0 0.0
  %393 = vmatprep.subr.mxu0 0.0
  %394 = vmatpush1.msra.mxu0 0.0
  %395 = vmatprep.subr.mxu0 0.0
  %396 = vmatpush1.msra.mxu0 0.0
  %397 = vmatprep.subr.mxu0 0.0
  %398 = vmatpush1.msra.mxu0 0.0
  %399 = vmatprep.subr.mxu0 0.0
  %400 = vmatpush1.msra.mxu0 0.0
  %401 = vmatprep.subr.mxu0 0.0
  %402 = vmatpush1.msra.mxu0 0.0
  %403 = vmatprep.subr.mxu0 0.0
  %404 = vmatpush1.msra.mxu0 0.0
  %405 = vmatprep.subr.mxu0 0.0
  %406 = vmatpush1.msra.mxu0 0.0
  %407 = vmatprep.subr.mxu0 0.0
  %408 = vmatpush1.msra.mxu0 0.0
  %409 = vmatprep.subr.mxu0 0.0
  %410 = vmatpush1.msra.mxu0 0.0
  %411 = vmatprep.subr.mxu0 0.0
  %412 = vmatpush1.msra.mxu0 0.0
  %413 = vmatprep.subr.mxu0 0.0
  %414 = vmatpush1.msra.mxu0 0.0
  %415 = vmatprep.subr.mxu0 0.0
  %416 = vmatpush1.msra.mxu0 0.0
  %417 = vmatprep.subr.mxu0 0.0
  %418 = vmatpush1.msra.mxu0 0.0
  %419 = vmatprep.subr.mxu0 0.0
  %420 = vmatpush1.msra.mxu0 0.0
  %421 = vmatprep.subr.mxu0 0.0
  %422 = vmatpush1.msra.mxu0 0.0
  %423 = vmatprep.subr.mxu0 0.0
  %424 = vmatpush1.msra.mxu0 0.0
  %425 = vmatprep.mubr.f32.mxu0 0.0
  %426 = vmatmul.mubr.f32.gmra.mrb[0].mxu0 %v350
  %v427 = vpop.f32.mrb[0].mxu0
  %v428 = vadd.f32 0.0, %v427
  %v429 = vpop.f32.mrb[0].mxu0
  %430 = vmatprep.mubr.f32.mxu0 0.0
  %431 = vmatmul.mubr.f32.gmra.mrb[0].mxu0 %v353
  %v432 = vpop.f32.mrb[0].mxu0
  %v433 = vadd.f32 0.0, %v432
  %v434 = vpop.f32.mrb[0].mxu0
  %435 = vmatprep.mubr.f32.mxu0 0.0
  %436 = vmatmul.mubr.f32.gmra.mrb[0].mxu0 %v356
  %v437 = vpop.f32.mrb[0].mxu0
  %v438 = vadd.f32 0.0, %v437
  %v439 = vpop.f32.mrb[0].mxu0
  %440 = vmatprep.mubr.f32.mxu0 0.0
  %441 = vmatmul.mubr.f32.gmra.mrb[0].mxu0 %v359
  %v442 = vpop.f32.mrb[0].mxu0
  %v443 = vadd.f32 0.0, %v442
  %v444 = vpop.f32.mrb[0].mxu0
  %445 = vdwg.mxu0
  %v446 = vadd.f32 %v56, %v428
  %v447 = vadd.f32 %v88, %v433
  %v448 = vadd.f32 %v120, %v438
  %v449 = vadd.f32 %v152, %v443
  %v450 = vld [vmem:[%s5] sm:$0x1]
  %v451 = vld [vmem:[%s6] sm:$0x1]
  %v452 = vsel %vm170, %v446, 0.0
  %453 = vadd.xlane.f32.xlu0 %v452
  %v454 = vpop.xlane.xlu0 %453
  %v455 = vsel %vm170, %v447, 0.0
  %456 = vadd.xlane.f32.xlu0 %v455
  %v457 = vpop.xlane.xlu0 %456
  %v458 = vsel %vm170, %v448, 0.0
  %459 = vadd.xlane.f32.xlu0 %v458
  %v460 = vpop.xlane.xlu0 %459
  %v461 = vsel %vm170, %v449, 0.0
  %462 = vadd.xlane.f32.xlu0 %v461
  %v463 = vpop.xlane.xlu0 %462
  %v464 = vrcp.pop 16.0
  %v465 = vmul.f32 %v454, %v464
  %v466 = vmul.f32 %v457, %v464
  %v467 = vmul.f32 %v460, %v464
  %v468 = vmul.f32 %v463, %v464
  %v469 = vsub.f32 %v446, %v465
  %v470 = vsub.f32 %v447, %v466
  %v471 = vsub.f32 %v448, %v467
  %v472 = vsub.f32 %v449, %v468
  %v473 = vmul.f32 %v469, %v469
  %v474 = vmul.f32 %v470, %v470
  %v475 = vmul.f32 %v471, %v471
  %v476 = vmul.f32 %v472, %v472
  %v477 = vsel %vm170, %v473, 0.0
  %478 = vadd.xlane.f32.xlu0 %v477
  %v479 = vpop.xlane.xlu0 %478
  %v480 = vsel %vm170, %v474, 0.0
  %481 = vadd.xlane.f32.xlu0 %v480
  %v482 = vpop.xlane.xlu0 %481
  %v483 = vsel %vm170, %v475, 0.0
  %484 = vadd.xlane.f32.xlu0 %v483
  %v485 = vpop.xlane.xlu0 %484
  %v486 = vsel %vm170, %v476, 0.0
  %487 = vadd.xlane.f32.xlu0 %v486
  %v488 = vpop.xlane.xlu0 %487
  %v489 = vmul.f32 %v479, %v464
  %v490 = vmul.f32 %v482, %v464
  %v491 = vmul.f32 %v485, %v464
  %v492 = vmul.f32 %v488, %v464
  %v493 = vadd.f32 %v489, 1e-05
  %v494 = vadd.f32 %v490, 1e-05
  %v495 = vadd.f32 %v491, 1e-05
  %v496 = vadd.f32 %v492, 1e-05
  %v497 = vrsqrt.pop %v493
  %v498 = vrsqrt.pop %v494
  %v499 = vrsqrt.pop %v495
  %v500 = vrsqrt.pop %v496
  %v501 = vmul.f32 %v469, %v497
  %v502 = vmul.f32 %v470, %v498
  %v503 = vmul.f32 %v471, %v499
  %v504 = vmul.f32 %v472, %v500
  %v506 = vlaneseq
  %v507 = vshrl.u32 %v506, 7
  %v508 = vsub.s32 0, %v507
  %v509 = vrot.slane %v450, %v508
  %v511 = vmul.f32 %v501, %v509
  %v512 = vmul.f32 %v502, %v509
  %v513 = vmul.f32 %v503, %v509
  %v514 = vmul.f32 %v504, %v509
  %v516 = vlaneseq
  %v517 = vshrl.u32 %v516, 7
  %v518 = vsub.s32 0, %v517
  %v519 = vrot.slane %v451, %v518
  %v521 = vadd.f32 %v511, %v519
  %v522 = vadd.f32 %v512, %v519
  %v523 = vadd.f32 %v513, %v519
  %v524 = vadd.f32 %v514, %v519
  %v525 = vld [vmem:[%s3] sm:$0xff]
  %v526 = vld [vmem:[%s3 + $0x8] sm:$0xff]
  %v527 = vld [vmem:[%s4] sm:$0x1]
  %v529 = vlaneseq
  %v530 = vshrl.u32 %v529, 7
  %v531 = vsub.s32 0, %v530
  %v532 = vrot.slane %v527, %v531
  %v535 = vsel %vm170, %v521, 0
  %v538 = vsel %vm170, %v522, 0
  %v541 = vsel %vm170, %v523, 0
  %v544 = vsel %vm170, %v524, 0
  %546 = vmatprep.subr.mxu0 0.0
  %547 = vmatpush1.msra.mxu0 %v525
  %548 = vmatprep.subr.mxu0 0.0
  %549 = vmatpush1.msra.mxu0 %v526
  %550 = vmatprep.subr.mxu0 0.0
  %551 = vmatpush1.msra.mxu0 0.0
  %552 = vmatprep.subr.mxu0 0.0
  %553 = vmatpush1.msra.mxu0 0.0
  %554 = vmatprep.subr.mxu0 0.0
  %555 = vmatpush1.msra.mxu0 0.0
  %556 = vmatprep.subr.mxu0 0.0
  %557 = vmatpush1.msra.mxu0 0.0
  %558 = vmatprep.subr.mxu0 0.0
  %559 = vmatpush1.msra.mxu0 0.0
  %560 = vmatprep.subr.mxu0 0.0
  %561 = vmatpush1.msra.mxu0 0.0
  %562 = vmatprep.subr.mxu0 0.0
  %563 = vmatpush1.msra.mxu0 0.0
  %564 = vmatprep.subr.mxu0 0.0
  %565 = vmatpush1.msra.mxu0 0.0
  %566 = vmatprep.subr.mxu0 0.0
  %567 = vmatpush1.msra.mxu0 0.0
  %568 = vmatprep.subr.mxu0 0.0
  %569 = vmatpush1.msra.mxu0 0.0
  %570 = vmatprep.subr.mxu0 0.0
  %571 = vmatpush1.msra.mxu0 0.0
  %572 = vmatprep.subr.mxu0 0.0
  %573 = vmatpush1.msra.mxu0 0.0
  %574 = vmatprep.subr.mxu0 0.0
  %575 = vmatpush1.msra.mxu0 0.0
  %576 = vmatprep.subr.mxu0 0.0
  %577 = vmatpush1.msra.mxu0 0.0
  %578 = vmatprep.subr.mxu0 0.0
  %579 = vmatpush1.msra.mxu0 0.0
  %580 = vmatprep.subr.mxu0 0.0
  %581 = vmatpush1.msra.mxu0 0.0
  %582 = vmatprep.subr.mxu0 0.0
  %583 = vmatpush1.msra.mxu0 0.0
  %584 = vmatprep.subr.mxu0 0.0
  %585 = vmatpush1.msra.mxu0 0.0
  %586 = vmatprep.subr.mxu0 0.0
  %587 = vmatpush1.msra.mxu0 0.0
  %588 = vmatprep.subr.mxu0 0.0
  %589 = vmatpush1.msra.mxu0 0.0
  %590 = vmatprep.subr.mxu0 0.0
  %591 = vmatpush1.msra.mxu0 0.0
  %592 = vmatprep.subr.mxu0 0.0
  %593 = vmatpush1.msra.mxu0 0.0
  %594 = vmatprep.subr.mxu0 0.0
  %595 = vmatpush1.msra.mxu0 0.0
  %596 = vmatprep.subr.mxu0 0.0
  %597 = vmatpush1.msra.mxu0 0.0
  %598 = vmatprep.subr.mxu0 0.0
  %599 = vmatpush1.msra.mxu0 0.0
  %600 = vmatprep.subr.mxu0 0.0
  %601 = vmatpush1.msra.mxu0 0.0
  %602 = vmatprep.subr.mxu0 0.0
  %603 = vmatpush1.msra.mxu0 0.0
  %604 = vmatprep.subr.mxu0 0.0
  %605 = vmatpush1.msra.mxu0 0.0
  %606 = vmatprep.subr.mxu0 0.0
  %607 = vmatpush1.msra.mxu0 0.0
  %608 = vmatprep.subr.mxu0 0.0
  %609 = vmatpush1.msra.mxu0 0.0
  %610 = vmatprep.mubr.f32.mxu0 0.0
  %611 = vmatmul.mubr.f32.gmra.mrb[0].mxu0 %v535
  %v612 = vpop.f32.mrb[0].mxu0
  %v613 = vadd.f32 %v532, %v612
  %v614 = vpop.f32.mrb[0].mxu0
  %615 = vmatprep.mubr.f32.mxu0 0.0
  %616 = vmatmul.mubr.f32.gmra.mrb[0].mxu0 %v538
  %v617 = vpop.f32.mrb[0].mxu0
  %v618 = vadd.f32 %v532, %v617
  %v619 = vpop.f32.mrb[0].mxu0
  %620 = vmatprep.mubr.f32.mxu0 0.0
  %621 = vmatmul.mubr.f32.gmra.mrb[0].mxu0 %v541
  %v622 = vpop.f32.mrb[0].mxu0
  %v623 = vadd.f32 %v532, %v622
  %v624 = vpop.f32.mrb[0].mxu0
  %625 = vmatprep.mubr.f32.mxu0 0.0
  %626 = vmatmul.mubr.f32.gmra.mrb[0].mxu0 %v544
  %v627 = vpop.f32.mrb[0].mxu0
  %v628 = vadd.f32 %v532, %v627
  %v629 = vpop.f32.mrb[0].mxu0
  %630 = vdwg.mxu0
  %v631 = vadd.f32 %v521, %v613
  %v632 = vadd.f32 %v522, %v618
  %v633 = vadd.f32 %v523, %v623
  %v634 = vadd.f32 %v524, %v628
  %v635 = vld [vmem:[%s7] sm:$0x1]
  %v636 = vld [vmem:[%s8] sm:$0x1]
  %v637 = vsel %vm170, %v631, 0.0
  %638 = vadd.xlane.f32.xlu0 %v637
  %v639 = vpop.xlane.xlu0 %638
  %v640 = vsel %vm170, %v632, 0.0
  %641 = vadd.xlane.f32.xlu0 %v640
  %v642 = vpop.xlane.xlu0 %641
  %v643 = vsel %vm170, %v633, 0.0
  %644 = vadd.xlane.f32.xlu0 %v643
  %v645 = vpop.xlane.xlu0 %644
  %v646 = vsel %vm170, %v634, 0.0
  %647 = vadd.xlane.f32.xlu0 %v646
  %v648 = vpop.xlane.xlu0 %647
  %v649 = vmul.f32 %v639, %v464
  %v650 = vmul.f32 %v642, %v464
  %v651 = vmul.f32 %v645, %v464
  %v652 = vmul.f32 %v648, %v464
  %v653 = vsub.f32 %v631, %v649
  %v654 = vsub.f32 %v632, %v650
  %v655 = vsub.f32 %v633, %v651
  %v656 = vsub.f32 %v634, %v652
  %v657 = vmul.f32 %v653, %v653
  %v658 = vmul.f32 %v654, %v654
  %v659 = vmul.f32 %v655, %v655
  %v660 = vmul.f32 %v656, %v656
  %v661 = vsel %vm170, %v657, 0.0
  %662 = vadd.xlane.f32.xlu0 %v661
  %v663 = vpop.xlane.xlu0 %662
  %v664 = vsel %vm170, %v658, 0.0
  %665 = vadd.xlane.f32.xlu0 %v664
  %v666 = vpop.xlane.xlu0 %665
  %v667 = vsel %vm170, %v659, 0.0
  %668 = vadd.xlane.f32.xlu0 %v667
  %v669 = vpop.xlane.xlu0 %668
  %v670 = vsel %vm170, %v660, 0.0
  %671 = vadd.xlane.f32.xlu0 %v670
  %v672 = vpop.xlane.xlu0 %671
  %v673 = vmul.f32 %v663, %v464
  %v674 = vmul.f32 %v666, %v464
  %v675 = vmul.f32 %v669, %v464
  %v676 = vmul.f32 %v672, %v464
  %v677 = vadd.f32 %v673, 1e-05
  %v678 = vadd.f32 %v674, 1e-05
  %v679 = vadd.f32 %v675, 1e-05
  %v680 = vadd.f32 %v676, 1e-05
  %v681 = vrsqrt.pop %v677
  %v682 = vrsqrt.pop %v678
  %v683 = vrsqrt.pop %v679
  %v684 = vrsqrt.pop %v680
  %v685 = vmul.f32 %v653, %v681
  %v686 = vmul.f32 %v654, %v682
  %v687 = vmul.f32 %v655, %v683
  %v688 = vmul.f32 %v656, %v684
  %v690 = vlaneseq
  %v691 = vshrl.u32 %v690, 7
  %v692 = vsub.s32 0, %v691
  %v693 = vrot.slane %v635, %v692
  %v695 = vmul.f32 %v685, %v693
  %v696 = vmul.f32 %v686, %v693
  %v697 = vmul.f32 %v687, %v693
  %v698 = vmul.f32 %v688, %v693
  %v700 = vlaneseq
  %v701 = vshrl.u32 %v700, 7
  %v702 = vsub.s32 0, %v701
  %v703 = vrot.slane %v636, %v702
  %v705 = vadd.f32 %v695, %v703
  %v706 = vadd.f32 %v696, %v703
  %v707 = vadd.f32 %v697, %v703
  %v708 = vadd.f32 %v698, %v703
  %709 = vxpose.xlu0.b32.start [1/16] %v705, 128
  %710 = vxpose.xlu0.b32.cont [2/16] 0.0, 128
  %711 = vxpose.xlu0.b32.cont [3/16] 0.0, 128
  %712 = vxpose.xlu0.b32.cont [4/16] 0.0, 128
  %713 = vxpose.xlu0.b32.cont [5/16] 0.0, 128
  %714 = vxpose.xlu0.b32.cont [6/16] 0.0, 128
  %715 = vxpose.xlu0.b32.cont [7/16] 0.0, 128
  %716 = vxpose.xlu0.b32.cont [8/16] 0.0, 128
  %717 = vxpose.xlu0.b32.cont [9/16] 0.0, 128
  %718 = vxpose.xlu0.b32.cont [10/16] 0.0, 128
  %719 = vxpose.xlu0.b32.cont [11/16] 0.0, 128
  %720 = vxpose.xlu0.b32.cont [12/16] 0.0, 128
  %721 = vxpose.xlu0.b32.cont [13/16] 0.0, 128
  %722 = vxpose.xlu0.b32.cont [14/16] 0.0, 128
  %723 = vxpose.xlu0.b32.cont [15/16] 0.0, 128
  %724 = vxpose.xlu0.b32.end [16/16] 0.0, 128
  %v725 = vpop.trf.xlu0
  %v726 = vpop.trf.xlu0
  %v727 = vpop.trf.xlu0
  %v728 = vpop.trf.xlu0
  %v729 = vpop.trf.xlu0
  %v730 = vpop.trf.xlu0
  %v731 = vpop.trf.xlu0
  %v732 = vpop.trf.xlu0
  %v733 = vpop.trf.xlu0
  %v734 = vpop.trf.xlu0
  %v735 = vpop.trf.xlu0
  %v736 = vpop.trf.xlu0
  %v737 = vpop.trf.xlu0
  %v738 = vpop.trf.xlu0
  %v739 = vpop.trf.xlu0
  %v740 = vpop.trf.xlu0
  %741 = vxpose.xlu0.b32.start [1/16] %v706, 128
  %742 = vxpose.xlu0.b32.cont [2/16] 0.0, 128
  %743 = vxpose.xlu0.b32.cont [3/16] 0.0, 128
  %744 = vxpose.xlu0.b32.cont [4/16] 0.0, 128
  %745 = vxpose.xlu0.b32.cont [5/16] 0.0, 128
  %746 = vxpose.xlu0.b32.cont [6/16] 0.0, 128
  %747 = vxpose.xlu0.b32.cont [7/16] 0.0, 128
  %748 = vxpose.xlu0.b32.cont [8/16] 0.0, 128
  %749 = vxpose.xlu0.b32.cont [9/16] 0.0, 128
  %750 = vxpose.xlu0.b32.cont [10/16] 0.0, 128
  %751 = vxpose.xlu0.b32.cont [11/16] 0.0, 128
  %752 = vxpose.xlu0.b32.cont [12/16] 0.0, 128
  %753 = vxpose.xlu0.b32.cont [13/16] 0.0, 128
  %754 = vxpose.xlu0.b32.cont [14/16] 0.0, 128
  %755 = vxpose.xlu0.b32.cont [15/16] 0.0, 128
  %756 = vxpose.xlu0.b32.end [16/16] 0.0, 128
  %v757 = vpop.trf.xlu0
  %v758 = vpop.trf.xlu0
  %v759 = vpop.trf.xlu0
  %v760 = vpop.trf.xlu0
  %v761 = vpop.trf.xlu0
  %v762 = vpop.trf.xlu0
  %v763 = vpop.trf.xlu0
  %v764 = vpop.trf.xlu0
  %v765 = vpop.trf.xlu0
  %v766 = vpop.trf.xlu0
  %v767 = vpop.trf.xlu0
  %v768 = vpop.trf.xlu0
  %v769 = vpop.trf.xlu0
  %v770 = vpop.trf.xlu0
  %v771 = vpop.trf.xlu0
  %v772 = vpop.trf.xlu0
  %773 = vxpose.xlu0.b32.start [1/16] %v707, 128
  %774 = vxpose.xlu0.b32.cont [2/16] 0.0, 128
  %775 = vxpose.xlu0.b32.cont [3/16] 0.0, 128
  %776 = vxpose.xlu0.b32.cont [4/16] 0.0, 128
  %777 = vxpose.xlu0.b32.cont [5/16] 0.0, 128
  %778 = vxpose.xlu0.b32.cont [6/16] 0.0, 128
  %779 = vxpose.xlu0.b32.cont [7/16] 0.0, 128
  %780 = vxpose.xlu0.b32.cont [8/16] 0.0, 128
  %781 = vxpose.xlu0.b32.cont [9/16] 0.0, 128
  %782 = vxpose.xlu0.b32.cont [10/16] 0.0, 128
  %783 = vxpose.xlu0.b32.cont [11/16] 0.0, 128
  %784 = vxpose.xlu0.b32.cont [12/16] 0.0, 128
  %785 = vxpose.xlu0.b32.cont [13/16] 0.0, 128
  %786 = vxpose.xlu0.b32.cont [14/16] 0.0, 128
  %787 = vxpose.xlu0.b32.cont [15/16] 0.0, 128
  %788 = vxpose.xlu0.b32.end [16/16] 0.0, 128
  %v789 = vpop.trf.xlu0
  %v790 = vpop.trf.xlu0
  %v791 = vpop.trf.xlu0
  %v792 = vpop.trf.xlu0
  %v793 = vpop.trf.xlu0
  %v794 = vpop.trf.xlu0
  %v795 = vpop.trf.xlu0
  %v796 = vpop.trf.xlu0
  %v797 = vpop.trf.xlu0
  %v798 = vpop.trf.xlu0
  %v799 = vpop.trf.xlu0
  %v800 = vpop.trf.xlu0
  %v801 = vpop.trf.xlu0
  %v802 = vpop.trf.xlu0
  %v803 = vpop.trf.xlu0
  %v804 = vpop.trf.xlu0
  %805 = vxpose.xlu0.b32.start [1/16] %v708, 128
  %806 = vxpose.xlu0.b32.cont [2/16] 0.0, 128
  %807 = vxpose.xlu0.b32.cont [3/16] 0.0, 128
  %808 = vxpose.xlu0.b32.cont [4/16] 0.0, 128
  %809 = vxpose.xlu0.b32.cont [5/16] 0.0, 128
  %810 = vxpose.xlu0.b32.cont [6/16] 0.0, 128
  %811 = vxpose.xlu0.b32.cont [7/16] 0.0, 128
  %812 = vxpose.xlu0.b32.cont [8/16] 0.0, 128
  %813 = vxpose.xlu0.b32.cont [9/16] 0.0, 128
  %814 = vxpose.xlu0.b32.cont [10/16] 0.0, 128
  %815 = vxpose.xlu0.b32.cont [11/16] 0.0, 128
  %816 = vxpose.xlu0.b32.cont [12/16] 0.0, 128
  %817 = vxpose.xlu0.b32.cont [13/16] 0.0, 128
  %818 = vxpose.xlu0.b32.cont [14/16] 0.0, 128
  %819 = vxpose.xlu0.b32.cont [15/16] 0.0, 128
  %820 = vxpose.xlu0.b32.end [16/16] 0.0, 128
  %v821 = vpop.trf.xlu0
  %v822 = vpop.trf.xlu0
  %v823 = vpop.trf.xlu0
  %v824 = vpop.trf.xlu0
  %v825 = vpop.trf.xlu0
  %v826 = vpop.trf.xlu0
  %v827 = vpop.trf.xlu0
  %v828 = vpop.trf.xlu0
  %v829 = vpop.trf.xlu0
  %v830 = vpop.trf.xlu0
  %v831 = vpop.trf.xlu0
  %v832 = vpop.trf.xlu0
  %v833 = vpop.trf.xlu0
  %v834 = vpop.trf.xlu0
  %v835 = vpop.trf.xlu0
  %v836 = vpop.trf.xlu0
  %vm837 = vcmask 64512
  %838 = vst.msk [vmem:[%s9] sm:$0xff] %vm837, %v725
  %839 = vst.msk [vmem:[%s9 + $0x8] sm:$0xff] %vm837, %v726
  %840 = vst.msk [vmem:[%s9 + $0x10] sm:$0xff] %vm837, %v757
  %841 = vst.msk [vmem:[%s9 + $0x18] sm:$0xff] %vm837, %v758
  %842 = vst.msk [vmem:[%s9 + $0x20] sm:$0xff] %vm837, %v789
  %843 = vst.msk [vmem:[%s9 + $0x28] sm:$0xff] %vm837, %v790
  %844 = vst.msk [vmem:[%s9 + $0x30] sm:$0xff] %vm837, %v821
  %845 = vst.msk [vmem:[%s9 + $0x38] sm:$0xff] %vm837, %v822
  // Predicated region
  $region38: #{tpu_custom_call.1} parent=0 // pred_check
    _
  $region39: #{tpu_custom_call.1} parent=0 // pred_check_branch
    %847 = sbr.rel (0) target = $region41
  $region40: #{tpu_custom_call.1} parent=0 // pred_region
    _
  $region41: #{tpu_custom_call.1} parent=0 // pred_fallthru
    _
  // Predicated region
  $region42: #{tpu_custom_call.1} parent=0 // pred_check
    _
  $region43: #{tpu_custom_call.1} parent=0 // pred_check_branch
    %849 = sbr.rel (0) target = $region45
  $region44: #{tpu_custom_call.1} parent=0 // pred_region
    _
  $region45: #{tpu_custom_call.1} parent=0 // pred_fallthru
    _

</llo_original>
